<compile_context>
chip_gen: v7x
topology: tpu7x:2x2x1
jax: 0.10.0
libtpu: 0.0.40
codegen_flags: <defaults>
</compile_context>

<pallas_src>
import functools
import math
import re
from typing import NamedTuple

import jax
import jax.numpy as jnp
from jax import lax
from jax.experimental import pallas as pl
from jax.experimental.pallas import tpu as pltpu


def _round_up(x, m):
    return (x + m - 1) // m * m


def _tpu_generation():
    try:
        kind = jax.devices()[0].device_kind
    except Exception:
        return 6
    m = re.search(r"v(\d+)", kind)
    return int(m.group(1)) if m else 6


def _choose_tn(np_cols, gen):
    if gen <= 5:
        return 128                       # v5e MXU is 128-wide; tn=256 buys nothing
    return 256 if np_cols % 256 == 0 else 128


def _pick_row_tile(ho, wo, target_rows=1024):
    """Largest divisor of ho whose row tile (th*wo) stays under target and is
    16-aligned (bf16 sublane packing).  Falls back to the whole image."""
    if ho * wo <= target_rows:
        return ho
    cands = [t for t in range(1, ho)
             if ho % t == 0 and t * wo <= target_rows and (t * wo) % 16 == 0]
    return max(cands) if cands else ho


class MCReLUBaseConfig(NamedTuple):
    n_in: int
    n_out: int
    kernelsize: int
    stride: int = 1
    pre_act: bool = False     # preAct
    last_act: bool = True     # lastAct


# ----------------------------------------------------------------------------
# Fused Pallas kernel: in-VMEM im2col -> ONE deep-K MXU dot -> affine -> ReLU
# ----------------------------------------------------------------------------
def _mcrelu_base_kernel(x_ref, w_ref, ss_ref, o_ref, col_ref, *maybe_xact,
                        kh, kw, stride, th, wo, cin, kp, pre_act, last_act):
    s = stride
    kk = kh * kw
    m_t = th * wo
    r0 = pl.program_id(1) * th            # first output row of this spatial tile

    # preAct ReLU applied once to the whole (phase-decimated, padded) block,
    # not k*k times on overlapping windows.
    if pre_act:
        xact_ref = maybe_xact[0]
        xact_ref[...] = jnp.maximum(x_ref[...], 0)
        src = xact_ref
    else:
        src = x_ref

    # im2col: one static contiguous window copy per conv tap.
    #   src[p, a, b, c] == x_pad[s*a + p//s, s*b + p%s, c]
    # so tap (i, j) for output rows [r0, r0+th) is the window
    #   [r0 + i//s : r0 + i//s + th, j//s : j//s + wo] of phase p=(i%s)*s+(j%s).
    for i in range(kh):
        for j in range(kw):
            p = (i % s) * s + (j % s)
            t = i * kw + j
            slab = src[p, pl.ds(r0 + i // s, th), j // s:j // s + wo, :]
            col_ref[:, t * cin:(t + 1) * cin] = slab.reshape(m_t, cin)

    # K-padding columns must be finite (matching weight rows are zero); the
    # scratch is uninitialized VMEM, so zero them (cheap vs. the old k*k
    # accumulator round-trips).
    if kp > kk * cin:
        col_ref[:, kk * cin:] = jnp.zeros((m_t, kp - kk * cin), jnp.bfloat16)

    # Single MXU dot with contraction depth K = k*k*cin (padded), f32 accum.
    y = jnp.dot(col_ref[...], w_ref[...], preferred_element_type=jnp.float32)

    # CReLU + conv-bias + BatchNorm folded per-channel affine, optional ReLU.
    y = y * ss_ref[0:1, :] + ss_ref[1:2, :]
    if last_act:
        y = jnp.maximum(y, 0.0)
    o_ref[0] = y.astype(o_ref.dtype)       # single lane-dense bf16 store


# ----------------------------------------------------------------------------
# Parameter construction / packing (packing runs ONCE, outside jit)
# ----------------------------------------------------------------------------
def init_mcrelu_base_params(key, cfg: MCReLUBaseConfig):
    k1, k2, k3, k4, k5, k6 = jax.random.split(key, 6)
    k = cfg.kernelsize
    fan_in = cfg.n_in * k * k
    c2 = 2 * cfg.n_out
    return {
        'conv_w': math.sqrt(2.0 / fan_in) *
                  jax.random.normal(k1, (cfg.n_out, cfg.n_in, k, k), jnp.float32),
        'conv_b': 0.01 * jax.random.normal(k2, (cfg.n_out,), jnp.float32),
        'bn_gamma': 1.0 + 0.1 * jax.random.normal(k3, (c2,), jnp.float32),
        'bn_beta': 0.1 * jax.random.normal(k4, (c2,), jnp.float32),
        'bn_mean': 0.1 * jax.random.normal(k5, (c2,), jnp.float32),
        'bn_var': jax.random.uniform(k6, (c2,), jnp.float32, 0.5, 1.5),
    }


def pack_mcrelu_base_params(raw, cfg: MCReLUBaseConfig):
    """Fold CReLU + conv-bias + BN; repack weights to (Kp, Cout2_padded) bf16
    for the single deep-K im2col dot; scale/shift stacked as one f32 operand."""
    gen = _tpu_generation()
    k = cfg.kernelsize
    eps = 1e-5
    w2 = jnp.concatenate([raw['conv_w'], -raw['conv_w']], axis=0)   # (2*out, in, k, k)
    b2 = jnp.concatenate([raw['conv_b'], -raw['conv_b']], axis=0)
    scale = raw['bn_gamma'] / jnp.sqrt(raw['bn_var'] + eps)
    shift = raw['bn_beta'] - raw['bn_mean'] * scale + scale * b2

    n2 = 2 * cfg.n_out
    np_cols = _round_up(n2, 128)                      # lane-dense output channels
    kk_cin = k * k * cfg.n_in
    k_align = 128 if gen <= 5 else 256                # MXU contraction alignment
    kp = _round_up(kk_cin, k_align)

    # OIHW -> (k, k, in, out) -> (k*k*in, 2*out); row index = tap*cin + c.
    w_mat = jnp.transpose(w2, (2, 3, 1, 0)).reshape(kk_cin, n2)
    w_mat = jnp.pad(w_mat, ((0, kp - kk_cin), (0, np_cols - n2))).astype(jnp.bfloat16)
    ss = jnp.stack([jnp.pad(scale, (0, np_cols - n2)),
                    jnp.pad(shift, (0, np_cols - n2))]).astype(jnp.float32)
    return {'w': w_mat, 'ss': ss}


# ----------------------------------------------------------------------------
# Forward wrappers
# ----------------------------------------------------------------------------
def mcrelu_base_forward_nhwc(packed, x_nhwc, *, cfg: MCReLUBaseConfig,
                             row_tile=None):
    """NHWC entry point (chained layers can feed bf16 NHWC directly).
    Returns (N, Ho, Wo, 2*n_out) bf16."""
    k, s = cfg.kernelsize, cfg.stride
    pad = k // 2
    n, h, w, c = x_nhwc.shape
    assert c == cfg.n_in
    ho = (h + 2 * pad - k) // s + 1
    wo = (w + 2 * pad - k) // s + 1
    hs = ho + (k - 1) // s
    ws = wo + (k - 1) // s
    hp2, wp2 = s * hs, s * ws

    x = x_nhwc.astype(jnp.bfloat16)
    x = jnp.pad(x, ((0, 0),
                    (pad, max(0, hp2 - h - pad)),
                    (pad, max(0, wp2 - w - pad)),
                    (0, 0)))
    x = x[:, :hp2, :wp2, :]
    if s == 1:
        xs = x
    else:
        # Stride-phase decimation: same bytes, makes every conv tap a static
        # contiguous window inside the kernel.
        xs = (x.reshape(n, hs, s, ws, s, c)
               .transpose(0, 2, 4, 1, 3, 5))
    xs = xs.reshape(n * s * s, hs, ws, c)

    kp, np_cols = packed['w'].shape
    gen = _tpu_generation()
    tn = _choose_tn(np_cols, gen)
    kk_cin = k * k * c

    th = row_tile if row_tile is not None else _pick_row_tile(ho, wo)
    if ho % th != 0 or not ((th * wo) % 16 == 0 or th == ho):
        raise ValueError(f"invalid row_tile {th} for ho={ho}, wo={wo}")
    m = ho * wo
    m_t = th * wo
    grid = (n, ho // th, np_cols // tn)

    # VMEM budget estimate -> compiler limit (physical: 128 MiB v5e/v6e, 64 v7x).
    x_blk = s * s * hs * ws * c * 2
    w_blk = kp * tn * 2
    ss_blk = 2 * tn * 4
    out_blk = m_t * tn * 2
    col_blk = m_t * kp * 2
    est = 2 * (x_blk + w_blk + ss_blk + out_blk) + col_blk + (x_blk if cfg.pre_act else 0)
    budget = (56 << 20) if gen >= 7 else (100 << 20)
    vmem_limit = int(min(budget, max(32 << 20, 2 * est)))

    scratch = [pltpu.VMEM((m_t, kp), jnp.bfloat16)]            # im2col slab
    if cfg.pre_act:
        scratch.append(pltpu.VMEM((s * s, hs, ws, c), jnp.bfloat16))

    out = pl.pallas_call(
        functools.partial(_mcrelu_base_kernel,
                          kh=k, kw=k, stride=s, th=th, wo=wo, cin=c, kp=kp,
                          pre_act=cfg.pre_act, last_act=cfg.last_act),
        out_shape=jax.ShapeDtypeStruct((n, m, np_cols), jnp.bfloat16),
        grid_spec=pltpu.PrefetchScalarGridSpec(
            num_scalar_prefetch=0,
            grid=grid,
            in_specs=[
                # Image block is constant along (rt, ct): fetched once per batch.
                pl.BlockSpec((s * s, hs, ws, c), lambda b, rt, ct: (b, 0, 0, 0)),
                pl.BlockSpec((kp, tn), lambda b, rt, ct: (0, ct)),
                pl.BlockSpec((2, tn), lambda b, rt, ct: (0, ct)),
            ],
            out_specs=pl.BlockSpec((1, m_t, tn), lambda b, rt, ct: (b, rt, ct)),
            scratch_shapes=scratch,
        ),
        compiler_params=pltpu.CompilerParams(
            dimension_semantics=("parallel", "parallel", "parallel"),
            vmem_limit_bytes=vmem_limit),
    )(xs, packed['w'], packed['ss'])

    return out.reshape(n, ho, wo, np_cols)[..., :2 * cfg.n_out]   # NHWC bf16


def mcrelu_base_forward(packed, x_nchw, *, cfg: MCReLUBaseConfig, row_tile=None):
    """NCHW f32 interface matching the PyTorch module."""
    x = jnp.transpose(x_nchw, (0, 2, 3, 1))
    y = mcrelu_base_forward_nhwc(packed, x, cfg=cfg, row_tile=row_tile)
    return jnp.transpose(y, (0, 3, 1, 2)).astype(jnp.float32)


# ----------------------------------------------------------------------------
# Plain-JAX reference (same bf16 quantization of operands, f32 math)
# ----------------------------------------------------------------------------
def mcrelu_base_reference(raw, x_nchw, cfg: MCReLUBaseConfig):
    k, s = cfg.kernelsize, cfg.stride
    pad = k // 2
    eps = 1e-5
    x = jnp.transpose(x_nchw, (0, 2, 3, 1)).astype(jnp.bfloat16).astype(jnp.float32)
    if cfg.pre_act:
        x = jnp.maximum(x, 0.0)
    w2 = jnp.concatenate([raw['conv_w'], -raw['conv_w']], axis=0)
    b2 = jnp.concatenate([raw['conv_b'], -raw['conv_b']], axis=0)
    w_hwio = jnp.transpose(w2, (2, 3, 1, 0)).astype(jnp.bfloat16).astype(jnp.float32)
    scale = raw['bn_gamma'] / jnp.sqrt(raw['bn_var'] + eps)
    shift = raw['bn_beta'] - raw['bn_mean'] * scale + scale * b2
    y = lax.conv_general_dilated(
        x, w_hwio, window_strides=(s, s), padding=[(pad, pad), (pad, pad)],
        dimension_numbers=('NHWC', 'HWIO', 'NHWC'))
    y = y * scale + shift
    if cfg.last_act:
        y = jnp.maximum(y, 0.0)
    return jnp.transpose(y, (0, 3, 1, 2))


# ----------------------------------------------------------------------------
if __name__ == "__main__":
    key = jax.random.PRNGKey(0)
    k_p1, k_p2, k_x1, k_x2 = jax.random.split(key, 4)

    def _check(out, ref):
        assert bool(jnp.all(jnp.isfinite(out)))
        err = float(jnp.max(jnp.abs(out - ref)))
        tol = 3e-2 + (2.0 ** -7) * float(jnp.max(jnp.abs(ref)))   # bf16 output
        assert err < tol, (err, tol)

    # Config A: module defaults (preAct=False, lastAct=True, stride=1).
    cfg_a = MCReLUBaseConfig(n_in=16, n_out=32, kernelsize=3, stride=1,
                             pre_act=False, last_act=True)
    raw_a = init_mcrelu_base_params(k_p1, cfg_a)
    packed_a = pack_mcrelu_base_params(raw_a, cfg_a)      # hoisted, runs once
    x_a = jax.random.normal(k_x1, (2, cfg_a.n_in, 16, 16), jnp.float32)
    fwd_a = jax.jit(functools.partial(mcrelu_base_forward, cfg=cfg_a))
    out_a = jax.block_until_ready(fwd_a(packed_a, x_a))
    assert out_a.shape == (2, 2 * cfg_a.n_out, 16, 16), out_a.shape
    _check(out_a, mcrelu_base_reference(raw_a, x_a, cfg_a))

    # Config B: PVANet-conv1 flavour (k=7, stride=2), preAct=True, lastAct=False,
    # with an explicit row tile to exercise the spatial grid axis.
    cfg_b = MCReLUBaseConfig(n_in=8, n_out=16, kernelsize=7, stride=2,
                             pre_act=True, last_act=False)
    raw_b = init_mcrelu_base_params(k_p2, cfg_b)
    packed_b = pack_mcrelu_base_params(raw_b, cfg_b)
    x_b = jax.random.normal(k_x2, (2, cfg_b.n_in, 32, 32), jnp.float32)
    fwd_b = jax.jit(functools.partial(mcrelu_base_forward, cfg=cfg_b, row_tile=8))
    out_b = jax.block_until_ready(fwd_b(packed_b, x_b))
    assert out_b.shape == (2, 2 * cfg_b.n_out, 16, 16), out_b.shape
    _check(out_b, mcrelu_base_reference(raw_b, x_b, cfg_b))

    print("KERNEL_OK")
</pallas_src>

<mosaic_0001>
module attributes {stable_mosaic.version = 11 : i64} {
  func.func @_mcrelu_base_kernel(%arg0: i32, %arg1: i32, %arg2: i32, %arg3: memref<1x18x18x16xbf16, #tpu.memory_space<vmem>>, %arg4: memref<256x128xbf16, #tpu.memory_space<vmem>>, %arg5: memref<2x128xf32, #tpu.memory_space<vmem>>, %arg6: memref<1x256x128xbf16, #tpu.memory_space<vmem>>, %arg7: memref<256x256xbf16, #tpu.memory_space<vmem>>) attributes {dimension_semantics = [#tpu.dimension_semantics<parallel>, #tpu.dimension_semantics<parallel>, #tpu.dimension_semantics<parallel>], iteration_bounds = array<i64: 2, 1, 1>, scalar_prefetch = 0 : i64, scratch_operands = 1 : i64, tpu.core_type = #tpu.core_type<tc>, window_params = [{transform_indices = @transform_0, window_bounds = array<i64: 1, 18, 18, 16>}, {transform_indices = @transform_1, window_bounds = array<i64: 256, 128>}, {transform_indices = @transform_2, window_bounds = array<i64: 2, 128>}, {transform_indices = @transform_3, window_bounds = array<i64: 1, 256, 128>}]} {
    %c16_i32 = arith.constant 16 : i32
    %0 = arith.muli %arg1, %c16_i32 : i32
    %c0_i32 = arith.constant 0 : i32
    %1 = arith.addi %0, %c0_i32 : i32
    %c0 = arith.constant 0 : index
    %2 = arith.index_cast %1 : i32 to index
    %c0_0 = arith.constant 0 : index
    %c0_1 = arith.constant 0 : index
    %3 = vector.load %arg3[%c0, %2, %c0_0, %c0_1] : memref<1x18x18x16xbf16, #tpu.memory_space<vmem>>, vector<1x16x16x16xbf16>
    %4 = vector.shape_cast %3 : vector<1x16x16x16xbf16> to vector<16x16x16xbf16>
    %5 = vector.shape_cast %4 : vector<16x16x16xbf16> to vector<256x16xbf16>
    %c0_2 = arith.constant 0 : index
    %c0_3 = arith.constant 0 : index
    %6 = vector.load %arg7[%c0_2, %c0_3] : memref<256x256xbf16, #tpu.memory_space<vmem>>, vector<256x16xbf16>
    tpu.vector_store %arg7[%c0_2, %c0_3], %5 {strides = array<i32>} : memref<256x256xbf16, #tpu.memory_space<vmem>>, vector<256x16xbf16>,
    %c0_i32_4 = arith.constant 0 : i32
    %7 = arith.addi %0, %c0_i32_4 : i32
    %c0_5 = arith.constant 0 : index
    %8 = arith.index_cast %7 : i32 to index
    %c1 = arith.constant 1 : index
    %c0_6 = arith.constant 0 : index
    %9 = vector.load %arg3[%c0_5, %8, %c1, %c0_6] : memref<1x18x18x16xbf16, #tpu.memory_space<vmem>>, vector<1x16x16x16xbf16>
    %10 = vector.shape_cast %9 : vector<1x16x16x16xbf16> to vector<16x16x16xbf16>
    %11 = vector.shape_cast %10 : vector<16x16x16xbf16> to vector<256x16xbf16>
    %c0_7 = arith.constant 0 : index
    %c16 = arith.constant 16 : index
    %12 = vector.load %arg7[%c0_7, %c16] : memref<256x256xbf16, #tpu.memory_space<vmem>>, vector<256x16xbf16>
    tpu.vector_store %arg7[%c0_7, %c16], %11 {strides = array<i32>} : memref<256x256xbf16, #tpu.memory_space<vmem>>, vector<256x16xbf16>,
    %c0_i32_8 = arith.constant 0 : i32
    %13 = arith.addi %0, %c0_i32_8 : i32
    %c0_9 = arith.constant 0 : index
    %14 = arith.index_cast %13 : i32 to index
    %c2 = arith.constant 2 : index
    %c0_10 = arith.constant 0 : index
    %15 = vector.load %arg3[%c0_9, %14, %c2, %c0_10] : memref<1x18x18x16xbf16, #tpu.memory_space<vmem>>, vector<1x16x16x16xbf16>
    %16 = vector.shape_cast %15 : vector<1x16x16x16xbf16> to vector<16x16x16xbf16>
    %17 = vector.shape_cast %16 : vector<16x16x16xbf16> to vector<256x16xbf16>
    %c0_11 = arith.constant 0 : index
    %c32 = arith.constant 32 : index
    %18 = vector.load %arg7[%c0_11, %c32] : memref<256x256xbf16, #tpu.memory_space<vmem>>, vector<256x16xbf16>
    tpu.vector_store %arg7[%c0_11, %c32], %17 {strides = array<i32>} : memref<256x256xbf16, #tpu.memory_space<vmem>>, vector<256x16xbf16>,
    %c1_i32 = arith.constant 1 : i32
    %19 = arith.addi %0, %c1_i32 : i32
    %c0_12 = arith.constant 0 : index
    %20 = arith.index_cast %19 : i32 to index
    %c0_13 = arith.constant 0 : index
    %c0_14 = arith.constant 0 : index
    %21 = vector.load %arg3[%c0_12, %20, %c0_13, %c0_14] : memref<1x18x18x16xbf16, #tpu.memory_space<vmem>>, vector<1x16x16x16xbf16>
    %22 = vector.shape_cast %21 : vector<1x16x16x16xbf16> to vector<16x16x16xbf16>
    %23 = vector.shape_cast %22 : vector<16x16x16xbf16> to vector<256x16xbf16>
    %c0_15 = arith.constant 0 : index
    %c48 = arith.constant 48 : index
    %24 = vector.load %arg7[%c0_15, %c48] : memref<256x256xbf16, #tpu.memory_space<vmem>>, vector<256x16xbf16>
    tpu.vector_store %arg7[%c0_15, %c48], %23 {strides = array<i32>} : memref<256x256xbf16, #tpu.memory_space<vmem>>, vector<256x16xbf16>,
    %c1_i32_16 = arith.constant 1 : i32
    %25 = arith.addi %0, %c1_i32_16 : i32
    %c0_17 = arith.constant 0 : index
    %26 = arith.index_cast %25 : i32 to index
    %c1_18 = arith.constant 1 : index
    %c0_19 = arith.constant 0 : index
    %27 = vector.load %arg3[%c0_17, %26, %c1_18, %c0_19] : memref<1x18x18x16xbf16, #tpu.memory_space<vmem>>, vector<1x16x16x16xbf16>
    %28 = vector.shape_cast %27 : vector<1x16x16x16xbf16> to vector<16x16x16xbf16>
    %29 = vector.shape_cast %28 : vector<16x16x16xbf16> to vector<256x16xbf16>
    %c0_20 = arith.constant 0 : index
    %c64 = arith.constant 64 : index
    %30 = vector.load %arg7[%c0_20, %c64] : memref<256x256xbf16, #tpu.memory_space<vmem>>, vector<256x16xbf16>
    tpu.vector_store %arg7[%c0_20, %c64], %29 {strides = array<i32>} : memref<256x256xbf16, #tpu.memory_space<vmem>>, vector<256x16xbf16>,
    %c1_i32_21 = arith.constant 1 : i32
    %31 = arith.addi %0, %c1_i32_21 : i32
    %c0_22 = arith.constant 0 : index
    %32 = arith.index_cast %31 : i32 to index
    %c2_23 = arith.constant 2 : index
    %c0_24 = arith.constant 0 : index
    %33 = vector.load %arg3[%c0_22, %32, %c2_23, %c0_24] : memref<1x18x18x16xbf16, #tpu.memory_space<vmem>>, vector<1x16x16x16xbf16>
    %34 = vector.shape_cast %33 : vector<1x16x16x16xbf16> to vector<16x16x16xbf16>
    %35 = vector.shape_cast %34 : vector<16x16x16xbf16> to vector<256x16xbf16>
    %c0_25 = arith.constant 0 : index
    %c80 = arith.constant 80 : index
    %36 = vector.load %arg7[%c0_25, %c80] : memref<256x256xbf16, #tpu.memory_space<vmem>>, vector<256x16xbf16>
    tpu.vector_store %arg7[%c0_25, %c80], %35 {strides = array<i32>} : memref<256x256xbf16, #tpu.memory_space<vmem>>, vector<256x16xbf16>,
    %c2_i32 = arith.constant 2 : i32
    %37 = arith.addi %0, %c2_i32 : i32
    %c0_26 = arith.constant 0 : index
    %38 = arith.index_cast %37 : i32 to index
    %c0_27 = arith.constant 0 : index
    %c0_28 = arith.constant 0 : index
    %39 = vector.load %arg3[%c0_26, %38, %c0_27, %c0_28] : memref<1x18x18x16xbf16, #tpu.memory_space<vmem>>, vector<1x16x16x16xbf16>
    %40 = vector.shape_cast %39 : vector<1x16x16x16xbf16> to vector<16x16x16xbf16>
    %41 = vector.shape_cast %40 : vector<16x16x16xbf16> to vector<256x16xbf16>
    %c0_29 = arith.constant 0 : index
    %c96 = arith.constant 96 : index
    %42 = vector.load %arg7[%c0_29, %c96] : memref<256x256xbf16, #tpu.memory_space<vmem>>, vector<256x16xbf16>
    tpu.vector_store %arg7[%c0_29, %c96], %41 {strides = array<i32>} : memref<256x256xbf16, #tpu.memory_space<vmem>>, vector<256x16xbf16>,
    %c2_i32_30 = arith.constant 2 : i32
    %43 = arith.addi %0, %c2_i32_30 : i32
    %c0_31 = arith.constant 0 : index
    %44 = arith.index_cast %43 : i32 to index
    %c1_32 = arith.constant 1 : index
    %c0_33 = arith.constant 0 : index
    %45 = vector.load %arg3[%c0_31, %44, %c1_32, %c0_33] : memref<1x18x18x16xbf16, #tpu.memory_space<vmem>>, vector<1x16x16x16xbf16>
    %46 = vector.shape_cast %45 : vector<1x16x16x16xbf16> to vector<16x16x16xbf16>
    %47 = vector.shape_cast %46 : vector<16x16x16xbf16> to vector<256x16xbf16>
    %c0_34 = arith.constant 0 : index
    %c112 = arith.constant 112 : index
    %48 = vector.load %arg7[%c0_34, %c112] : memref<256x256xbf16, #tpu.memory_space<vmem>>, vector<256x16xbf16>
    tpu.vector_store %arg7[%c0_34, %c112], %47 {strides = array<i32>} : memref<256x256xbf16, #tpu.memory_space<vmem>>, vector<256x16xbf16>,
    %c2_i32_35 = arith.constant 2 : i32
    %49 = arith.addi %0, %c2_i32_35 : i32
    %c0_36 = arith.constant 0 : index
    %50 = arith.index_cast %49 : i32 to index
    %c2_37 = arith.constant 2 : index
    %c0_38 = arith.constant 0 : index
    %51 = vector.load %arg3[%c0_36, %50, %c2_37, %c0_38] : memref<1x18x18x16xbf16, #tpu.memory_space<vmem>>, vector<1x16x16x16xbf16>
    %52 = vector.shape_cast %51 : vector<1x16x16x16xbf16> to vector<16x16x16xbf16>
    %53 = vector.shape_cast %52 : vector<16x16x16xbf16> to vector<256x16xbf16>
    %c0_39 = arith.constant 0 : index
    %c128 = arith.constant 128 : index
    %54 = vector.load %arg7[%c0_39, %c128] : memref<256x256xbf16, #tpu.memory_space<vmem>>, vector<256x16xbf16>
    tpu.vector_store %arg7[%c0_39, %c128], %53 {strides = array<i32>} : memref<256x256xbf16, #tpu.memory_space<vmem>>, vector<256x16xbf16>,
    %cst = arith.constant 0.000000e+00 : bf16
    %55 = vector.broadcast %cst : bf16 to vector<256x112xbf16>
    %c0_40 = arith.constant 0 : index
    %c144 = arith.constant 144 : index
    %56 = vector.load %arg7[%c0_40, %c144] : memref<256x256xbf16, #tpu.memory_space<vmem>>, vector<256x112xbf16>
    tpu.vector_store %arg7[%c0_40, %c144], %55 {strides = array<i32>} : memref<256x256xbf16, #tpu.memory_space<vmem>>, vector<256x112xbf16>,
    %c0_41 = arith.constant 0 : index
    %c0_42 = arith.constant 0 : index
    %57 = vector.load %arg7[%c0_41, %c0_42] : memref<256x256xbf16, #tpu.memory_space<vmem>>, vector<256x256xbf16>
    %c0_43 = arith.constant 0 : index
    %c0_44 = arith.constant 0 : index
    %58 = vector.load %arg4[%c0_43, %c0_44] : memref<256x128xbf16, #tpu.memory_space<vmem>>, vector<256x128xbf16>
    %cst_45 = arith.constant dense<0.000000e+00> : vector<256x128xf32>
    %59 = tpu.matmul %57, %58, %cst_45 {dimension_numbers = #tpu.dot_dimension_numbers<[1], [0], [0], [1], [0, 0, 1, 1], [], []>} : vector<256x256xbf16>, vector<256x128xbf16>, vector<256x128xf32> -> vector<256x128xf32>
    %c0_46 = arith.constant 0 : index
    %c0_47 = arith.constant 0 : index
    %60 = vector.load %arg5[%c0_46, %c0_47] : memref<2x128xf32, #tpu.memory_space<vmem>>, vector<1x128xf32>
    %61 = vector.broadcast %60 : vector<1x128xf32> to vector<256x128xf32>
    %62 = arith.mulf %59, %61 : vector<256x128xf32>
    %c1_48 = arith.constant 1 : index
    %c0_49 = arith.constant 0 : index
    %63 = vector.load %arg5[%c1_48, %c0_49] : memref<2x128xf32, #tpu.memory_space<vmem>>, vector<1x128xf32>
    %64 = vector.broadcast %63 : vector<1x128xf32> to vector<256x128xf32>
    %65 = arith.addf %62, %64 : vector<256x128xf32>
    %cst_50 = arith.constant 0.000000e+00 : f32
    %66 = vector.broadcast %cst_50 : f32 to vector<256x128xf32>
    %67 = arith.maximumf %65, %66 : vector<256x128xf32>
    %68 = arith.truncf %67 : vector<256x128xf32> to vector<256x128xbf16>
    %c0_51 = arith.constant 0 : index
    %c0_52 = arith.constant 0 : index
    %c0_53 = arith.constant 0 : index
    %69 = vector.load %arg6[%c0_51, %c0_52, %c0_53] : memref<1x256x128xbf16, #tpu.memory_space<vmem>>, vector<1x256x128xbf16>
    %70 = vector.shape_cast %69 : vector<1x256x128xbf16> to vector<256x128xbf16>
    %71 = vector.shape_cast %68 : vector<256x128xbf16> to vector<1x256x128xbf16>
    tpu.vector_store %arg6[%c0_51, %c0_52, %c0_53], %71 {strides = array<i32>} : memref<1x256x128xbf16, #tpu.memory_space<vmem>>, vector<1x256x128xbf16>,
    return
  }
  func.func @transform_0(%arg0: i32, %arg1: i32, %arg2: i32) -> (i32, i32, i32, i32) {
    %c0_i32 = arith.constant 0 : i32
    %c0_i32_0 = arith.constant 0 : i32
    %c0_i32_1 = arith.constant 0 : i32
    %c0_i32_2 = arith.constant 0 : i32
    return %arg0, %c0_i32, %c0_i32_0, %c0_i32_1 : i32, i32, i32, i32
  }
  func.func @transform_1(%arg0: i32, %arg1: i32, %arg2: i32) -> (i32, i32) {
    %c0_i32 = arith.constant 0 : i32
    %c0_i32_0 = arith.constant 0 : i32
    return %c0_i32, %arg2 : i32, i32
  }
  func.func @transform_2(%arg0: i32, %arg1: i32, %arg2: i32) -> (i32, i32) {
    %c0_i32 = arith.constant 0 : i32
    %c0_i32_0 = arith.constant 0 : i32
    return %c0_i32, %arg2 : i32, i32
  }
  func.func @transform_3(%arg0: i32, %arg1: i32, %arg2: i32) -> (i32, i32, i32) {
    %c0_i32 = arith.constant 0 : i32
    return %arg0, %arg1, %arg2 : i32, i32, i32
  }
}

</mosaic_0001>

<llo_original>
// kernel: mcrelu_base_forward.1
$region0: #{mcrelu_base_forward.1}
  #allocation0 [shape = 'u32[]', space=smem, size = 0x4, offset = 0x4, fixed_abs, tag = 'smem constant byte address 0x4 - core index']
  #allocation1 [shape = 'u32[144,128]{1,0:T(1,128)}', space=vmem, size = 0x12000, scoped, tag = 'internal scratch']
  #allocation2 [shape = 'bf16[256,256]{1,0:T(16,128)(2,1)}', space=vmem, size = 0x20000, scoped, tag = 'scratch operand']
  %s0 = inlined_call_operand.vmem [shape: bf16[2,18,18,16], index: 0, kind: input, shape index: {}]
  %s1 = inlined_call_operand.vmem [shape: bf16[256,128], index: 1, kind: input, shape index: {}]
  %s2 = inlined_call_operand.vmem [shape: f32[2,128], index: 2, kind: input, shape index: {}]
  %s3 = inlined_call_operand.vmem [shape: bf16[2,256,128], index: 3, kind: output, shape index: {}]
  %s4 = sld [smem:[#allocation0]]
  $region45: #{mcrelu_base_forward.1} parent=0
    _
  %s6 = ssub.s32 1, %s4
  %s7 = scalar_select 0, %s6, %s4
  loop: start=0, step=1, limit=4
  $region2: #{mcrelu_base_forward.1} parent=0 // loop_pre_header
    _
  $region3: #{mcrelu_base_forward.1} parent=0 // loop_header
    %s9 = sphi 0, %s13
    %p10 = scmp.ge.s32.totalorder %s9, 4
    %s16 = sphi 0, %s35
    %s17 = sphi 0, %s31
    %s18 = sphi 0, %s27
    %s19 = sphi 0, %s16
    %s20 = sphi 0, %s17
    %s21 = sphi 0, %s18
    %s22 = sphi 0, %s19
    %s23 = sphi 0, %s20
    %s24 = sphi 0, %s21
    %s38 = sphi 0, %s40
    %s41 = sphi 0, %s38
    %s42 = sphi 0, %s41
    %s58 = sphi 0, %s42
    %s64 = sphi 0, %s66
    %s67 = sphi 0, %s64
    %s68 = sphi 0, %s67
    %s84 = sphi 0, %s68
    %s90 = sphi 0, %s92
    %s93 = sphi 0, %s90
    %s94 = sphi 0, %s93
    %s110 = sphi 0, %s94
    %s120 = sphi 0, %s122
    %s123 = sphi 0, %s120
    %s124 = sphi 0, %s123
    %s140 = sphi 0, %s124
  $region4: #{mcrelu_base_forward.1} parent=0 // loop_header_branch
    %12 = sbr.rel (%p10) target = $region8
  $region5: #{mcrelu_base_forward.1} parent=0 // loop_body
    %s14 = ssub.s32 %s9, 1
    %s15 = ssub.s32 %s9, 2
    %s25 = sadd.s32 1, %s18
    %p26 = scmp.ge.s32.totalorder %s25, 1
    %s27 = scalar_select %p26, 0, %s25
    %s28 = sadd.s32 1, %s17
    %s29 = scalar_select %p26, %s28, %s17
    %p30 = scmp.ge.s32.totalorder %s29, 1
    %s31 = scalar_select %p30, 0, %s29
    %s32 = sadd.s32 1, %s16
    %s33 = scalar_select %p30, %s32, %s16
    %p34 = scmp.ge.s32.totalorder %s33, 2
    %s35 = scalar_select %p34, 0, %s33
    %s36 = ssub.s32 %s16, %s35
    %p37 = scmp.eq.s32.totalorder %s36, 0
    %s39 = sadd.s32 %s38, 1
    %s40 = scalar_select %p37, %s38, %s39
    %p43 = pneg %p37
    %p44 = scmp.eq.s32.totalorder %s9, 1
    %p45 = por %p43, %p44
    %p46 = scmp.ne.s32.totalorder %s38, %s41
    %p47 = scmp.eq.s32.totalorder %s9, 0
    %p48 = por %p46, %p47
    %p49 = scmp.ne.s32.totalorder %s38, %s41
    %p50 = scmp.eq.s32.totalorder %s14, 1
    %p51 = por %p49, %p50
    %p52 = scmp.ne.s32.totalorder %s41, %s42
    %p53 = scmp.eq.s32.totalorder %s14, 0
    %p54 = por %p52, %p53
    %p55 = scmp.ne.s32.totalorder %s41, %s42
    %p56 = scmp.eq.s32.totalorder %s15, 1
    %p57 = por %p55, %p56
    %p59 = scmp.ne.s32.totalorder %s42, %s58
    %p60 = scmp.eq.s32.totalorder %s15, 0
    %p61 = por %p59, %p60
    %s62 = ssub.s32 %s18, %s27
    %p63 = scmp.eq.s32.totalorder %s62, 0
    %s65 = sadd.s32 %s64, 1
    %s66 = scalar_select %p63, %s64, %s65
    %p69 = pneg %p63
    %p70 = scmp.eq.s32.totalorder %s9, 1
    %p71 = por %p69, %p70
    %p72 = scmp.ne.s32.totalorder %s64, %s67
    %p73 = scmp.eq.s32.totalorder %s9, 0
    %p74 = por %p72, %p73
    %p75 = scmp.ne.s32.totalorder %s64, %s67
    %p76 = scmp.eq.s32.totalorder %s14, 1
    %p77 = por %p75, %p76
    %p78 = scmp.ne.s32.totalorder %s67, %s68
    %p79 = scmp.eq.s32.totalorder %s14, 0
    %p80 = por %p78, %p79
    %p81 = scmp.ne.s32.totalorder %s67, %s68
    %p82 = scmp.eq.s32.totalorder %s15, 1
    %p83 = por %p81, %p82
    %p85 = scmp.ne.s32.totalorder %s68, %s84
    %p86 = scmp.eq.s32.totalorder %s15, 0
    %p87 = por %p85, %p86
    %s88 = ssub.s32 %s18, %s27
    %p89 = scmp.eq.s32.totalorder %s88, 0
    %s91 = sadd.s32 %s90, 1
    %s92 = scalar_select %p89, %s90, %s91
    %p95 = pneg %p89
    %p96 = scmp.eq.s32.totalorder %s9, 1
    %p97 = por %p95, %p96
    %p98 = scmp.ne.s32.totalorder %s90, %s93
    %p99 = scmp.eq.s32.totalorder %s9, 0
    %p100 = por %p98, %p99
    %p101 = scmp.ne.s32.totalorder %s90, %s93
    %p102 = scmp.eq.s32.totalorder %s14, 1
    %p103 = por %p101, %p102
    %p104 = scmp.ne.s32.totalorder %s93, %s94
    %p105 = scmp.eq.s32.totalorder %s14, 0
    %p106 = por %p104, %p105
    %p107 = scmp.ne.s32.totalorder %s93, %s94
    %p108 = scmp.eq.s32.totalorder %s15, 1
    %p109 = por %p107, %p108
    %p111 = scmp.ne.s32.totalorder %s94, %s110
    %p112 = scmp.eq.s32.totalorder %s15, 0
    %p113 = por %p111, %p112
    %s114 = ssub.s32 %s16, %s35
    %s115 = ssub.s32 %s17, %s31
    %s116 = sor.u32 %s114, %s115
    %s117 = ssub.s32 %s18, %s27
    %s118 = sor.u32 %s116, %s117
    %p119 = scmp.eq.s32.totalorder %s118, 0
    %s121 = sadd.s32 %s120, 1
    %s122 = scalar_select %p119, %s120, %s121
    %p125 = pneg %p119
    %p126 = scmp.eq.s32.totalorder %s9, 1
    %p127 = por %p125, %p126
    %p128 = scmp.ne.s32.totalorder %s120, %s123
    %p129 = scmp.eq.s32.totalorder %s9, 0
    %p130 = por %p128, %p129
    %p131 = scmp.ne.s32.totalorder %s120, %s123
    %p132 = scmp.eq.s32.totalorder %s14, 1
    %p133 = por %p131, %p132
    %p134 = scmp.ne.s32.totalorder %s123, %s124
    %p135 = scmp.eq.s32.totalorder %s14, 0
    %p136 = por %p134, %p135
    %p137 = scmp.ne.s32.totalorder %s123, %s124
    %p138 = scmp.eq.s32.totalorder %s15, 1
    %p139 = por %p137, %p138
    %p141 = scmp.ne.s32.totalorder %s124, %s140
    %p142 = scmp.eq.s32.totalorder %s15, 0
    %p143 = por %p141, %p142
    %p144 = scmp.le.s32.totalorder 1, %s9
    %p145 = scmp.lt.s32.totalorder %s9, 3
    %p146 = pnand %p144, %p145
    %p147 = pneg %p146
    // Predicated region
    $region9: #{mcrelu_base_forward.1} parent=5 // pred_check
      _
    $region10: #{mcrelu_base_forward.1} parent=5 // pred_check_branch
      %149 = sbr.rel (%p146) target = $region12
    $region11: #{mcrelu_base_forward.1} parent=5 // pred_region
      %s150 = ssub.s32 %s9, 1
      // Predicated region
      $region13: #{mcrelu_base_forward.1} parent=11 // pred_check
        %p151 = pneg %p80
      $region14: #{mcrelu_base_forward.1} parent=11 // pred_check_branch
        %153 = sbr.rel (%p151) target = $region16
      $region15: #{mcrelu_base_forward.1} parent=11 // pred_region
        %p154 = scmp.lt.s32.totalorder %s21, 0
        %s155 = scalar_select %p154, %s21, 0
        %s156 = smul.addr %s155, 4
        %s157 = scalar_lea.vmem %s1, %s156
      $region16: #{mcrelu_base_forward.1} parent=11 // pred_fallthru
        _
      // Predicated region
      $region17: #{mcrelu_base_forward.1} parent=11 // pred_check
        %p158 = pneg %p106
      $region18: #{mcrelu_base_forward.1} parent=11 // pred_check_branch
        %160 = sbr.rel (%p158) target = $region20
      $region19: #{mcrelu_base_forward.1} parent=11 // pred_region
        %p161 = scmp.lt.s32.totalorder %s21, 0
        %s162 = scalar_select %p161, %s21, 0
        %s163 = smul.addr %s162, 2
        %s164 = scalar_lea.vmem %s2, %s163
      $region20: #{mcrelu_base_forward.1} parent=11 // pred_fallthru
        _
    $region12: #{mcrelu_base_forward.1} parent=5 // pred_fallthru
      _
    %p165 = scmp.lt.s32.totalorder %s9, 2
    // Predicated region
    $region21: #{mcrelu_base_forward.1} parent=5 // pred_check
      %p166 = pneg %p165
    $region22: #{mcrelu_base_forward.1} parent=5 // pred_check_branch
      %168 = sbr.rel (%p166) target = $region24
    $region23: #{mcrelu_base_forward.1} parent=5 // pred_region
      // Predicated region
      $region25: #{mcrelu_base_forward.1} parent=23 // pred_check
        %p169 = pneg %p48
      $region26: #{mcrelu_base_forward.1} parent=23 // pred_check_branch
        %171 = sbr.rel (%p169) target = $region28
      $region27: #{mcrelu_base_forward.1} parent=23 // pred_region
        %p172 = scmp.lt.s32.totalorder %s16, 1
        %s173 = scalar_select %p172, %s16, 1
        %s174 = smul.addr %s173, 54
        %s175 = smul.addr %s174, 4
        %s176 = scalar_lea.vmem %s0, %s175
      $region28: #{mcrelu_base_forward.1} parent=23 // pred_fallthru
        _
    $region24: #{mcrelu_base_forward.1} parent=5 // pred_fallthru
      _
    %p177 = scmp.le.s32.totalorder 1, %s9
    %p178 = scmp.lt.s32.totalorder %s9, 3
    %p179 = pnand %p177, %p178
    %p180 = pneg %p179
    // Predicated region
    $region29: #{mcrelu_base_forward.1} parent=5 // pred_check
      _
    $region30: #{mcrelu_base_forward.1} parent=5 // pred_check_branch
      %182 = sbr.rel (%p179) target = $region32
    $region31: #{mcrelu_base_forward.1} parent=5 // pred_region
      %s183 = ssub.s32 %s9, 1
      %p184 = scmp.lt.s32.totalorder %s19, 1
      %s185 = scalar_select %p184, %s19, 1
      %s186 = smul.addr %s185, 54
      %s187 = smul.addr %s186, 4
      %s188 = scalar_lea.vmem %s0, %s187
      %p189 = pneg %p54
      %p190 = pneg %p51
      %p191 = scmp.lt.s32.totalorder %s21, 0
      %s192 = scalar_select %p191, %s21, 0
      %s193 = smul.addr %s192, 4
      %s194 = scalar_lea.vmem %s1, %s193
      %p195 = pneg %p80
      %p196 = pneg %p77
      %p197 = scmp.lt.s32.totalorder %s21, 0
      %s198 = scalar_select %p197, %s21, 0
      %s199 = smul.addr %s198, 2
      %s200 = scalar_lea.vmem %s2, %s199
      %p201 = pneg %p106
      %p202 = pneg %p103
      %p203 = pneg %p136
      %p204 = pneg %p133
      %s205 = smul.u32 32, %s20
      %p206 = scmp.lt.s32.totalorder %s19, 1
      %s207 = scalar_select %p206, %s19, 1
      %p208 = scmp.lt.s32.totalorder %s205, 31
      %s209 = scalar_select %p208, %s205, 31
      %p210 = scmp.lt.s32.totalorder %s21, 0
      %s211 = scalar_select %p210, %s21, 0
      %s212 = sadd.s32 %s211, %s209
      %s213 = smul.addr %s207, 32
      %s214 = sadd.s32 %s212, %s213
      %s215 = smul.addr %s214, 4
      %s216 = scalar_lea.vmem %s3, %s215
      %p217 = scmp.lt.s32.totalorder %s19, 1
      %s218 = scalar_select %p217, %s19, 1
      %s219 = smul.addr %s218, 54
      %s220 = smul.addr %s219, 4
      %s221 = scalar_lea.vmem %s0, %s220
      %p222 = scmp.lt.s32.totalorder %s21, 0
      %s223 = scalar_select %p222, %s21, 0
      %s224 = smul.addr %s223, 4
      %s225 = scalar_lea.vmem %s1, %s224
      %p226 = scmp.lt.s32.totalorder %s21, 0
      %s227 = scalar_select %p226, %s21, 0
      %s228 = smul.addr %s227, 2
      %s229 = scalar_lea.vmem %s2, %s228
      %s230 = smul.u32 32, %s20
      %p231 = scmp.lt.s32.totalorder %s19, 1
      %s232 = scalar_select %p231, %s19, 1
      %p233 = scmp.lt.s32.totalorder %s230, 31
      %s234 = scalar_select %p233, %s230, 31
      %p235 = scmp.lt.s32.totalorder %s21, 0
      %s236 = scalar_select %p235, %s21, 0
      %s237 = sadd.s32 %s236, %s234
      %s238 = smul.addr %s232, 32
      %s239 = sadd.s32 %s237, %s238
      %s240 = smul.addr %s239, 4
      %s241 = scalar_lea.vmem %s3, %s240
      %s242 = smul.u32 32, %s20
      %s244 = smul.u32 %s20, 16
      %s245 = smul.u32 %s244, 3
      %s246 = smul.addr %s245, 4
      %s247 = scalar_lea.vmem %s221, %s246
      %v248 = vld [vmem:[%s247] sm:$0xf]
      %v249 = vld [vmem:[%s247 + $0x4] sm:$0xf]
      %v250 = vld [vmem:[%s247 + $0xc] sm:$0xf]
      %v251 = vld [vmem:[%s247 + $0x10] sm:$0xf]
      %v252 = vld [vmem:[%s247 + $0x18] sm:$0xf]
      %v253 = vld [vmem:[%s247 + $0x1c] sm:$0xf]
      %v254 = vld [vmem:[%s247 + $0x24] sm:$0xf]
      %v255 = vld [vmem:[%s247 + $0x28] sm:$0xf]
      %v256 = vld [vmem:[%s247 + $0x30] sm:$0xf]
      %v257 = vld [vmem:[%s247 + $0x34] sm:$0xf]
      %v258 = vld [vmem:[%s247 + $0x3c] sm:$0xf]
      %v259 = vld [vmem:[%s247 + $0x40] sm:$0xf]
      %v260 = vld [vmem:[%s247 + $0x48] sm:$0xf]
      %v261 = vld [vmem:[%s247 + $0x4c] sm:$0xf]
      %v262 = vld [vmem:[%s247 + $0x54] sm:$0xf]
      %v263 = vld [vmem:[%s247 + $0x58] sm:$0xf]
      %v264 = vld [vmem:[%s247 + $0x60] sm:$0xf]
      %v265 = vld [vmem:[%s247 + $0x64] sm:$0xf]
      %v266 = vld [vmem:[%s247 + $0x6c] sm:$0xf]
      %v267 = vld [vmem:[%s247 + $0x70] sm:$0xf]
      %v268 = vld [vmem:[%s247 + $0x78] sm:$0xf]
      %v269 = vld [vmem:[%s247 + $0x7c] sm:$0xf]
      %v270 = vld [vmem:[%s247 + $0x84] sm:$0xf]
      %v271 = vld [vmem:[%s247 + $0x88] sm:$0xf]
      %v272 = vld [vmem:[%s247 + $0x90] sm:$0xf]
      %v273 = vld [vmem:[%s247 + $0x94] sm:$0xf]
      %v274 = vld [vmem:[%s247 + $0x9c] sm:$0xf]
      %v275 = vld [vmem:[%s247 + $0xa0] sm:$0xf]
      %v276 = vld [vmem:[%s247 + $0xa8] sm:$0xf]
      %v277 = vld [vmem:[%s247 + $0xac] sm:$0xf]
      %v278 = vld [vmem:[%s247 + $0xb4] sm:$0xf]
      %v279 = vld [vmem:[%s247 + $0xb8] sm:$0xf]
      %v312 = vunpack.c.l.b16 %v248
      %v313 = vunpack.c.l.b16 %v249
      %v314 = vunpack.c.l.b16 %v250
      %v315 = vunpack.c.l.b16 %v251
      %v316 = vunpack.c.l.b16 %v252
      %v317 = vunpack.c.l.b16 %v253
      %v318 = vunpack.c.l.b16 %v254
      %v319 = vunpack.c.l.b16 %v255
      %v320 = vunpack.c.l.b16 %v256
      %v321 = vunpack.c.l.b16 %v257
      %v322 = vunpack.c.l.b16 %v258
      %v323 = vunpack.c.l.b16 %v259
      %v324 = vunpack.c.l.b16 %v260
      %v325 = vunpack.c.l.b16 %v261
      %v326 = vunpack.c.l.b16 %v262
      %v327 = vunpack.c.l.b16 %v263
      %v328 = vunpack.c.l.b16 %v264
      %v329 = vunpack.c.l.b16 %v265
      %v330 = vunpack.c.l.b16 %v266
      %v331 = vunpack.c.l.b16 %v267
      %v332 = vunpack.c.l.b16 %v268
      %v333 = vunpack.c.l.b16 %v269
      %v334 = vunpack.c.l.b16 %v270
      %v335 = vunpack.c.l.b16 %v271
      %v336 = vunpack.c.l.b16 %v272
      %v337 = vunpack.c.l.b16 %v273
      %v338 = vunpack.c.l.b16 %v274
      %v339 = vunpack.c.l.b16 %v275
      %v340 = vunpack.c.l.b16 %v276
      %v341 = vunpack.c.l.b16 %v277
      %v342 = vunpack.c.l.b16 %v278
      %v343 = vunpack.c.l.b16 %v279
      %v344 = vpack.c.b16 %v313, %v312
      %v345 = vpack.c.b16 %v315, %v314
      %v346 = vpack.c.b16 %v317, %v316
      %v347 = vpack.c.b16 %v319, %v318
      %v348 = vpack.c.b16 %v321, %v320
      %v349 = vpack.c.b16 %v323, %v322
      %v350 = vpack.c.b16 %v325, %v324
      %v351 = vpack.c.b16 %v327, %v326
      %v352 = vpack.c.b16 %v329, %v328
      %v353 = vpack.c.b16 %v331, %v330
      %v354 = vpack.c.b16 %v333, %v332
      %v355 = vpack.c.b16 %v335, %v334
      %v356 = vpack.c.b16 %v337, %v336
      %v357 = vpack.c.b16 %v339, %v338
      %v358 = vpack.c.b16 %v341, %v340
      %v359 = vpack.c.b16 %v343, %v342
      %vm376 = vcmask 130048
      %377 = vst.msk [vmem:[#allocation2] sm:$0xff] %vm376, %v344
      %378 = vst.msk [vmem:[#allocation2 + $0x10] sm:$0xff] %vm376, %v345
      %379 = vst.msk [vmem:[#allocation2 + $0x20] sm:$0xff] %vm376, %v346
      %380 = vst.msk [vmem:[#allocation2 + $0x30] sm:$0xff] %vm376, %v347
      %381 = vst.msk [vmem:[#allocation2 + $0x40] sm:$0xff] %vm376, %v348
      %382 = vst.msk [vmem:[#allocation2 + $0x50] sm:$0xff] %vm376, %v349
      %383 = vst.msk [vmem:[#allocation2 + $0x60] sm:$0xff] %vm376, %v350
      %384 = vst.msk [vmem:[#allocation2 + $0x70] sm:$0xff] %vm376, %v351
      %385 = vst.msk [vmem:[#allocation2 + $0x80] sm:$0xff] %vm376, %v352
      %386 = vst.msk [vmem:[#allocation2 + $0x90] sm:$0xff] %vm376, %v353
      %387 = vst.msk [vmem:[#allocation2 + $0xa0] sm:$0xff] %vm376, %v354
      %388 = vst.msk [vmem:[#allocation2 + $0xb0] sm:$0xff] %vm376, %v355
      %389 = vst.msk [vmem:[#allocation2 + $0xc0] sm:$0xff] %vm376, %v356
      %390 = vst.msk [vmem:[#allocation2 + $0xd0] sm:$0xff] %vm376, %v357
      %391 = vst.msk [vmem:[#allocation2 + $0xe0] sm:$0xff] %vm376, %v358
      %392 = vst.msk [vmem:[#allocation2 + $0xf0] sm:$0xff] %vm376, %v359
      %v393 = vld [vmem:[%s247] sm:$0xf]
      %v394 = vld [vmem:[%s247 + $0x4] sm:$0xf]
      %v395 = vld [vmem:[%s247 + $0x8] sm:$0x1]
      %v396 = vld [vmem:[%s247 + $0xc] sm:$0xf]
      %v397 = vld [vmem:[%s247 + $0x10] sm:$0xf]
      %v398 = vld [vmem:[%s247 + $0x14] sm:$0x1]
      %v399 = vld [vmem:[%s247 + $0x18] sm:$0xf]
      %v400 = vld [vmem:[%s247 + $0x1c] sm:$0xf]
      %v401 = vld [vmem:[%s247 + $0x20] sm:$0x1]
      %v402 = vld [vmem:[%s247 + $0x24] sm:$0xf]
      %v403 = vld [vmem:[%s247 + $0x28] sm:$0xf]
      %v404 = vld [vmem:[%s247 + $0x2c] sm:$0x1]
      %v405 = vld [vmem:[%s247 + $0x30] sm:$0xf]
      %v406 = vld [vmem:[%s247 + $0x34] sm:$0xf]
      %v407 = vld [vmem:[%s247 + $0x38] sm:$0x1]
      %v408 = vld [vmem:[%s247 + $0x3c] sm:$0xf]
      %v409 = vld [vmem:[%s247 + $0x40] sm:$0xf]
      %v410 = vld [vmem:[%s247 + $0x44] sm:$0x1]
      %v411 = vld [vmem:[%s247 + $0x48] sm:$0xf]
      %v412 = vld [vmem:[%s247 + $0x4c] sm:$0xf]
      %v413 = vld [vmem:[%s247 + $0x50] sm:$0x1]
      %v414 = vld [vmem:[%s247 + $0x54] sm:$0xf]
      %v415 = vld [vmem:[%s247 + $0x58] sm:$0xf]
      %v416 = vld [vmem:[%s247 + $0x5c] sm:$0x1]
      %v417 = vld [vmem:[%s247 + $0x60] sm:$0xf]
      %v418 = vld [vmem:[%s247 + $0x64] sm:$0xf]
      %v419 = vld [vmem:[%s247 + $0x68] sm:$0x1]
      %v420 = vld [vmem:[%s247 + $0x6c] sm:$0xf]
      %v421 = vld [vmem:[%s247 + $0x70] sm:$0xf]
      %v422 = vld [vmem:[%s247 + $0x74] sm:$0x1]
      %v423 = vld [vmem:[%s247 + $0x78] sm:$0xf]
      %v424 = vld [vmem:[%s247 + $0x7c] sm:$0xf]
      %v425 = vld [vmem:[%s247 + $0x80] sm:$0x1]
      %v426 = vld [vmem:[%s247 + $0x84] sm:$0xf]
      %v427 = vld [vmem:[%s247 + $0x88] sm:$0xf]
      %v428 = vld [vmem:[%s247 + $0x8c] sm:$0x1]
      %v429 = vld [vmem:[%s247 + $0x90] sm:$0xf]
      %v430 = vld [vmem:[%s247 + $0x94] sm:$0xf]
      %v431 = vld [vmem:[%s247 + $0x98] sm:$0x1]
      %v432 = vld [vmem:[%s247 + $0x9c] sm:$0xf]
      %v433 = vld [vmem:[%s247 + $0xa0] sm:$0xf]
      %v434 = vld [vmem:[%s247 + $0xa4] sm:$0x1]
      %v435 = vld [vmem:[%s247 + $0xa8] sm:$0xf]
      %v436 = vld [vmem:[%s247 + $0xac] sm:$0xf]
      %v437 = vld [vmem:[%s247 + $0xb0] sm:$0x1]
      %v438 = vld [vmem:[%s247 + $0xb4] sm:$0xf]
      %v439 = vld [vmem:[%s247 + $0xb8] sm:$0xf]
      %v440 = vld [vmem:[%s247 + $0xbc] sm:$0x1]
      %vm441 = vsmask.f32 3328
      %vm442 = vsmask.f32 7440
      %vm443 = vmor %vm441, %vm442
      %v445 = vshrl.u32 %v393, 16
      %v447 = vrot.slane %v445, 4
      %v448 = vshll.u32 %v393, 16
      %v450 = vrot.slane %v448, 5
      %v451 = vor.u32 %v447, %v450
      %v452 = vrot.slane %v451, 4
      %v454 = vshll.u32 %v394, 16
      %v456 = vrot.slane %v454, 5
      %v457 = vsel %vm443, %v452, %v456
      %v458 = vshrl.u32 %v394, 16
      %v460 = vrot.slane %v458, 4
      %v461 = vor.u32 %v460, %v456
      %v462 = vrot.slane %v461, 4
      %v464 = vshll.u32 %v395, 16
      %v466 = vrot.slane %v464, 5
      %v467 = vsel %vm443, %v462, %v466
      %v469 = vshrl.u32 %v396, 16
      %v471 = vrot.slane %v469, 4
      %v472 = vshll.u32 %v396, 16
      %v474 = vrot.slane %v472, 5
      %v475 = vor.u32 %v471, %v474
      %v476 = vrot.slane %v475, 4
      %v478 = vshll.u32 %v397, 16
      %v480 = vrot.slane %v478, 5
      %v481 = vsel %vm443, %v476, %v480
      %v482 = vshrl.u32 %v397, 16
      %v484 = vrot.slane %v482, 4
      %v485 = vor.u32 %v484, %v480
      %v486 = vrot.slane %v485, 4
      %v488 = vshll.u32 %v398, 16
      %v490 = vrot.slane %v488, 5
      %v491 = vsel %vm443, %v486, %v490
      %v493 = vshrl.u32 %v399, 16
      %v495 = vrot.slane %v493, 4
      %v496 = vshll.u32 %v399, 16
      %v498 = vrot.slane %v496, 5
      %v499 = vor.u32 %v495, %v498
      %v500 = vrot.slane %v499, 4
      %v502 = vshll.u32 %v400, 16
      %v504 = vrot.slane %v502, 5
      %v505 = vsel %vm443, %v500, %v504
      %v506 = vshrl.u32 %v400, 16
      %v508 = vrot.slane %v506, 4
      %v509 = vor.u32 %v508, %v504
      %v510 = vrot.slane %v509, 4
      %v512 = vshll.u32 %v401, 16
      %v514 = vrot.slane %v512, 5
      %v515 = vsel %vm443, %v510, %v514
      %v517 = vshrl.u32 %v402, 16
      %v519 = vrot.slane %v517, 4
      %v520 = vshll.u32 %v402, 16
      %v522 = vrot.slane %v520, 5
      %v523 = vor.u32 %v519, %v522
      %v524 = vrot.slane %v523, 4
      %v526 = vshll.u32 %v403, 16
      %v528 = vrot.slane %v526, 5
      %v529 = vsel %vm443, %v524, %v528
      %v530 = vshrl.u32 %v403, 16
      %v532 = vrot.slane %v530, 4
      %v533 = vor.u32 %v532, %v528
      %v534 = vrot.slane %v533, 4
      %v536 = vshll.u32 %v404, 16
      %v538 = vrot.slane %v536, 5
      %v539 = vsel %vm443, %v534, %v538
      %v541 = vshrl.u32 %v405, 16
      %v543 = vrot.slane %v541, 4
      %v544 = vshll.u32 %v405, 16
      %v546 = vrot.slane %v544, 5
      %v547 = vor.u32 %v543, %v546
      %v548 = vrot.slane %v547, 4
      %v550 = vshll.u32 %v406, 16
      %v552 = vrot.slane %v550, 5
      %v553 = vsel %vm443, %v548, %v552
      %v554 = vshrl.u32 %v406, 16
      %v556 = vrot.slane %v554, 4
      %v557 = vor.u32 %v556, %v552
      %v558 = vrot.slane %v557, 4
      %v560 = vshll.u32 %v407, 16
      %v562 = vrot.slane %v560, 5
      %v563 = vsel %vm443, %v558, %v562
      %v565 = vshrl.u32 %v408, 16
      %v567 = vrot.slane %v565, 4
      %v568 = vshll.u32 %v408, 16
      %v570 = vrot.slane %v568, 5
      %v571 = vor.u32 %v567, %v570
      %v572 = vrot.slane %v571, 4
      %v574 = vshll.u32 %v409, 16
      %v576 = vrot.slane %v574, 5
      %v577 = vsel %vm443, %v572, %v576
      %v578 = vshrl.u32 %v409, 16
      %v580 = vrot.slane %v578, 4
      %v581 = vor.u32 %v580, %v576
      %v582 = vrot.slane %v581, 4
      %v584 = vshll.u32 %v410, 16
      %v586 = vrot.slane %v584, 5
      %v587 = vsel %vm443, %v582, %v586
      %v589 = vshrl.u32 %v411, 16
      %v591 = vrot.slane %v589, 4
      %v592 = vshll.u32 %v411, 16
      %v594 = vrot.slane %v592, 5
      %v595 = vor.u32 %v591, %v594
      %v596 = vrot.slane %v595, 4
      %v598 = vshll.u32 %v412, 16
      %v600 = vrot.slane %v598, 5
      %v601 = vsel %vm443, %v596, %v600
      %v602 = vshrl.u32 %v412, 16
      %v604 = vrot.slane %v602, 4
      %v605 = vor.u32 %v604, %v600
      %v606 = vrot.slane %v605, 4
      %v608 = vshll.u32 %v413, 16
      %v610 = vrot.slane %v608, 5
      %v611 = vsel %vm443, %v606, %v610
      %v613 = vshrl.u32 %v414, 16
      %v615 = vrot.slane %v613, 4
      %v616 = vshll.u32 %v414, 16
      %v618 = vrot.slane %v616, 5
      %v619 = vor.u32 %v615, %v618
      %v620 = vrot.slane %v619, 4
      %v622 = vshll.u32 %v415, 16
      %v624 = vrot.slane %v622, 5
      %v625 = vsel %vm443, %v620, %v624
      %v626 = vshrl.u32 %v415, 16
      %v628 = vrot.slane %v626, 4
      %v629 = vor.u32 %v628, %v624
      %v630 = vrot.slane %v629, 4
      %v632 = vshll.u32 %v416, 16
      %v634 = vrot.slane %v632, 5
      %v635 = vsel %vm443, %v630, %v634
      %v637 = vshrl.u32 %v417, 16
      %v639 = vrot.slane %v637, 4
      %v640 = vshll.u32 %v417, 16
      %v642 = vrot.slane %v640, 5
      %v643 = vor.u32 %v639, %v642
      %v644 = vrot.slane %v643, 4
      %v646 = vshll.u32 %v418, 16
      %v648 = vrot.slane %v646, 5
      %v649 = vsel %vm443, %v644, %v648
      %v650 = vshrl.u32 %v418, 16
      %v652 = vrot.slane %v650, 4
      %v653 = vor.u32 %v652, %v648
      %v654 = vrot.slane %v653, 4
      %v656 = vshll.u32 %v419, 16
      %v658 = vrot.slane %v656, 5
      %v659 = vsel %vm443, %v654, %v658
      %v661 = vshrl.u32 %v420, 16
      %v663 = vrot.slane %v661, 4
      %v664 = vshll.u32 %v420, 16
      %v666 = vrot.slane %v664, 5
      %v667 = vor.u32 %v663, %v666
      %v668 = vrot.slane %v667, 4
      %v670 = vshll.u32 %v421, 16
      %v672 = vrot.slane %v670, 5
      %v673 = vsel %vm443, %v668, %v672
      %v674 = vshrl.u32 %v421, 16
      %v676 = vrot.slane %v674, 4
      %v677 = vor.u32 %v676, %v672
      %v678 = vrot.slane %v677, 4
      %v680 = vshll.u32 %v422, 16
      %v682 = vrot.slane %v680, 5
      %v683 = vsel %vm443, %v678, %v682
      %v685 = vshrl.u32 %v423, 16
      %v687 = vrot.slane %v685, 4
      %v688 = vshll.u32 %v423, 16
      %v690 = vrot.slane %v688, 5
      %v691 = vor.u32 %v687, %v690
      %v692 = vrot.slane %v691, 4
      %v694 = vshll.u32 %v424, 16
      %v696 = vrot.slane %v694, 5
      %v697 = vsel %vm443, %v692, %v696
      %v698 = vshrl.u32 %v424, 16
      %v700 = vrot.slane %v698, 4
      %v701 = vor.u32 %v700, %v696
      %v702 = vrot.slane %v701, 4
      %v704 = vshll.u32 %v425, 16
      %v706 = vrot.slane %v704, 5
      %v707 = vsel %vm443, %v702, %v706
      %v709 = vshrl.u32 %v426, 16
      %v711 = vrot.slane %v709, 4
      %v712 = vshll.u32 %v426, 16
      %v714 = vrot.slane %v712, 5
      %v715 = vor.u32 %v711, %v714
      %v716 = vrot.slane %v715, 4
      %v718 = vshll.u32 %v427, 16
      %v720 = vrot.slane %v718, 5
      %v721 = vsel %vm443, %v716, %v720
      %v722 = vshrl.u32 %v427, 16
      %v724 = vrot.slane %v722, 4
      %v725 = vor.u32 %v724, %v720
      %v726 = vrot.slane %v725, 4
      %v728 = vshll.u32 %v428, 16
      %v730 = vrot.slane %v728, 5
      %v731 = vsel %vm443, %v726, %v730
      %v733 = vshrl.u32 %v429, 16
      %v735 = vrot.slane %v733, 4
      %v736 = vshll.u32 %v429, 16
      %v738 = vrot.slane %v736, 5
      %v739 = vor.u32 %v735, %v738
      %v740 = vrot.slane %v739, 4
      %v742 = vshll.u32 %v430, 16
      %v744 = vrot.slane %v742, 5
      %v745 = vsel %vm443, %v740, %v744
      %v746 = vshrl.u32 %v430, 16
      %v748 = vrot.slane %v746, 4
      %v749 = vor.u32 %v748, %v744
      %v750 = vrot.slane %v749, 4
      %v752 = vshll.u32 %v431, 16
      %v754 = vrot.slane %v752, 5
      %v755 = vsel %vm443, %v750, %v754
      %v757 = vshrl.u32 %v432, 16
      %v759 = vrot.slane %v757, 4
      %v760 = vshll.u32 %v432, 16
      %v762 = vrot.slane %v760, 5
      %v763 = vor.u32 %v759, %v762
      %v764 = vrot.slane %v763, 4
      %v766 = vshll.u32 %v433, 16
      %v768 = vrot.slane %v766, 5
      %v769 = vsel %vm443, %v764, %v768
      %v770 = vshrl.u32 %v433, 16
      %v772 = vrot.slane %v770, 4
      %v773 = vor.u32 %v772, %v768
      %v774 = vrot.slane %v773, 4
      %v776 = vshll.u32 %v434, 16
      %v778 = vrot.slane %v776, 5
      %v779 = vsel %vm443, %v774, %v778
      %v781 = vshrl.u32 %v435, 16
      %v783 = vrot.slane %v781, 4
      %v784 = vshll.u32 %v435, 16
      %v786 = vrot.slane %v784, 5
      %v787 = vor.u32 %v783, %v786
      %v788 = vrot.slane %v787, 4
      %v790 = vshll.u32 %v436, 16
      %v792 = vrot.slane %v790, 5
      %v793 = vsel %vm443, %v788, %v792
      %v794 = vshrl.u32 %v436, 16
      %v796 = vrot.slane %v794, 4
      %v797 = vor.u32 %v796, %v792
      %v798 = vrot.slane %v797, 4
      %v800 = vshll.u32 %v437, 16
      %v802 = vrot.slane %v800, 5
      %v803 = vsel %vm443, %v798, %v802
      %v805 = vshrl.u32 %v438, 16
      %v807 = vrot.slane %v805, 4
      %v808 = vshll.u32 %v438, 16
      %v810 = vrot.slane %v808, 5
      %v811 = vor.u32 %v807, %v810
      %v812 = vrot.slane %v811, 4
      %v814 = vshll.u32 %v439, 16
      %v816 = vrot.slane %v814, 5
      %v817 = vsel %vm443, %v812, %v816
      %v818 = vshrl.u32 %v439, 16
      %v820 = vrot.slane %v818, 4
      %v821 = vor.u32 %v820, %v816
      %v822 = vrot.slane %v821, 4
      %v824 = vshll.u32 %v440, 16
      %v826 = vrot.slane %v824, 5
      %v827 = vsel %vm443, %v822, %v826
      %v828 = vunpack.c.l.b16 %v457
      %v829 = vunpack.c.l.b16 %v467
      %v830 = vunpack.c.l.b16 %v481
      %v831 = vunpack.c.l.b16 %v491
      %v832 = vunpack.c.l.b16 %v505
      %v833 = vunpack.c.l.b16 %v515
      %v834 = vunpack.c.l.b16 %v529
      %v835 = vunpack.c.l.b16 %v539
      %v836 = vunpack.c.l.b16 %v553
      %v837 = vunpack.c.l.b16 %v563
      %v838 = vunpack.c.l.b16 %v577
      %v839 = vunpack.c.l.b16 %v587
      %v840 = vunpack.c.l.b16 %v601
      %v841 = vunpack.c.l.b16 %v611
      %v842 = vunpack.c.l.b16 %v625
      %v843 = vunpack.c.l.b16 %v635
      %v844 = vunpack.c.l.b16 %v649
      %v845 = vunpack.c.l.b16 %v659
      %v846 = vunpack.c.l.b16 %v673
      %v847 = vunpack.c.l.b16 %v683
      %v848 = vunpack.c.l.b16 %v697
      %v849 = vunpack.c.l.b16 %v707
      %v850 = vunpack.c.l.b16 %v721
      %v851 = vunpack.c.l.b16 %v731
      %v852 = vunpack.c.l.b16 %v745
      %v853 = vunpack.c.l.b16 %v755
      %v854 = vunpack.c.l.b16 %v769
      %v855 = vunpack.c.l.b16 %v779
      %v856 = vunpack.c.l.b16 %v793
      %v857 = vunpack.c.l.b16 %v803
      %v858 = vunpack.c.l.b16 %v817
      %v859 = vunpack.c.l.b16 %v827
      %v860 = vpack.c.b16 %v829, %v828
      %v861 = vpack.c.b16 %v831, %v830
      %v862 = vpack.c.b16 %v833, %v832
      %v863 = vpack.c.b16 %v835, %v834
      %v864 = vpack.c.b16 %v837, %v836
      %v865 = vpack.c.b16 %v839, %v838
      %v866 = vpack.c.b16 %v841, %v840
      %v867 = vpack.c.b16 %v843, %v842
      %v868 = vpack.c.b16 %v845, %v844
      %v869 = vpack.c.b16 %v847, %v846
      %v870 = vpack.c.b16 %v849, %v848
      %v871 = vpack.c.b16 %v851, %v850
      %v872 = vpack.c.b16 %v853, %v852
      %v873 = vpack.c.b16 %v855, %v854
      %v874 = vpack.c.b16 %v857, %v856
      %v875 = vpack.c.b16 %v859, %v858
      %876 = vrot.lane.b32.xlu0 %v860, 16
      %v877 = vpop.permute.xlu0 %876
      %878 = vrot.lane.b32.xlu0 %v861, 16
      %v879 = vpop.permute.xlu0 %878
      %880 = vrot.lane.b32.xlu0 %v862, 16
      %v881 = vpop.permute.xlu0 %880
      %882 = vrot.lane.b32.xlu0 %v863, 16
      %v883 = vpop.permute.xlu0 %882
      %884 = vrot.lane.b32.xlu0 %v864, 16
      %v885 = vpop.permute.xlu0 %884
      %886 = vrot.lane.b32.xlu0 %v865, 16
      %v887 = vpop.permute.xlu0 %886
      %888 = vrot.lane.b32.xlu0 %v866, 16
      %v889 = vpop.permute.xlu0 %888
      %890 = vrot.lane.b32.xlu0 %v867, 16
      %v891 = vpop.permute.xlu0 %890
      %892 = vrot.lane.b32.xlu0 %v868, 16
      %v893 = vpop.permute.xlu0 %892
      %894 = vrot.lane.b32.xlu0 %v869, 16
      %v895 = vpop.permute.xlu0 %894
      %896 = vrot.lane.b32.xlu0 %v870, 16
      %v897 = vpop.permute.xlu0 %896
      %898 = vrot.lane.b32.xlu0 %v871, 16
      %v899 = vpop.permute.xlu0 %898
      %900 = vrot.lane.b32.xlu0 %v872, 16
      %v901 = vpop.permute.xlu0 %900
      %902 = vrot.lane.b32.xlu0 %v873, 16
      %v903 = vpop.permute.xlu0 %902
      %904 = vrot.lane.b32.xlu0 %v874, 16
      %v905 = vpop.permute.xlu0 %904
      %906 = vrot.lane.b32.xlu0 %v875, 16
      %v907 = vpop.permute.xlu0 %906
      %vm924 = vcmask 261248
      %925 = vst.msk [vmem:[#allocation2] sm:$0xff] %vm924, %v877
      %926 = vst.msk [vmem:[#allocation2 + $0x10] sm:$0xff] %vm924, %v879
      %927 = vst.msk [vmem:[#allocation2 + $0x20] sm:$0xff] %vm924, %v881
      %928 = vst.msk [vmem:[#allocation2 + $0x30] sm:$0xff] %vm924, %v883
      %929 = vst.msk [vmem:[#allocation2 + $0x40] sm:$0xff] %vm924, %v885
      %930 = vst.msk [vmem:[#allocation2 + $0x50] sm:$0xff] %vm924, %v887
      %931 = vst.msk [vmem:[#allocation2 + $0x60] sm:$0xff] %vm924, %v889
      %932 = vst.msk [vmem:[#allocation2 + $0x70] sm:$0xff] %vm924, %v891
      %933 = vst.msk [vmem:[#allocation2 + $0x80] sm:$0xff] %vm924, %v893
      %934 = vst.msk [vmem:[#allocation2 + $0x90] sm:$0xff] %vm924, %v895
      %935 = vst.msk [vmem:[#allocation2 + $0xa0] sm:$0xff] %vm924, %v897
      %936 = vst.msk [vmem:[#allocation2 + $0xb0] sm:$0xff] %vm924, %v899
      %937 = vst.msk [vmem:[#allocation2 + $0xc0] sm:$0xff] %vm924, %v901
      %938 = vst.msk [vmem:[#allocation2 + $0xd0] sm:$0xff] %vm924, %v903
      %939 = vst.msk [vmem:[#allocation2 + $0xe0] sm:$0xff] %vm924, %v905
      %940 = vst.msk [vmem:[#allocation2 + $0xf0] sm:$0xff] %vm924, %v907
      %v941 = vld [vmem:[%s247] sm:$0xe]
      %v942 = vld [vmem:[%s247 + $0x4] sm:$0xf]
      %v943 = vld [vmem:[%s247 + $0x8] sm:$0x1]
      %v944 = vld [vmem:[%s247 + $0xc] sm:$0xe]
      %v945 = vld [vmem:[%s247 + $0x10] sm:$0xf]
      %v946 = vld [vmem:[%s247 + $0x14] sm:$0x1]
      %v947 = vld [vmem:[%s247 + $0x18] sm:$0xe]
      %v948 = vld [vmem:[%s247 + $0x1c] sm:$0xf]
      %v949 = vld [vmem:[%s247 + $0x20] sm:$0x1]
      %v950 = vld [vmem:[%s247 + $0x24] sm:$0xe]
      %v951 = vld [vmem:[%s247 + $0x28] sm:$0xf]
      %v952 = vld [vmem:[%s247 + $0x2c] sm:$0x1]
      %v953 = vld [vmem:[%s247 + $0x30] sm:$0xe]
      %v954 = vld [vmem:[%s247 + $0x34] sm:$0xf]
      %v955 = vld [vmem:[%s247 + $0x38] sm:$0x1]
      %v956 = vld [vmem:[%s247 + $0x3c] sm:$0xe]
      %v957 = vld [vmem:[%s247 + $0x40] sm:$0xf]
      %v958 = vld [vmem:[%s247 + $0x44] sm:$0x1]
      %v959 = vld [vmem:[%s247 + $0x48] sm:$0xe]
      %v960 = vld [vmem:[%s247 + $0x4c] sm:$0xf]
      %v961 = vld [vmem:[%s247 + $0x50] sm:$0x1]
      %v962 = vld [vmem:[%s247 + $0x54] sm:$0xe]
      %v963 = vld [vmem:[%s247 + $0x58] sm:$0xf]
      %v964 = vld [vmem:[%s247 + $0x5c] sm:$0x1]
      %v965 = vld [vmem:[%s247 + $0x60] sm:$0xe]
      %v966 = vld [vmem:[%s247 + $0x64] sm:$0xf]
      %v967 = vld [vmem:[%s247 + $0x68] sm:$0x1]
      %v968 = vld [vmem:[%s247 + $0x6c] sm:$0xe]
      %v969 = vld [vmem:[%s247 + $0x70] sm:$0xf]
      %v970 = vld [vmem:[%s247 + $0x74] sm:$0x1]
      %v971 = vld [vmem:[%s247 + $0x78] sm:$0xe]
      %v972 = vld [vmem:[%s247 + $0x7c] sm:$0xf]
      %v973 = vld [vmem:[%s247 + $0x80] sm:$0x1]
      %v974 = vld [vmem:[%s247 + $0x84] sm:$0xe]
      %v975 = vld [vmem:[%s247 + $0x88] sm:$0xf]
      %v976 = vld [vmem:[%s247 + $0x8c] sm:$0x1]
      %v977 = vld [vmem:[%s247 + $0x90] sm:$0xe]
      %v978 = vld [vmem:[%s247 + $0x94] sm:$0xf]
      %v979 = vld [vmem:[%s247 + $0x98] sm:$0x1]
      %v980 = vld [vmem:[%s247 + $0x9c] sm:$0xe]
      %v981 = vld [vmem:[%s247 + $0xa0] sm:$0xf]
      %v982 = vld [vmem:[%s247 + $0xa4] sm:$0x1]
      %v983 = vld [vmem:[%s247 + $0xa8] sm:$0xe]
      %v984 = vld [vmem:[%s247 + $0xac] sm:$0xf]
      %v985 = vld [vmem:[%s247 + $0xb0] sm:$0x1]
      %v986 = vld [vmem:[%s247 + $0xb4] sm:$0xe]
      %v987 = vld [vmem:[%s247 + $0xb8] sm:$0xf]
      %v988 = vld [vmem:[%s247 + $0xbc] sm:$0x1]
      %vm1037 = vcmask 1042432
      %vm1038 = vcmask 1046532
      %vm1039 = vmor %vm1037, %vm1038
      %v1040 = vrot.slane %v941, 5
      %v1041 = vrot.slane %v1040, 4
      %v1042 = vrot.slane %v942, 5
      %v1043 = vsel %vm1039, %v1041, %v1042
      %v1044 = vrot.slane %v1042, 4
      %v1045 = vrot.slane %v943, 5
      %v1046 = vsel %vm1039, %v1044, %v1045
      %v1047 = vrot.slane %v944, 5
      %v1048 = vrot.slane %v1047, 4
      %v1049 = vrot.slane %v945, 5
      %v1050 = vsel %vm1039, %v1048, %v1049
      %v1051 = vrot.slane %v1049, 4
      %v1052 = vrot.slane %v946, 5
      %v1053 = vsel %vm1039, %v1051, %v1052
      %v1054 = vrot.slane %v947, 5
      %v1055 = vrot.slane %v1054, 4
      %v1056 = vrot.slane %v948, 5
      %v1057 = vsel %vm1039, %v1055, %v1056
      %v1058 = vrot.slane %v1056, 4
      %v1059 = vrot.slane %v949, 5
      %v1060 = vsel %vm1039, %v1058, %v1059
      %v1061 = vrot.slane %v950, 5
      %v1062 = vrot.slane %v1061, 4
      %v1063 = vrot.slane %v951, 5
      %v1064 = vsel %vm1039, %v1062, %v1063
      %v1065 = vrot.slane %v1063, 4
      %v1066 = vrot.slane %v952, 5
      %v1067 = vsel %vm1039, %v1065, %v1066
      %v1068 = vrot.slane %v953, 5
      %v1069 = vrot.slane %v1068, 4
      %v1070 = vrot.slane %v954, 5
      %v1071 = vsel %vm1039, %v1069, %v1070
      %v1072 = vrot.slane %v1070, 4
      %v1073 = vrot.slane %v955, 5
      %v1074 = vsel %vm1039, %v1072, %v1073
      %v1075 = vrot.slane %v956, 5
      %v1076 = vrot.slane %v1075, 4
      %v1077 = vrot.slane %v957, 5
      %v1078 = vsel %vm1039, %v1076, %v1077
      %v1079 = vrot.slane %v1077, 4
      %v1080 = vrot.slane %v958, 5
      %v1081 = vsel %vm1039, %v1079, %v1080
      %v1082 = vrot.slane %v959, 5
      %v1083 = vrot.slane %v1082, 4
      %v1084 = vrot.slane %v960, 5
      %v1085 = vsel %vm1039, %v1083, %v1084
      %v1086 = vrot.slane %v1084, 4
      %v1087 = vrot.slane %v961, 5
      %v1088 = vsel %vm1039, %v1086, %v1087
      %v1089 = vrot.slane %v962, 5
      %v1090 = vrot.slane %v1089, 4
      %v1091 = vrot.slane %v963, 5
      %v1092 = vsel %vm1039, %v1090, %v1091
      %v1093 = vrot.slane %v1091, 4
      %v1094 = vrot.slane %v964, 5
      %v1095 = vsel %vm1039, %v1093, %v1094
      %v1096 = vrot.slane %v965, 5
      %v1097 = vrot.slane %v1096, 4
      %v1098 = vrot.slane %v966, 5
      %v1099 = vsel %vm1039, %v1097, %v1098
      %v1100 = vrot.slane %v1098, 4
      %v1101 = vrot.slane %v967, 5
      %v1102 = vsel %vm1039, %v1100, %v1101
      %v1103 = vrot.slane %v968, 5
      %v1104 = vrot.slane %v1103, 4
      %v1105 = vrot.slane %v969, 5
      %v1106 = vsel %vm1039, %v1104, %v1105
      %v1107 = vrot.slane %v1105, 4
      %v1108 = vrot.slane %v970, 5
      %v1109 = vsel %vm1039, %v1107, %v1108
      %v1110 = vrot.slane %v971, 5
      %v1111 = vrot.slane %v1110, 4
      %v1112 = vrot.slane %v972, 5
      %v1113 = vsel %vm1039, %v1111, %v1112
      %v1114 = vrot.slane %v1112, 4
      %v1115 = vrot.slane %v973, 5
      %v1116 = vsel %vm1039, %v1114, %v1115
      %v1117 = vrot.slane %v974, 5
      %v1118 = vrot.slane %v1117, 4
      %v1119 = vrot.slane %v975, 5
      %v1120 = vsel %vm1039, %v1118, %v1119
      %v1121 = vrot.slane %v1119, 4
      %v1122 = vrot.slane %v976, 5
      %v1123 = vsel %vm1039, %v1121, %v1122
      %v1124 = vrot.slane %v977, 5
      %v1125 = vrot.slane %v1124, 4
      %v1126 = vrot.slane %v978, 5
      %v1127 = vsel %vm1039, %v1125, %v1126
      %v1128 = vrot.slane %v1126, 4
      %v1129 = vrot.slane %v979, 5
      %v1130 = vsel %vm1039, %v1128, %v1129
      %v1131 = vrot.slane %v980, 5
      %v1132 = vrot.slane %v1131, 4
      %v1133 = vrot.slane %v981, 5
      %v1134 = vsel %vm1039, %v1132, %v1133
      %v1135 = vrot.slane %v1133, 4
      %v1136 = vrot.slane %v982, 5
      %v1137 = vsel %vm1039, %v1135, %v1136
      %v1138 = vrot.slane %v983, 5
      %v1139 = vrot.slane %v1138, 4
      %v1140 = vrot.slane %v984, 5
      %v1141 = vsel %vm1039, %v1139, %v1140
      %v1142 = vrot.slane %v1140, 4
      %v1143 = vrot.slane %v985, 5
      %v1144 = vsel %vm1039, %v1142, %v1143
      %v1145 = vrot.slane %v986, 5
      %v1146 = vrot.slane %v1145, 4
      %v1147 = vrot.slane %v987, 5
      %v1148 = vsel %vm1039, %v1146, %v1147
      %v1149 = vrot.slane %v1147, 4
      %v1150 = vrot.slane %v988, 5
      %v1151 = vsel %vm1039, %v1149, %v1150
      %v1152 = vunpack.c.l.b16 %v1043
      %v1153 = vunpack.c.l.b16 %v1046
      %v1154 = vunpack.c.l.b16 %v1050
      %v1155 = vunpack.c.l.b16 %v1053
      %v1156 = vunpack.c.l.b16 %v1057
      %v1157 = vunpack.c.l.b16 %v1060
      %v1158 = vunpack.c.l.b16 %v1064
      %v1159 = vunpack.c.l.b16 %v1067
      %v1160 = vunpack.c.l.b16 %v1071
      %v1161 = vunpack.c.l.b16 %v1074
      %v1162 = vunpack.c.l.b16 %v1078
      %v1163 = vunpack.c.l.b16 %v1081
      %v1164 = vunpack.c.l.b16 %v1085
      %v1165 = vunpack.c.l.b16 %v1088
      %v1166 = vunpack.c.l.b16 %v1092
      %v1167 = vunpack.c.l.b16 %v1095
      %v1168 = vunpack.c.l.b16 %v1099
      %v1169 = vunpack.c.l.b16 %v1102
      %v1170 = vunpack.c.l.b16 %v1106
      %v1171 = vunpack.c.l.b16 %v1109
      %v1172 = vunpack.c.l.b16 %v1113
      %v1173 = vunpack.c.l.b16 %v1116
      %v1174 = vunpack.c.l.b16 %v1120
      %v1175 = vunpack.c.l.b16 %v1123
      %v1176 = vunpack.c.l.b16 %v1127
      %v1177 = vunpack.c.l.b16 %v1130
      %v1178 = vunpack.c.l.b16 %v1134
      %v1179 = vunpack.c.l.b16 %v1137
      %v1180 = vunpack.c.l.b16 %v1141
      %v1181 = vunpack.c.l.b16 %v1144
      %v1182 = vunpack.c.l.b16 %v1148
      %v1183 = vunpack.c.l.b16 %v1151
      %v1184 = vpack.c.b16 %v1153, %v1152
      %v1185 = vpack.c.b16 %v1155, %v1154
      %v1186 = vpack.c.b16 %v1157, %v1156
      %v1187 = vpack.c.b16 %v1159, %v1158
      %v1188 = vpack.c.b16 %v1161, %v1160
      %v1189 = vpack.c.b16 %v1163, %v1162
      %v1190 = vpack.c.b16 %v1165, %v1164
      %v1191 = vpack.c.b16 %v1167, %v1166
      %v1192 = vpack.c.b16 %v1169, %v1168
      %v1193 = vpack.c.b16 %v1171, %v1170
      %v1194 = vpack.c.b16 %v1173, %v1172
      %v1195 = vpack.c.b16 %v1175, %v1174
      %v1196 = vpack.c.b16 %v1177, %v1176
      %v1197 = vpack.c.b16 %v1179, %v1178
      %v1198 = vpack.c.b16 %v1181, %v1180
      %v1199 = vpack.c.b16 %v1183, %v1182
      %1200 = vrot.lane.b32.xlu0 %v1184, 32
      %v1201 = vpop.permute.xlu0 %1200
      %1202 = vrot.lane.b32.xlu0 %v1185, 32
      %v1203 = vpop.permute.xlu0 %1202
      %1204 = vrot.lane.b32.xlu0 %v1186, 32
      %v1205 = vpop.permute.xlu0 %1204
      %1206 = vrot.lane.b32.xlu0 %v1187, 32
      %v1207 = vpop.permute.xlu0 %1206
      %1208 = vrot.lane.b32.xlu0 %v1188, 32
      %v1209 = vpop.permute.xlu0 %1208
      %1210 = vrot.lane.b32.xlu0 %v1189, 32
      %v1211 = vpop.permute.xlu0 %1210
      %1212 = vrot.lane.b32.xlu0 %v1190, 32
      %v1213 = vpop.permute.xlu0 %1212
      %1214 = vrot.lane.b32.xlu0 %v1191, 32
      %v1215 = vpop.permute.xlu0 %1214
      %1216 = vrot.lane.b32.xlu0 %v1192, 32
      %v1217 = vpop.permute.xlu0 %1216
      %1218 = vrot.lane.b32.xlu0 %v1193, 32
      %v1219 = vpop.permute.xlu0 %1218
      %1220 = vrot.lane.b32.xlu0 %v1194, 32
      %v1221 = vpop.permute.xlu0 %1220
      %1222 = vrot.lane.b32.xlu0 %v1195, 32
      %v1223 = vpop.permute.xlu0 %1222
      %1224 = vrot.lane.b32.xlu0 %v1196, 32
      %v1225 = vpop.permute.xlu0 %1224
      %1226 = vrot.lane.b32.xlu0 %v1197, 32
      %v1227 = vpop.permute.xlu0 %1226
      %1228 = vrot.lane.b32.xlu0 %v1198, 32
      %v1229 = vpop.permute.xlu0 %1228
      %1230 = vrot.lane.b32.xlu0 %v1199, 32
      %v1231 = vpop.permute.xlu0 %1230
      %vm1248 = vcmask 392448
      %1249 = vst.msk [vmem:[#allocation2] sm:$0xff] %vm1248, %v1201
      %1250 = vst.msk [vmem:[#allocation2 + $0x10] sm:$0xff] %vm1248, %v1203
      %1251 = vst.msk [vmem:[#allocation2 + $0x20] sm:$0xff] %vm1248, %v1205
      %1252 = vst.msk [vmem:[#allocation2 + $0x30] sm:$0xff] %vm1248, %v1207
      %1253 = vst.msk [vmem:[#allocation2 + $0x40] sm:$0xff] %vm1248, %v1209
      %1254 = vst.msk [vmem:[#allocation2 + $0x50] sm:$0xff] %vm1248, %v1211
      %1255 = vst.msk [vmem:[#allocation2 + $0x60] sm:$0xff] %vm1248, %v1213
      %1256 = vst.msk [vmem:[#allocation2 + $0x70] sm:$0xff] %vm1248, %v1215
      %1257 = vst.msk [vmem:[#allocation2 + $0x80] sm:$0xff] %vm1248, %v1217
      %1258 = vst.msk [vmem:[#allocation2 + $0x90] sm:$0xff] %vm1248, %v1219
      %1259 = vst.msk [vmem:[#allocation2 + $0xa0] sm:$0xff] %vm1248, %v1221
      %1260 = vst.msk [vmem:[#allocation2 + $0xb0] sm:$0xff] %vm1248, %v1223
      %1261 = vst.msk [vmem:[#allocation2 + $0xc0] sm:$0xff] %vm1248, %v1225
      %1262 = vst.msk [vmem:[#allocation2 + $0xd0] sm:$0xff] %vm1248, %v1227
      %1263 = vst.msk [vmem:[#allocation2 + $0xe0] sm:$0xff] %vm1248, %v1229
      %1264 = vst.msk [vmem:[#allocation2 + $0xf0] sm:$0xff] %vm1248, %v1231
      %s1265 = sadd.s32 %s244, 1
      %s1266 = smul.u32 %s1265, 3
      %s1267 = smul.addr %s1266, 4
      %s1268 = scalar_lea.vmem %s221, %s1267
      %v1269 = vld [vmem:[%s1268] sm:$0xf]
      %v1270 = vld [vmem:[%s1268 + $0x4] sm:$0xf]
      %v1271 = vld [vmem:[%s1268 + $0xc] sm:$0xf]
      %v1272 = vld [vmem:[%s1268 + $0x10] sm:$0xf]
      %v1273 = vld [vmem:[%s1268 + $0x18] sm:$0xf]
      %v1274 = vld [vmem:[%s1268 + $0x1c] sm:$0xf]
      %v1275 = vld [vmem:[%s1268 + $0x24] sm:$0xf]
      %v1276 = vld [vmem:[%s1268 + $0x28] sm:$0xf]
      %v1277 = vld [vmem:[%s1268 + $0x30] sm:$0xf]
      %v1278 = vld [vmem:[%s1268 + $0x34] sm:$0xf]
      %v1279 = vld [vmem:[%s1268 + $0x3c] sm:$0xf]
      %v1280 = vld [vmem:[%s1268 + $0x40] sm:$0xf]
      %v1281 = vld [vmem:[%s1268 + $0x48] sm:$0xf]
      %v1282 = vld [vmem:[%s1268 + $0x4c] sm:$0xf]
      %v1283 = vld [vmem:[%s1268 + $0x54] sm:$0xf]
      %v1284 = vld [vmem:[%s1268 + $0x58] sm:$0xf]
      %v1285 = vld [vmem:[%s1268 + $0x60] sm:$0xf]
      %v1286 = vld [vmem:[%s1268 + $0x64] sm:$0xf]
      %v1287 = vld [vmem:[%s1268 + $0x6c] sm:$0xf]
      %v1288 = vld [vmem:[%s1268 + $0x70] sm:$0xf]
      %v1289 = vld [vmem:[%s1268 + $0x78] sm:$0xf]
      %v1290 = vld [vmem:[%s1268 + $0x7c] sm:$0xf]
      %v1291 = vld [vmem:[%s1268 + $0x84] sm:$0xf]
      %v1292 = vld [vmem:[%s1268 + $0x88] sm:$0xf]
      %v1293 = vld [vmem:[%s1268 + $0x90] sm:$0xf]
      %v1294 = vld [vmem:[%s1268 + $0x94] sm:$0xf]
      %v1295 = vld [vmem:[%s1268 + $0x9c] sm:$0xf]
      %v1296 = vld [vmem:[%s1268 + $0xa0] sm:$0xf]
      %v1297 = vld [vmem:[%s1268 + $0xa8] sm:$0xf]
      %v1298 = vld [vmem:[%s1268 + $0xac] sm:$0xf]
      %v1299 = vld [vmem:[%s1268 + $0xb4] sm:$0xf]
      %v1300 = vld [vmem:[%s1268 + $0xb8] sm:$0xf]
      %v1333 = vunpack.c.l.b16 %v1269
      %v1334 = vunpack.c.l.b16 %v1270
      %v1335 = vunpack.c.l.b16 %v1271
      %v1336 = vunpack.c.l.b16 %v1272
      %v1337 = vunpack.c.l.b16 %v1273
      %v1338 = vunpack.c.l.b16 %v1274
      %v1339 = vunpack.c.l.b16 %v1275
      %v1340 = vunpack.c.l.b16 %v1276
      %v1341 = vunpack.c.l.b16 %v1277
      %v1342 = vunpack.c.l.b16 %v1278
      %v1343 = vunpack.c.l.b16 %v1279
      %v1344 = vunpack.c.l.b16 %v1280
      %v1345 = vunpack.c.l.b16 %v1281
      %v1346 = vunpack.c.l.b16 %v1282
      %v1347 = vunpack.c.l.b16 %v1283
      %v1348 = vunpack.c.l.b16 %v1284
      %v1349 = vunpack.c.l.b16 %v1285
      %v1350 = vunpack.c.l.b16 %v1286
      %v1351 = vunpack.c.l.b16 %v1287
      %v1352 = vunpack.c.l.b16 %v1288
      %v1353 = vunpack.c.l.b16 %v1289
      %v1354 = vunpack.c.l.b16 %v1290
      %v1355 = vunpack.c.l.b16 %v1291
      %v1356 = vunpack.c.l.b16 %v1292
      %v1357 = vunpack.c.l.b16 %v1293
      %v1358 = vunpack.c.l.b16 %v1294
      %v1359 = vunpack.c.l.b16 %v1295
      %v1360 = vunpack.c.l.b16 %v1296
      %v1361 = vunpack.c.l.b16 %v1297
      %v1362 = vunpack.c.l.b16 %v1298
      %v1363 = vunpack.c.l.b16 %v1299
      %v1364 = vunpack.c.l.b16 %v1300
      %v1365 = vpack.c.b16 %v1334, %v1333
      %v1366 = vpack.c.b16 %v1336, %v1335
      %v1367 = vpack.c.b16 %v1338, %v1337
      %v1368 = vpack.c.b16 %v1340, %v1339
      %v1369 = vpack.c.b16 %v1342, %v1341
      %v1370 = vpack.c.b16 %v1344, %v1343
      %v1371 = vpack.c.b16 %v1346, %v1345
      %v1372 = vpack.c.b16 %v1348, %v1347
      %v1373 = vpack.c.b16 %v1350, %v1349
      %v1374 = vpack.c.b16 %v1352, %v1351
      %v1375 = vpack.c.b16 %v1354, %v1353
      %v1376 = vpack.c.b16 %v1356, %v1355
      %v1377 = vpack.c.b16 %v1358, %v1357
      %v1378 = vpack.c.b16 %v1360, %v1359
      %v1379 = vpack.c.b16 %v1362, %v1361
      %v1380 = vpack.c.b16 %v1364, %v1363
      %1381 = vrot.lane.b32.xlu0 %v1365, 48
      %v1382 = vpop.permute.xlu0 %1381
      %1383 = vrot.lane.b32.xlu0 %v1366, 48
      %v1384 = vpop.permute.xlu0 %1383
      %1385 = vrot.lane.b32.xlu0 %v1367, 48
      %v1386 = vpop.permute.xlu0 %1385
      %1387 = vrot.lane.b32.xlu0 %v1368, 48
      %v1388 = vpop.permute.xlu0 %1387
      %1389 = vrot.lane.b32.xlu0 %v1369, 48
      %v1390 = vpop.permute.xlu0 %1389
      %1391 = vrot.lane.b32.xlu0 %v1370, 48
      %v1392 = vpop.permute.xlu0 %1391
      %1393 = vrot.lane.b32.xlu0 %v1371, 48
      %v1394 = vpop.permute.xlu0 %1393
      %1395 = vrot.lane.b32.xlu0 %v1372, 48
      %v1396 = vpop.permute.xlu0 %1395
      %1397 = vrot.lane.b32.xlu0 %v1373, 48
      %v1398 = vpop.permute.xlu0 %1397
      %1399 = vrot.lane.b32.xlu0 %v1374, 48
      %v1400 = vpop.permute.xlu0 %1399
      %1401 = vrot.lane.b32.xlu0 %v1375, 48
      %v1402 = vpop.permute.xlu0 %1401
      %1403 = vrot.lane.b32.xlu0 %v1376, 48
      %v1404 = vpop.permute.xlu0 %1403
      %1405 = vrot.lane.b32.xlu0 %v1377, 48
      %v1406 = vpop.permute.xlu0 %1405
      %1407 = vrot.lane.b32.xlu0 %v1378, 48
      %v1408 = vpop.permute.xlu0 %1407
      %1409 = vrot.lane.b32.xlu0 %v1379, 48
      %v1410 = vpop.permute.xlu0 %1409
      %1411 = vrot.lane.b32.xlu0 %v1380, 48
      %v1412 = vpop.permute.xlu0 %1411
      %vm1429 = vcmask 523648
      %1430 = vst.msk [vmem:[#allocation2] sm:$0xff] %vm1429, %v1382
      %1431 = vst.msk [vmem:[#allocation2 + $0x10] sm:$0xff] %vm1429, %v1384
      %1432 = vst.msk [vmem:[#allocation2 + $0x20] sm:$0xff] %vm1429, %v1386
      %1433 = vst.msk [vmem:[#allocation2 + $0x30] sm:$0xff] %vm1429, %v1388
      %1434 = vst.msk [vmem:[#allocation2 + $0x40] sm:$0xff] %vm1429, %v1390
      %1435 = vst.msk [vmem:[#allocation2 + $0x50] sm:$0xff] %vm1429, %v1392
      %1436 = vst.msk [vmem:[#allocation2 + $0x60] sm:$0xff] %vm1429, %v1394
      %1437 = vst.msk [vmem:[#allocation2 + $0x70] sm:$0xff] %vm1429, %v1396
      %1438 = vst.msk [vmem:[#allocation2 + $0x80] sm:$0xff] %vm1429, %v1398
      %1439 = vst.msk [vmem:[#allocation2 + $0x90] sm:$0xff] %vm1429, %v1400
      %1440 = vst.msk [vmem:[#allocation2 + $0xa0] sm:$0xff] %vm1429, %v1402
      %1441 = vst.msk [vmem:[#allocation2 + $0xb0] sm:$0xff] %vm1429, %v1404
      %1442 = vst.msk [vmem:[#allocation2 + $0xc0] sm:$0xff] %vm1429, %v1406
      %1443 = vst.msk [vmem:[#allocation2 + $0xd0] sm:$0xff] %vm1429, %v1408
      %1444 = vst.msk [vmem:[#allocation2 + $0xe0] sm:$0xff] %vm1429, %v1410
      %1445 = vst.msk [vmem:[#allocation2 + $0xf0] sm:$0xff] %vm1429, %v1412
      %v1446 = vld [vmem:[%s1268] sm:$0xf]
      %v1447 = vld [vmem:[%s1268 + $0x4] sm:$0xf]
      %v1448 = vld [vmem:[%s1268 + $0x8] sm:$0x1]
      %v1449 = vld [vmem:[%s1268 + $0xc] sm:$0xf]
      %v1450 = vld [vmem:[%s1268 + $0x10] sm:$0xf]
      %v1451 = vld [vmem:[%s1268 + $0x14] sm:$0x1]
      %v1452 = vld [vmem:[%s1268 + $0x18] sm:$0xf]
      %v1453 = vld [vmem:[%s1268 + $0x1c] sm:$0xf]
      %v1454 = vld [vmem:[%s1268 + $0x20] sm:$0x1]
      %v1455 = vld [vmem:[%s1268 + $0x24] sm:$0xf]
      %v1456 = vld [vmem:[%s1268 + $0x28] sm:$0xf]
      %v1457 = vld [vmem:[%s1268 + $0x2c] sm:$0x1]
      %v1458 = vld [vmem:[%s1268 + $0x30] sm:$0xf]
      %v1459 = vld [vmem:[%s1268 + $0x34] sm:$0xf]
      %v1460 = vld [vmem:[%s1268 + $0x38] sm:$0x1]
      %v1461 = vld [vmem:[%s1268 + $0x3c] sm:$0xf]
      %v1462 = vld [vmem:[%s1268 + $0x40] sm:$0xf]
      %v1463 = vld [vmem:[%s1268 + $0x44] sm:$0x1]
      %v1464 = vld [vmem:[%s1268 + $0x48] sm:$0xf]
      %v1465 = vld [vmem:[%s1268 + $0x4c] sm:$0xf]
      %v1466 = vld [vmem:[%s1268 + $0x50] sm:$0x1]
      %v1467 = vld [vmem:[%s1268 + $0x54] sm:$0xf]
      %v1468 = vld [vmem:[%s1268 + $0x58] sm:$0xf]
      %v1469 = vld [vmem:[%s1268 + $0x5c] sm:$0x1]
      %v1470 = vld [vmem:[%s1268 + $0x60] sm:$0xf]
      %v1471 = vld [vmem:[%s1268 + $0x64] sm:$0xf]
      %v1472 = vld [vmem:[%s1268 + $0x68] sm:$0x1]
      %v1473 = vld [vmem:[%s1268 + $0x6c] sm:$0xf]
      %v1474 = vld [vmem:[%s1268 + $0x70] sm:$0xf]
      %v1475 = vld [vmem:[%s1268 + $0x74] sm:$0x1]
      %v1476 = vld [vmem:[%s1268 + $0x78] sm:$0xf]
      %v1477 = vld [vmem:[%s1268 + $0x7c] sm:$0xf]
      %v1478 = vld [vmem:[%s1268 + $0x80] sm:$0x1]
      %v1479 = vld [vmem:[%s1268 + $0x84] sm:$0xf]
      %v1480 = vld [vmem:[%s1268 + $0x88] sm:$0xf]
      %v1481 = vld [vmem:[%s1268 + $0x8c] sm:$0x1]
      %v1482 = vld [vmem:[%s1268 + $0x90] sm:$0xf]
      %v1483 = vld [vmem:[%s1268 + $0x94] sm:$0xf]
      %v1484 = vld [vmem:[%s1268 + $0x98] sm:$0x1]
      %v1485 = vld [vmem:[%s1268 + $0x9c] sm:$0xf]
      %v1486 = vld [vmem:[%s1268 + $0xa0] sm:$0xf]
      %v1487 = vld [vmem:[%s1268 + $0xa4] sm:$0x1]
      %v1488 = vld [vmem:[%s1268 + $0xa8] sm:$0xf]
      %v1489 = vld [vmem:[%s1268 + $0xac] sm:$0xf]
      %v1490 = vld [vmem:[%s1268 + $0xb0] sm:$0x1]
      %v1491 = vld [vmem:[%s1268 + $0xb4] sm:$0xf]
      %v1492 = vld [vmem:[%s1268 + $0xb8] sm:$0xf]
      %v1493 = vld [vmem:[%s1268 + $0xbc] sm:$0x1]
      %v1495 = vshrl.u32 %v1446, 16
      %v1497 = vrot.slane %v1495, 4
      %v1498 = vshll.u32 %v1446, 16
      %v1500 = vrot.slane %v1498, 5
      %v1501 = vor.u32 %v1497, %v1500
      %v1502 = vrot.slane %v1501, 4
      %v1504 = vshll.u32 %v1447, 16
      %v1506 = vrot.slane %v1504, 5
      %v1507 = vsel %vm443, %v1502, %v1506
      %v1508 = vshrl.u32 %v1447, 16
      %v1510 = vrot.slane %v1508, 4
      %v1511 = vor.u32 %v1510, %v1506
      %v1512 = vrot.slane %v1511, 4
      %v1514 = vshll.u32 %v1448, 16
      %v1516 = vrot.slane %v1514, 5
      %v1517 = vsel %vm443, %v1512, %v1516
      %v1519 = vshrl.u32 %v1449, 16
      %v1521 = vrot.slane %v1519, 4
      %v1522 = vshll.u32 %v1449, 16
      %v1524 = vrot.slane %v1522, 5
      %v1525 = vor.u32 %v1521, %v1524
      %v1526 = vrot.slane %v1525, 4
      %v1528 = vshll.u32 %v1450, 16
      %v1530 = vrot.slane %v1528, 5
      %v1531 = vsel %vm443, %v1526, %v1530
      %v1532 = vshrl.u32 %v1450, 16
      %v1534 = vrot.slane %v1532, 4
      %v1535 = vor.u32 %v1534, %v1530
      %v1536 = vrot.slane %v1535, 4
      %v1538 = vshll.u32 %v1451, 16
      %v1540 = vrot.slane %v1538, 5
      %v1541 = vsel %vm443, %v1536, %v1540
      %v1543 = vshrl.u32 %v1452, 16
      %v1545 = vrot.slane %v1543, 4
      %v1546 = vshll.u32 %v1452, 16
      %v1548 = vrot.slane %v1546, 5
      %v1549 = vor.u32 %v1545, %v1548
      %v1550 = vrot.slane %v1549, 4
      %v1552 = vshll.u32 %v1453, 16
      %v1554 = vrot.slane %v1552, 5
      %v1555 = vsel %vm443, %v1550, %v1554
      %v1556 = vshrl.u32 %v1453, 16
      %v1558 = vrot.slane %v1556, 4
      %v1559 = vor.u32 %v1558, %v1554
      %v1560 = vrot.slane %v1559, 4
      %v1562 = vshll.u32 %v1454, 16
      %v1564 = vrot.slane %v1562, 5
      %v1565 = vsel %vm443, %v1560, %v1564
      %v1567 = vshrl.u32 %v1455, 16
      %v1569 = vrot.slane %v1567, 4
      %v1570 = vshll.u32 %v1455, 16
      %v1572 = vrot.slane %v1570, 5
      %v1573 = vor.u32 %v1569, %v1572
      %v1574 = vrot.slane %v1573, 4
      %v1576 = vshll.u32 %v1456, 16
      %v1578 = vrot.slane %v1576, 5
      %v1579 = vsel %vm443, %v1574, %v1578
      %v1580 = vshrl.u32 %v1456, 16
      %v1582 = vrot.slane %v1580, 4
      %v1583 = vor.u32 %v1582, %v1578
      %v1584 = vrot.slane %v1583, 4
      %v1586 = vshll.u32 %v1457, 16
      %v1588 = vrot.slane %v1586, 5
      %v1589 = vsel %vm443, %v1584, %v1588
      %v1591 = vshrl.u32 %v1458, 16
      %v1593 = vrot.slane %v1591, 4
      %v1594 = vshll.u32 %v1458, 16
      %v1596 = vrot.slane %v1594, 5
      %v1597 = vor.u32 %v1593, %v1596
      %v1598 = vrot.slane %v1597, 4
      %v1600 = vshll.u32 %v1459, 16
      %v1602 = vrot.slane %v1600, 5
      %v1603 = vsel %vm443, %v1598, %v1602
      %v1604 = vshrl.u32 %v1459, 16
      %v1606 = vrot.slane %v1604, 4
      %v1607 = vor.u32 %v1606, %v1602
      %v1608 = vrot.slane %v1607, 4
      %v1610 = vshll.u32 %v1460, 16
      %v1612 = vrot.slane %v1610, 5
      %v1613 = vsel %vm443, %v1608, %v1612
      %v1615 = vshrl.u32 %v1461, 16
      %v1617 = vrot.slane %v1615, 4
      %v1618 = vshll.u32 %v1461, 16
      %v1620 = vrot.slane %v1618, 5
      %v1621 = vor.u32 %v1617, %v1620
      %v1622 = vrot.slane %v1621, 4
      %v1624 = vshll.u32 %v1462, 16
      %v1626 = vrot.slane %v1624, 5
      %v1627 = vsel %vm443, %v1622, %v1626
      %v1628 = vshrl.u32 %v1462, 16
      %v1630 = vrot.slane %v1628, 4
      %v1631 = vor.u32 %v1630, %v1626
      %v1632 = vrot.slane %v1631, 4
      %v1634 = vshll.u32 %v1463, 16
      %v1636 = vrot.slane %v1634, 5
      %v1637 = vsel %vm443, %v1632, %v1636
      %v1639 = vshrl.u32 %v1464, 16
      %v1641 = vrot.slane %v1639, 4
      %v1642 = vshll.u32 %v1464, 16
      %v1644 = vrot.slane %v1642, 5
      %v1645 = vor.u32 %v1641, %v1644
      %v1646 = vrot.slane %v1645, 4
      %v1648 = vshll.u32 %v1465, 16
      %v1650 = vrot.slane %v1648, 5
      %v1651 = vsel %vm443, %v1646, %v1650
      %v1652 = vshrl.u32 %v1465, 16
      %v1654 = vrot.slane %v1652, 4
      %v1655 = vor.u32 %v1654, %v1650
      %v1656 = vrot.slane %v1655, 4
      %v1658 = vshll.u32 %v1466, 16
      %v1660 = vrot.slane %v1658, 5
      %v1661 = vsel %vm443, %v1656, %v1660
      %v1663 = vshrl.u32 %v1467, 16
      %v1665 = vrot.slane %v1663, 4
      %v1666 = vshll.u32 %v1467, 16
      %v1668 = vrot.slane %v1666, 5
      %v1669 = vor.u32 %v1665, %v1668
      %v1670 = vrot.slane %v1669, 4
      %v1672 = vshll.u32 %v1468, 16
      %v1674 = vrot.slane %v1672, 5
      %v1675 = vsel %vm443, %v1670, %v1674
      %v1676 = vshrl.u32 %v1468, 16
      %v1678 = vrot.slane %v1676, 4
      %v1679 = vor.u32 %v1678, %v1674
      %v1680 = vrot.slane %v1679, 4
      %v1682 = vshll.u32 %v1469, 16
      %v1684 = vrot.slane %v1682, 5
      %v1685 = vsel %vm443, %v1680, %v1684
      %v1687 = vshrl.u32 %v1470, 16
      %v1689 = vrot.slane %v1687, 4
      %v1690 = vshll.u32 %v1470, 16
      %v1692 = vrot.slane %v1690, 5
      %v1693 = vor.u32 %v1689, %v1692
      %v1694 = vrot.slane %v1693, 4
      %v1696 = vshll.u32 %v1471, 16
      %v1698 = vrot.slane %v1696, 5
      %v1699 = vsel %vm443, %v1694, %v1698
      %v1700 = vshrl.u32 %v1471, 16
      %v1702 = vrot.slane %v1700, 4
      %v1703 = vor.u32 %v1702, %v1698
      %v1704 = vrot.slane %v1703, 4
      %v1706 = vshll.u32 %v1472, 16
      %v1708 = vrot.slane %v1706, 5
      %v1709 = vsel %vm443, %v1704, %v1708
      %v1711 = vshrl.u32 %v1473, 16
      %v1713 = vrot.slane %v1711, 4
      %v1714 = vshll.u32 %v1473, 16
      %v1716 = vrot.slane %v1714, 5
      %v1717 = vor.u32 %v1713, %v1716
      %v1718 = vrot.slane %v1717, 4
      %v1720 = vshll.u32 %v1474, 16
      %v1722 = vrot.slane %v1720, 5
      %v1723 = vsel %vm443, %v1718, %v1722
      %v1724 = vshrl.u32 %v1474, 16
      %v1726 = vrot.slane %v1724, 4
      %v1727 = vor.u32 %v1726, %v1722
      %v1728 = vrot.slane %v1727, 4
      %v1730 = vshll.u32 %v1475, 16
      %v1732 = vrot.slane %v1730, 5
      %v1733 = vsel %vm443, %v1728, %v1732
      %v1735 = vshrl.u32 %v1476, 16
      %v1737 = vrot.slane %v1735, 4
      %v1738 = vshll.u32 %v1476, 16
      %v1740 = vrot.slane %v1738, 5
      %v1741 = vor.u32 %v1737, %v1740
      %v1742 = vrot.slane %v1741, 4
      %v1744 = vshll.u32 %v1477, 16
      %v1746 = vrot.slane %v1744, 5
      %v1747 = vsel %vm443, %v1742, %v1746
      %v1748 = vshrl.u32 %v1477, 16
      %v1750 = vrot.slane %v1748, 4
      %v1751 = vor.u32 %v1750, %v1746
      %v1752 = vrot.slane %v1751, 4
      %v1754 = vshll.u32 %v1478, 16
      %v1756 = vrot.slane %v1754, 5
      %v1757 = vsel %vm443, %v1752, %v1756
      %v1759 = vshrl.u32 %v1479, 16
      %v1761 = vrot.slane %v1759, 4
      %v1762 = vshll.u32 %v1479, 16
      %v1764 = vrot.slane %v1762, 5
      %v1765 = vor.u32 %v1761, %v1764
      %v1766 = vrot.slane %v1765, 4
      %v1768 = vshll.u32 %v1480, 16
      %v1770 = vrot.slane %v1768, 5
      %v1771 = vsel %vm443, %v1766, %v1770
      %v1772 = vshrl.u32 %v1480, 16
      %v1774 = vrot.slane %v1772, 4
      %v1775 = vor.u32 %v1774, %v1770
      %v1776 = vrot.slane %v1775, 4
      %v1778 = vshll.u32 %v1481, 16
      %v1780 = vrot.slane %v1778, 5
      %v1781 = vsel %vm443, %v1776, %v1780
      %v1783 = vshrl.u32 %v1482, 16
      %v1785 = vrot.slane %v1783, 4
      %v1786 = vshll.u32 %v1482, 16
      %v1788 = vrot.slane %v1786, 5
      %v1789 = vor.u32 %v1785, %v1788
      %v1790 = vrot.slane %v1789, 4
      %v1792 = vshll.u32 %v1483, 16
      %v1794 = vrot.slane %v1792, 5
      %v1795 = vsel %vm443, %v1790, %v1794
      %v1796 = vshrl.u32 %v1483, 16
      %v1798 = vrot.slane %v1796, 4
      %v1799 = vor.u32 %v1798, %v1794
      %v1800 = vrot.slane %v1799, 4
      %v1802 = vshll.u32 %v1484, 16
      %v1804 = vrot.slane %v1802, 5
      %v1805 = vsel %vm443, %v1800, %v1804
      %v1807 = vshrl.u32 %v1485, 16
      %v1809 = vrot.slane %v1807, 4
      %v1810 = vshll.u32 %v1485, 16
      %v1812 = vrot.slane %v1810, 5
      %v1813 = vor.u32 %v1809, %v1812
      %v1814 = vrot.slane %v1813, 4
      %v1816 = vshll.u32 %v1486, 16
      %v1818 = vrot.slane %v1816, 5
      %v1819 = vsel %vm443, %v1814, %v1818
      %v1820 = vshrl.u32 %v1486, 16
      %v1822 = vrot.slane %v1820, 4
      %v1823 = vor.u32 %v1822, %v1818
      %v1824 = vrot.slane %v1823, 4
      %v1826 = vshll.u32 %v1487, 16
      %v1828 = vrot.slane %v1826, 5
      %v1829 = vsel %vm443, %v1824, %v1828
      %v1831 = vshrl.u32 %v1488, 16
      %v1833 = vrot.slane %v1831, 4
      %v1834 = vshll.u32 %v1488, 16
      %v1836 = vrot.slane %v1834, 5
      %v1837 = vor.u32 %v1833, %v1836
      %v1838 = vrot.slane %v1837, 4
      %v1840 = vshll.u32 %v1489, 16
      %v1842 = vrot.slane %v1840, 5
      %v1843 = vsel %vm443, %v1838, %v1842
      %v1844 = vshrl.u32 %v1489, 16
      %v1846 = vrot.slane %v1844, 4
      %v1847 = vor.u32 %v1846, %v1842
      %v1848 = vrot.slane %v1847, 4
      %v1850 = vshll.u32 %v1490, 16
      %v1852 = vrot.slane %v1850, 5
      %v1853 = vsel %vm443, %v1848, %v1852
      %v1855 = vshrl.u32 %v1491, 16
      %v1857 = vrot.slane %v1855, 4
      %v1858 = vshll.u32 %v1491, 16
      %v1860 = vrot.slane %v1858, 5
      %v1861 = vor.u32 %v1857, %v1860
      %v1862 = vrot.slane %v1861, 4
      %v1864 = vshll.u32 %v1492, 16
      %v1866 = vrot.slane %v1864, 5
      %v1867 = vsel %vm443, %v1862, %v1866
      %v1868 = vshrl.u32 %v1492, 16
      %v1870 = vrot.slane %v1868, 4
      %v1871 = vor.u32 %v1870, %v1866
      %v1872 = vrot.slane %v1871, 4
      %v1874 = vshll.u32 %v1493, 16
      %v1876 = vrot.slane %v1874, 5
      %v1877 = vsel %vm443, %v1872, %v1876
      %v1878 = vunpack.c.l.b16 %v1507
      %v1879 = vunpack.c.l.b16 %v1517
      %v1880 = vunpack.c.l.b16 %v1531
      %v1881 = vunpack.c.l.b16 %v1541
      %v1882 = vunpack.c.l.b16 %v1555
      %v1883 = vunpack.c.l.b16 %v1565
      %v1884 = vunpack.c.l.b16 %v1579
      %v1885 = vunpack.c.l.b16 %v1589
      %v1886 = vunpack.c.l.b16 %v1603
      %v1887 = vunpack.c.l.b16 %v1613
      %v1888 = vunpack.c.l.b16 %v1627
      %v1889 = vunpack.c.l.b16 %v1637
      %v1890 = vunpack.c.l.b16 %v1651
      %v1891 = vunpack.c.l.b16 %v1661
      %v1892 = vunpack.c.l.b16 %v1675
      %v1893 = vunpack.c.l.b16 %v1685
      %v1894 = vunpack.c.l.b16 %v1699
      %v1895 = vunpack.c.l.b16 %v1709
      %v1896 = vunpack.c.l.b16 %v1723
      %v1897 = vunpack.c.l.b16 %v1733
      %v1898 = vunpack.c.l.b16 %v1747
      %v1899 = vunpack.c.l.b16 %v1757
      %v1900 = vunpack.c.l.b16 %v1771
      %v1901 = vunpack.c.l.b16 %v1781
      %v1902 = vunpack.c.l.b16 %v1795
      %v1903 = vunpack.c.l.b16 %v1805
      %v1904 = vunpack.c.l.b16 %v1819
      %v1905 = vunpack.c.l.b16 %v1829
      %v1906 = vunpack.c.l.b16 %v1843
      %v1907 = vunpack.c.l.b16 %v1853
      %v1908 = vunpack.c.l.b16 %v1867
      %v1909 = vunpack.c.l.b16 %v1877
      %v1910 = vpack.c.b16 %v1879, %v1878
      %v1911 = vpack.c.b16 %v1881, %v1880
      %v1912 = vpack.c.b16 %v1883, %v1882
      %v1913 = vpack.c.b16 %v1885, %v1884
      %v1914 = vpack.c.b16 %v1887, %v1886
      %v1915 = vpack.c.b16 %v1889, %v1888
      %v1916 = vpack.c.b16 %v1891, %v1890
      %v1917 = vpack.c.b16 %v1893, %v1892
      %v1918 = vpack.c.b16 %v1895, %v1894
      %v1919 = vpack.c.b16 %v1897, %v1896
      %v1920 = vpack.c.b16 %v1899, %v1898
      %v1921 = vpack.c.b16 %v1901, %v1900
      %v1922 = vpack.c.b16 %v1903, %v1902
      %v1923 = vpack.c.b16 %v1905, %v1904
      %v1924 = vpack.c.b16 %v1907, %v1906
      %v1925 = vpack.c.b16 %v1909, %v1908
      %1926 = vrot.lane.b32.xlu0 %v1910, 64
      %v1927 = vpop.permute.xlu0 %1926
      %1928 = vrot.lane.b32.xlu0 %v1911, 64
      %v1929 = vpop.permute.xlu0 %1928
      %1930 = vrot.lane.b32.xlu0 %v1912, 64
      %v1931 = vpop.permute.xlu0 %1930
      %1932 = vrot.lane.b32.xlu0 %v1913, 64
      %v1933 = vpop.permute.xlu0 %1932
      %1934 = vrot.lane.b32.xlu0 %v1914, 64
      %v1935 = vpop.permute.xlu0 %1934
      %1936 = vrot.lane.b32.xlu0 %v1915, 64
      %v1937 = vpop.permute.xlu0 %1936
      %1938 = vrot.lane.b32.xlu0 %v1916, 64
      %v1939 = vpop.permute.xlu0 %1938
      %1940 = vrot.lane.b32.xlu0 %v1917, 64
      %v1941 = vpop.permute.xlu0 %1940
      %1942 = vrot.lane.b32.xlu0 %v1918, 64
      %v1943 = vpop.permute.xlu0 %1942
      %1944 = vrot.lane.b32.xlu0 %v1919, 64
      %v1945 = vpop.permute.xlu0 %1944
      %1946 = vrot.lane.b32.xlu0 %v1920, 64
      %v1947 = vpop.permute.xlu0 %1946
      %1948 = vrot.lane.b32.xlu0 %v1921, 64
      %v1949 = vpop.permute.xlu0 %1948
      %1950 = vrot.lane.b32.xlu0 %v1922, 64
      %v1951 = vpop.permute.xlu0 %1950
      %1952 = vrot.lane.b32.xlu0 %v1923, 64
      %v1953 = vpop.permute.xlu0 %1952
      %1954 = vrot.lane.b32.xlu0 %v1924, 64
      %v1955 = vpop.permute.xlu0 %1954
      %1956 = vrot.lane.b32.xlu0 %v1925, 64
      %v1957 = vpop.permute.xlu0 %1956
      %vm1974 = vcmask 654848
      %1975 = vst.msk [vmem:[#allocation2] sm:$0xff] %vm1974, %v1927
      %1976 = vst.msk [vmem:[#allocation2 + $0x10] sm:$0xff] %vm1974, %v1929
      %1977 = vst.msk [vmem:[#allocation2 + $0x20] sm:$0xff] %vm1974, %v1931
      %1978 = vst.msk [vmem:[#allocation2 + $0x30] sm:$0xff] %vm1974, %v1933
      %1979 = vst.msk [vmem:[#allocation2 + $0x40] sm:$0xff] %vm1974, %v1935
      %1980 = vst.msk [vmem:[#allocation2 + $0x50] sm:$0xff] %vm1974, %v1937
      %1981 = vst.msk [vmem:[#allocation2 + $0x60] sm:$0xff] %vm1974, %v1939
      %1982 = vst.msk [vmem:[#allocation2 + $0x70] sm:$0xff] %vm1974, %v1941
      %1983 = vst.msk [vmem:[#allocation2 + $0x80] sm:$0xff] %vm1974, %v1943
      %1984 = vst.msk [vmem:[#allocation2 + $0x90] sm:$0xff] %vm1974, %v1945
      %1985 = vst.msk [vmem:[#allocation2 + $0xa0] sm:$0xff] %vm1974, %v1947
      %1986 = vst.msk [vmem:[#allocation2 + $0xb0] sm:$0xff] %vm1974, %v1949
      %1987 = vst.msk [vmem:[#allocation2 + $0xc0] sm:$0xff] %vm1974, %v1951
      %1988 = vst.msk [vmem:[#allocation2 + $0xd0] sm:$0xff] %vm1974, %v1953
      %1989 = vst.msk [vmem:[#allocation2 + $0xe0] sm:$0xff] %vm1974, %v1955
      %1990 = vst.msk [vmem:[#allocation2 + $0xf0] sm:$0xff] %vm1974, %v1957
      %v1991 = vld [vmem:[%s1268] sm:$0xe]
      %v1992 = vld [vmem:[%s1268 + $0x4] sm:$0xf]
      %v1993 = vld [vmem:[%s1268 + $0x8] sm:$0x1]
      %v1994 = vld [vmem:[%s1268 + $0xc] sm:$0xe]
      %v1995 = vld [vmem:[%s1268 + $0x10] sm:$0xf]
      %v1996 = vld [vmem:[%s1268 + $0x14] sm:$0x1]
      %v1997 = vld [vmem:[%s1268 + $0x18] sm:$0xe]
      %v1998 = vld [vmem:[%s1268 + $0x1c] sm:$0xf]
      %v1999 = vld [vmem:[%s1268 + $0x20] sm:$0x1]
      %v2000 = vld [vmem:[%s1268 + $0x24] sm:$0xe]
      %v2001 = vld [vmem:[%s1268 + $0x28] sm:$0xf]
      %v2002 = vld [vmem:[%s1268 + $0x2c] sm:$0x1]
      %v2003 = vld [vmem:[%s1268 + $0x30] sm:$0xe]
      %v2004 = vld [vmem:[%s1268 + $0x34] sm:$0xf]
      %v2005 = vld [vmem:[%s1268 + $0x38] sm:$0x1]
      %v2006 = vld [vmem:[%s1268 + $0x3c] sm:$0xe]
      %v2007 = vld [vmem:[%s1268 + $0x40] sm:$0xf]
      %v2008 = vld [vmem:[%s1268 + $0x44] sm:$0x1]
      %v2009 = vld [vmem:[%s1268 + $0x48] sm:$0xe]
      %v2010 = vld [vmem:[%s1268 + $0x4c] sm:$0xf]
      %v2011 = vld [vmem:[%s1268 + $0x50] sm:$0x1]
      %v2012 = vld [vmem:[%s1268 + $0x54] sm:$0xe]
      %v2013 = vld [vmem:[%s1268 + $0x58] sm:$0xf]
      %v2014 = vld [vmem:[%s1268 + $0x5c] sm:$0x1]
      %v2015 = vld [vmem:[%s1268 + $0x60] sm:$0xe]
      %v2016 = vld [vmem:[%s1268 + $0x64] sm:$0xf]
      %v2017 = vld [vmem:[%s1268 + $0x68] sm:$0x1]
      %v2018 = vld [vmem:[%s1268 + $0x6c] sm:$0xe]
      %v2019 = vld [vmem:[%s1268 + $0x70] sm:$0xf]
      %v2020 = vld [vmem:[%s1268 + $0x74] sm:$0x1]
      %v2021 = vld [vmem:[%s1268 + $0x78] sm:$0xe]
      %v2022 = vld [vmem:[%s1268 + $0x7c] sm:$0xf]
      %v2023 = vld [vmem:[%s1268 + $0x80] sm:$0x1]
      %v2024 = vld [vmem:[%s1268 + $0x84] sm:$0xe]
      %v2025 = vld [vmem:[%s1268 + $0x88] sm:$0xf]
      %v2026 = vld [vmem:[%s1268 + $0x8c] sm:$0x1]
      %v2027 = vld [vmem:[%s1268 + $0x90] sm:$0xe]
      %v2028 = vld [vmem:[%s1268 + $0x94] sm:$0xf]
      %v2029 = vld [vmem:[%s1268 + $0x98] sm:$0x1]
      %v2030 = vld [vmem:[%s1268 + $0x9c] sm:$0xe]
      %v2031 = vld [vmem:[%s1268 + $0xa0] sm:$0xf]
      %v2032 = vld [vmem:[%s1268 + $0xa4] sm:$0x1]
      %v2033 = vld [vmem:[%s1268 + $0xa8] sm:$0xe]
      %v2034 = vld [vmem:[%s1268 + $0xac] sm:$0xf]
      %v2035 = vld [vmem:[%s1268 + $0xb0] sm:$0x1]
      %v2036 = vld [vmem:[%s1268 + $0xb4] sm:$0xe]
      %v2037 = vld [vmem:[%s1268 + $0xb8] sm:$0xf]
      %v2038 = vld [vmem:[%s1268 + $0xbc] sm:$0x1]
      %v2087 = vrot.slane %v1991, 5
      %v2088 = vrot.slane %v2087, 4
      %v2089 = vrot.slane %v1992, 5
      %v2090 = vsel %vm1039, %v2088, %v2089
      %v2091 = vrot.slane %v2089, 4
      %v2092 = vrot.slane %v1993, 5
      %v2093 = vsel %vm1039, %v2091, %v2092
      %v2094 = vrot.slane %v1994, 5
      %v2095 = vrot.slane %v2094, 4
      %v2096 = vrot.slane %v1995, 5
      %v2097 = vsel %vm1039, %v2095, %v2096
      %v2098 = vrot.slane %v2096, 4
      %v2099 = vrot.slane %v1996, 5
      %v2100 = vsel %vm1039, %v2098, %v2099
      %v2101 = vrot.slane %v1997, 5
      %v2102 = vrot.slane %v2101, 4
      %v2103 = vrot.slane %v1998, 5
      %v2104 = vsel %vm1039, %v2102, %v2103
      %v2105 = vrot.slane %v2103, 4
      %v2106 = vrot.slane %v1999, 5
      %v2107 = vsel %vm1039, %v2105, %v2106
      %v2108 = vrot.slane %v2000, 5
      %v2109 = vrot.slane %v2108, 4
      %v2110 = vrot.slane %v2001, 5
      %v2111 = vsel %vm1039, %v2109, %v2110
      %v2112 = vrot.slane %v2110, 4
      %v2113 = vrot.slane %v2002, 5
      %v2114 = vsel %vm1039, %v2112, %v2113
      %v2115 = vrot.slane %v2003, 5
      %v2116 = vrot.slane %v2115, 4
      %v2117 = vrot.slane %v2004, 5
      %v2118 = vsel %vm1039, %v2116, %v2117
      %v2119 = vrot.slane %v2117, 4
      %v2120 = vrot.slane %v2005, 5
      %v2121 = vsel %vm1039, %v2119, %v2120
      %v2122 = vrot.slane %v2006, 5
      %v2123 = vrot.slane %v2122, 4
      %v2124 = vrot.slane %v2007, 5
      %v2125 = vsel %vm1039, %v2123, %v2124
      %v2126 = vrot.slane %v2124, 4
      %v2127 = vrot.slane %v2008, 5
      %v2128 = vsel %vm1039, %v2126, %v2127
      %v2129 = vrot.slane %v2009, 5
      %v2130 = vrot.slane %v2129, 4
      %v2131 = vrot.slane %v2010, 5
      %v2132 = vsel %vm1039, %v2130, %v2131
      %v2133 = vrot.slane %v2131, 4
      %v2134 = vrot.slane %v2011, 5
      %v2135 = vsel %vm1039, %v2133, %v2134
      %v2136 = vrot.slane %v2012, 5
      %v2137 = vrot.slane %v2136, 4
      %v2138 = vrot.slane %v2013, 5
      %v2139 = vsel %vm1039, %v2137, %v2138
      %v2140 = vrot.slane %v2138, 4
      %v2141 = vrot.slane %v2014, 5
      %v2142 = vsel %vm1039, %v2140, %v2141
      %v2143 = vrot.slane %v2015, 5
      %v2144 = vrot.slane %v2143, 4
      %v2145 = vrot.slane %v2016, 5
      %v2146 = vsel %vm1039, %v2144, %v2145
      %v2147 = vrot.slane %v2145, 4
      %v2148 = vrot.slane %v2017, 5
      %v2149 = vsel %vm1039, %v2147, %v2148
      %v2150 = vrot.slane %v2018, 5
      %v2151 = vrot.slane %v2150, 4
      %v2152 = vrot.slane %v2019, 5
      %v2153 = vsel %vm1039, %v2151, %v2152
      %v2154 = vrot.slane %v2152, 4
      %v2155 = vrot.slane %v2020, 5
      %v2156 = vsel %vm1039, %v2154, %v2155
      %v2157 = vrot.slane %v2021, 5
      %v2158 = vrot.slane %v2157, 4
      %v2159 = vrot.slane %v2022, 5
      %v2160 = vsel %vm1039, %v2158, %v2159
      %v2161 = vrot.slane %v2159, 4
      %v2162 = vrot.slane %v2023, 5
      %v2163 = vsel %vm1039, %v2161, %v2162
      %v2164 = vrot.slane %v2024, 5
      %v2165 = vrot.slane %v2164, 4
      %v2166 = vrot.slane %v2025, 5
      %v2167 = vsel %vm1039, %v2165, %v2166
      %v2168 = vrot.slane %v2166, 4
      %v2169 = vrot.slane %v2026, 5
      %v2170 = vsel %vm1039, %v2168, %v2169
      %v2171 = vrot.slane %v2027, 5
      %v2172 = vrot.slane %v2171, 4
      %v2173 = vrot.slane %v2028, 5
      %v2174 = vsel %vm1039, %v2172, %v2173
      %v2175 = vrot.slane %v2173, 4
      %v2176 = vrot.slane %v2029, 5
      %v2177 = vsel %vm1039, %v2175, %v2176
      %v2178 = vrot.slane %v2030, 5
      %v2179 = vrot.slane %v2178, 4
      %v2180 = vrot.slane %v2031, 5
      %v2181 = vsel %vm1039, %v2179, %v2180
      %v2182 = vrot.slane %v2180, 4
      %v2183 = vrot.slane %v2032, 5
      %v2184 = vsel %vm1039, %v2182, %v2183
      %v2185 = vrot.slane %v2033, 5
      %v2186 = vrot.slane %v2185, 4
      %v2187 = vrot.slane %v2034, 5
      %v2188 = vsel %vm1039, %v2186, %v2187
      %v2189 = vrot.slane %v2187, 4
      %v2190 = vrot.slane %v2035, 5
      %v2191 = vsel %vm1039, %v2189, %v2190
      %v2192 = vrot.slane %v2036, 5
      %v2193 = vrot.slane %v2192, 4
      %v2194 = vrot.slane %v2037, 5
      %v2195 = vsel %vm1039, %v2193, %v2194
      %v2196 = vrot.slane %v2194, 4
      %v2197 = vrot.slane %v2038, 5
      %v2198 = vsel %vm1039, %v2196, %v2197
      %v2199 = vunpack.c.l.b16 %v2090
      %v2200 = vunpack.c.l.b16 %v2093
      %v2201 = vunpack.c.l.b16 %v2097
      %v2202 = vunpack.c.l.b16 %v2100
      %v2203 = vunpack.c.l.b16 %v2104
      %v2204 = vunpack.c.l.b16 %v2107
      %v2205 = vunpack.c.l.b16 %v2111
      %v2206 = vunpack.c.l.b16 %v2114
      %v2207 = vunpack.c.l.b16 %v2118
      %v2208 = vunpack.c.l.b16 %v2121
      %v2209 = vunpack.c.l.b16 %v2125
      %v2210 = vunpack.c.l.b16 %v2128
      %v2211 = vunpack.c.l.b16 %v2132
      %v2212 = vunpack.c.l.b16 %v2135
      %v2213 = vunpack.c.l.b16 %v2139
      %v2214 = vunpack.c.l.b16 %v2142
      %v2215 = vunpack.c.l.b16 %v2146
      %v2216 = vunpack.c.l.b16 %v2149
      %v2217 = vunpack.c.l.b16 %v2153
      %v2218 = vunpack.c.l.b16 %v2156
      %v2219 = vunpack.c.l.b16 %v2160
      %v2220 = vunpack.c.l.b16 %v2163
      %v2221 = vunpack.c.l.b16 %v2167
      %v2222 = vunpack.c.l.b16 %v2170
      %v2223 = vunpack.c.l.b16 %v2174
      %v2224 = vunpack.c.l.b16 %v2177
      %v2225 = vunpack.c.l.b16 %v2181
      %v2226 = vunpack.c.l.b16 %v2184
      %v2227 = vunpack.c.l.b16 %v2188
      %v2228 = vunpack.c.l.b16 %v2191
      %v2229 = vunpack.c.l.b16 %v2195
      %v2230 = vunpack.c.l.b16 %v2198
      %v2231 = vpack.c.b16 %v2200, %v2199
      %v2232 = vpack.c.b16 %v2202, %v2201
      %v2233 = vpack.c.b16 %v2204, %v2203
      %v2234 = vpack.c.b16 %v2206, %v2205
      %v2235 = vpack.c.b16 %v2208, %v2207
      %v2236 = vpack.c.b16 %v2210, %v2209
      %v2237 = vpack.c.b16 %v2212, %v2211
      %v2238 = vpack.c.b16 %v2214, %v2213
      %v2239 = vpack.c.b16 %v2216, %v2215
      %v2240 = vpack.c.b16 %v2218, %v2217
      %v2241 = vpack.c.b16 %v2220, %v2219
      %v2242 = vpack.c.b16 %v2222, %v2221
      %v2243 = vpack.c.b16 %v2224, %v2223
      %v2244 = vpack.c.b16 %v2226, %v2225
      %v2245 = vpack.c.b16 %v2228, %v2227
      %v2246 = vpack.c.b16 %v2230, %v2229
      %2247 = vrot.lane.b32.xlu0 %v2231, 80
      %v2248 = vpop.permute.xlu0 %2247
      %2249 = vrot.lane.b32.xlu0 %v2232, 80
      %v2250 = vpop.permute.xlu0 %2249
      %2251 = vrot.lane.b32.xlu0 %v2233, 80
      %v2252 = vpop.permute.xlu0 %2251
      %2253 = vrot.lane.b32.xlu0 %v2234, 80
      %v2254 = vpop.permute.xlu0 %2253
      %2255 = vrot.lane.b32.xlu0 %v2235, 80
      %v2256 = vpop.permute.xlu0 %2255
      %2257 = vrot.lane.b32.xlu0 %v2236, 80
      %v2258 = vpop.permute.xlu0 %2257
      %2259 = vrot.lane.b32.xlu0 %v2237, 80
      %v2260 = vpop.permute.xlu0 %2259
      %2261 = vrot.lane.b32.xlu0 %v2238, 80
      %v2262 = vpop.permute.xlu0 %2261
      %2263 = vrot.lane.b32.xlu0 %v2239, 80
      %v2264 = vpop.permute.xlu0 %2263
      %2265 = vrot.lane.b32.xlu0 %v2240, 80
      %v2266 = vpop.permute.xlu0 %2265
      %2267 = vrot.lane.b32.xlu0 %v2241, 80
      %v2268 = vpop.permute.xlu0 %2267
      %2269 = vrot.lane.b32.xlu0 %v2242, 80
      %v2270 = vpop.permute.xlu0 %2269
      %2271 = vrot.lane.b32.xlu0 %v2243, 80
      %v2272 = vpop.permute.xlu0 %2271
      %2273 = vrot.lane.b32.xlu0 %v2244, 80
      %v2274 = vpop.permute.xlu0 %2273
      %2275 = vrot.lane.b32.xlu0 %v2245, 80
      %v2276 = vpop.permute.xlu0 %2275
      %2277 = vrot.lane.b32.xlu0 %v2246, 80
      %v2278 = vpop.permute.xlu0 %2277
      %vm2295 = vcmask 786048
      %2296 = vst.msk [vmem:[#allocation2] sm:$0xff] %vm2295, %v2248
      %2297 = vst.msk [vmem:[#allocation2 + $0x10] sm:$0xff] %vm2295, %v2250
      %2298 = vst.msk [vmem:[#allocation2 + $0x20] sm:$0xff] %vm2295, %v2252
      %2299 = vst.msk [vmem:[#allocation2 + $0x30] sm:$0xff] %vm2295, %v2254
      %2300 = vst.msk [vmem:[#allocation2 + $0x40] sm:$0xff] %vm2295, %v2256
      %2301 = vst.msk [vmem:[#allocation2 + $0x50] sm:$0xff] %vm2295, %v2258
      %2302 = vst.msk [vmem:[#allocation2 + $0x60] sm:$0xff] %vm2295, %v2260
      %2303 = vst.msk [vmem:[#allocation2 + $0x70] sm:$0xff] %vm2295, %v2262
      %2304 = vst.msk [vmem:[#allocation2 + $0x80] sm:$0xff] %vm2295, %v2264
      %2305 = vst.msk [vmem:[#allocation2 + $0x90] sm:$0xff] %vm2295, %v2266
      %2306 = vst.msk [vmem:[#allocation2 + $0xa0] sm:$0xff] %vm2295, %v2268
      %2307 = vst.msk [vmem:[#allocation2 + $0xb0] sm:$0xff] %vm2295, %v2270
      %2308 = vst.msk [vmem:[#allocation2 + $0xc0] sm:$0xff] %vm2295, %v2272
      %2309 = vst.msk [vmem:[#allocation2 + $0xd0] sm:$0xff] %vm2295, %v2274
      %2310 = vst.msk [vmem:[#allocation2 + $0xe0] sm:$0xff] %vm2295, %v2276
      %2311 = vst.msk [vmem:[#allocation2 + $0xf0] sm:$0xff] %vm2295, %v2278
      %s2312 = sadd.s32 %s244, 2
      %s2313 = smul.u32 %s2312, 3
      %s2314 = smul.addr %s2313, 4
      %s2315 = scalar_lea.vmem %s221, %s2314
      %v2316 = vld [vmem:[%s2315] sm:$0xf]
      %v2317 = vld [vmem:[%s2315 + $0x4] sm:$0xf]
      %v2318 = vld [vmem:[%s2315 + $0xc] sm:$0xf]
      %v2319 = vld [vmem:[%s2315 + $0x10] sm:$0xf]
      %v2320 = vld [vmem:[%s2315 + $0x18] sm:$0xf]
      %v2321 = vld [vmem:[%s2315 + $0x1c] sm:$0xf]
      %v2322 = vld [vmem:[%s2315 + $0x24] sm:$0xf]
      %v2323 = vld [vmem:[%s2315 + $0x28] sm:$0xf]
      %v2324 = vld [vmem:[%s2315 + $0x30] sm:$0xf]
      %v2325 = vld [vmem:[%s2315 + $0x34] sm:$0xf]
      %v2326 = vld [vmem:[%s2315 + $0x3c] sm:$0xf]
      %v2327 = vld [vmem:[%s2315 + $0x40] sm:$0xf]
      %v2328 = vld [vmem:[%s2315 + $0x48] sm:$0xf]
      %v2329 = vld [vmem:[%s2315 + $0x4c] sm:$0xf]
      %v2330 = vld [vmem:[%s2315 + $0x54] sm:$0xf]
      %v2331 = vld [vmem:[%s2315 + $0x58] sm:$0xf]
      %v2332 = vld [vmem:[%s2315 + $0x60] sm:$0xf]
      %v2333 = vld [vmem:[%s2315 + $0x64] sm:$0xf]
      %v2334 = vld [vmem:[%s2315 + $0x6c] sm:$0xf]
      %v2335 = vld [vmem:[%s2315 + $0x70] sm:$0xf]
      %v2336 = vld [vmem:[%s2315 + $0x78] sm:$0xf]
      %v2337 = vld [vmem:[%s2315 + $0x7c] sm:$0xf]
      %v2338 = vld [vmem:[%s2315 + $0x84] sm:$0xf]
      %v2339 = vld [vmem:[%s2315 + $0x88] sm:$0xf]
      %v2340 = vld [vmem:[%s2315 + $0x90] sm:$0xf]
      %v2341 = vld [vmem:[%s2315 + $0x94] sm:$0xf]
      %v2342 = vld [vmem:[%s2315 + $0x9c] sm:$0xf]
      %v2343 = vld [vmem:[%s2315 + $0xa0] sm:$0xf]
      %v2344 = vld [vmem:[%s2315 + $0xa8] sm:$0xf]
      %v2345 = vld [vmem:[%s2315 + $0xac] sm:$0xf]
      %v2346 = vld [vmem:[%s2315 + $0xb4] sm:$0xf]
      %v2347 = vld [vmem:[%s2315 + $0xb8] sm:$0xf]
      %v2380 = vunpack.c.l.b16 %v2316
      %v2381 = vunpack.c.l.b16 %v2317
      %v2382 = vunpack.c.l.b16 %v2318
      %v2383 = vunpack.c.l.b16 %v2319
      %v2384 = vunpack.c.l.b16 %v2320
      %v2385 = vunpack.c.l.b16 %v2321
      %v2386 = vunpack.c.l.b16 %v2322
      %v2387 = vunpack.c.l.b16 %v2323
      %v2388 = vunpack.c.l.b16 %v2324
      %v2389 = vunpack.c.l.b16 %v2325
      %v2390 = vunpack.c.l.b16 %v2326
      %v2391 = vunpack.c.l.b16 %v2327
      %v2392 = vunpack.c.l.b16 %v2328
      %v2393 = vunpack.c.l.b16 %v2329
      %v2394 = vunpack.c.l.b16 %v2330
      %v2395 = vunpack.c.l.b16 %v2331
      %v2396 = vunpack.c.l.b16 %v2332
      %v2397 = vunpack.c.l.b16 %v2333
      %v2398 = vunpack.c.l.b16 %v2334
      %v2399 = vunpack.c.l.b16 %v2335
      %v2400 = vunpack.c.l.b16 %v2336
      %v2401 = vunpack.c.l.b16 %v2337
      %v2402 = vunpack.c.l.b16 %v2338
      %v2403 = vunpack.c.l.b16 %v2339
      %v2404 = vunpack.c.l.b16 %v2340
      %v2405 = vunpack.c.l.b16 %v2341
      %v2406 = vunpack.c.l.b16 %v2342
      %v2407 = vunpack.c.l.b16 %v2343
      %v2408 = vunpack.c.l.b16 %v2344
      %v2409 = vunpack.c.l.b16 %v2345
      %v2410 = vunpack.c.l.b16 %v2346
      %v2411 = vunpack.c.l.b16 %v2347
      %v2412 = vpack.c.b16 %v2381, %v2380
      %v2413 = vpack.c.b16 %v2383, %v2382
      %v2414 = vpack.c.b16 %v2385, %v2384
      %v2415 = vpack.c.b16 %v2387, %v2386
      %v2416 = vpack.c.b16 %v2389, %v2388
      %v2417 = vpack.c.b16 %v2391, %v2390
      %v2418 = vpack.c.b16 %v2393, %v2392
      %v2419 = vpack.c.b16 %v2395, %v2394
      %v2420 = vpack.c.b16 %v2397, %v2396
      %v2421 = vpack.c.b16 %v2399, %v2398
      %v2422 = vpack.c.b16 %v2401, %v2400
      %v2423 = vpack.c.b16 %v2403, %v2402
      %v2424 = vpack.c.b16 %v2405, %v2404
      %v2425 = vpack.c.b16 %v2407, %v2406
      %v2426 = vpack.c.b16 %v2409, %v2408
      %v2427 = vpack.c.b16 %v2411, %v2410
      %2428 = vrot.lane.b32.xlu0 %v2412, 96
      %v2429 = vpop.permute.xlu0 %2428
      %2430 = vrot.lane.b32.xlu0 %v2413, 96
      %v2431 = vpop.permute.xlu0 %2430
      %2432 = vrot.lane.b32.xlu0 %v2414, 96
      %v2433 = vpop.permute.xlu0 %2432
      %2434 = vrot.lane.b32.xlu0 %v2415, 96
      %v2435 = vpop.permute.xlu0 %2434
      %2436 = vrot.lane.b32.xlu0 %v2416, 96
      %v2437 = vpop.permute.xlu0 %2436
      %2438 = vrot.lane.b32.xlu0 %v2417, 96
      %v2439 = vpop.permute.xlu0 %2438
      %2440 = vrot.lane.b32.xlu0 %v2418, 96
      %v2441 = vpop.permute.xlu0 %2440
      %2442 = vrot.lane.b32.xlu0 %v2419, 96
      %v2443 = vpop.permute.xlu0 %2442
      %2444 = vrot.lane.b32.xlu0 %v2420, 96
      %v2445 = vpop.permute.xlu0 %2444
      %2446 = vrot.lane.b32.xlu0 %v2421, 96
      %v2447 = vpop.permute.xlu0 %2446
      %2448 = vrot.lane.b32.xlu0 %v2422, 96
      %v2449 = vpop.permute.xlu0 %2448
      %2450 = vrot.lane.b32.xlu0 %v2423, 96
      %v2451 = vpop.permute.xlu0 %2450
      %2452 = vrot.lane.b32.xlu0 %v2424, 96
      %v2453 = vpop.permute.xlu0 %2452
      %2454 = vrot.lane.b32.xlu0 %v2425, 96
      %v2455 = vpop.permute.xlu0 %2454
      %2456 = vrot.lane.b32.xlu0 %v2426, 96
      %v2457 = vpop.permute.xlu0 %2456
      %2458 = vrot.lane.b32.xlu0 %v2427, 96
      %v2459 = vpop.permute.xlu0 %2458
      %vm2476 = vcmask 917248
      %2477 = vst.msk [vmem:[#allocation2] sm:$0xff] %vm2476, %v2429
      %2478 = vst.msk [vmem:[#allocation2 + $0x10] sm:$0xff] %vm2476, %v2431
      %2479 = vst.msk [vmem:[#allocation2 + $0x20] sm:$0xff] %vm2476, %v2433
      %2480 = vst.msk [vmem:[#allocation2 + $0x30] sm:$0xff] %vm2476, %v2435
      %2481 = vst.msk [vmem:[#allocation2 + $0x40] sm:$0xff] %vm2476, %v2437
      %2482 = vst.msk [vmem:[#allocation2 + $0x50] sm:$0xff] %vm2476, %v2439
      %2483 = vst.msk [vmem:[#allocation2 + $0x60] sm:$0xff] %vm2476, %v2441
      %2484 = vst.msk [vmem:[#allocation2 + $0x70] sm:$0xff] %vm2476, %v2443
      %2485 = vst.msk [vmem:[#allocation2 + $0x80] sm:$0xff] %vm2476, %v2445
      %2486 = vst.msk [vmem:[#allocation2 + $0x90] sm:$0xff] %vm2476, %v2447
      %2487 = vst.msk [vmem:[#allocation2 + $0xa0] sm:$0xff] %vm2476, %v2449
      %2488 = vst.msk [vmem:[#allocation2 + $0xb0] sm:$0xff] %vm2476, %v2451
      %2489 = vst.msk [vmem:[#allocation2 + $0xc0] sm:$0xff] %vm2476, %v2453
      %2490 = vst.msk [vmem:[#allocation2 + $0xd0] sm:$0xff] %vm2476, %v2455
      %2491 = vst.msk [vmem:[#allocation2 + $0xe0] sm:$0xff] %vm2476, %v2457
      %2492 = vst.msk [vmem:[#allocation2 + $0xf0] sm:$0xff] %vm2476, %v2459
      %v2493 = vld [vmem:[%s2315] sm:$0xf]
      %v2494 = vld [vmem:[%s2315 + $0x4] sm:$0xf]
      %v2495 = vld [vmem:[%s2315 + $0x8] sm:$0x1]
      %v2496 = vld [vmem:[%s2315 + $0xc] sm:$0xf]
      %v2497 = vld [vmem:[%s2315 + $0x10] sm:$0xf]
      %v2498 = vld [vmem:[%s2315 + $0x14] sm:$0x1]
      %v2499 = vld [vmem:[%s2315 + $0x18] sm:$0xf]
      %v2500 = vld [vmem:[%s2315 + $0x1c] sm:$0xf]
      %v2501 = vld [vmem:[%s2315 + $0x20] sm:$0x1]
      %v2502 = vld [vmem:[%s2315 + $0x24] sm:$0xf]
      %v2503 = vld [vmem:[%s2315 + $0x28] sm:$0xf]
      %v2504 = vld [vmem:[%s2315 + $0x2c] sm:$0x1]
      %v2505 = vld [vmem:[%s2315 + $0x30] sm:$0xf]
      %v2506 = vld [vmem:[%s2315 + $0x34] sm:$0xf]
      %v2507 = vld [vmem:[%s2315 + $0x38] sm:$0x1]
      %v2508 = vld [vmem:[%s2315 + $0x3c] sm:$0xf]
      %v2509 = vld [vmem:[%s2315 + $0x40] sm:$0xf]
      %v2510 = vld [vmem:[%s2315 + $0x44] sm:$0x1]
      %v2511 = vld [vmem:[%s2315 + $0x48] sm:$0xf]
      %v2512 = vld [vmem:[%s2315 + $0x4c] sm:$0xf]
      %v2513 = vld [vmem:[%s2315 + $0x50] sm:$0x1]
      %v2514 = vld [vmem:[%s2315 + $0x54] sm:$0xf]
      %v2515 = vld [vmem:[%s2315 + $0x58] sm:$0xf]
      %v2516 = vld [vmem:[%s2315 + $0x5c] sm:$0x1]
      %v2517 = vld [vmem:[%s2315 + $0x60] sm:$0xf]
      %v2518 = vld [vmem:[%s2315 + $0x64] sm:$0xf]
      %v2519 = vld [vmem:[%s2315 + $0x68] sm:$0x1]
      %v2520 = vld [vmem:[%s2315 + $0x6c] sm:$0xf]
      %v2521 = vld [vmem:[%s2315 + $0x70] sm:$0xf]
      %v2522 = vld [vmem:[%s2315 + $0x74] sm:$0x1]
      %v2523 = vld [vmem:[%s2315 + $0x78] sm:$0xf]
      %v2524 = vld [vmem:[%s2315 + $0x7c] sm:$0xf]
      %v2525 = vld [vmem:[%s2315 + $0x80] sm:$0x1]
      %v2526 = vld [vmem:[%s2315 + $0x84] sm:$0xf]
      %v2527 = vld [vmem:[%s2315 + $0x88] sm:$0xf]
      %v2528 = vld [vmem:[%s2315 + $0x8c] sm:$0x1]
      %v2529 = vld [vmem:[%s2315 + $0x90] sm:$0xf]
      %v2530 = vld [vmem:[%s2315 + $0x94] sm:$0xf]
      %v2531 = vld [vmem:[%s2315 + $0x98] sm:$0x1]
      %v2532 = vld [vmem:[%s2315 + $0x9c] sm:$0xf]
      %v2533 = vld [vmem:[%s2315 + $0xa0] sm:$0xf]
      %v2534 = vld [vmem:[%s2315 + $0xa4] sm:$0x1]
      %v2535 = vld [vmem:[%s2315 + $0xa8] sm:$0xf]
      %v2536 = vld [vmem:[%s2315 + $0xac] sm:$0xf]
      %v2537 = vld [vmem:[%s2315 + $0xb0] sm:$0x1]
      %v2538 = vld [vmem:[%s2315 + $0xb4] sm:$0xf]
      %v2539 = vld [vmem:[%s2315 + $0xb8] sm:$0xf]
      %v2540 = vld [vmem:[%s2315 + $0xbc] sm:$0x1]
      %v2542 = vshrl.u32 %v2493, 16
      %v2544 = vrot.slane %v2542, 4
      %v2545 = vshll.u32 %v2493, 16
      %v2547 = vrot.slane %v2545, 5
      %v2548 = vor.u32 %v2544, %v2547
      %v2549 = vrot.slane %v2548, 4
      %v2551 = vshll.u32 %v2494, 16
      %v2553 = vrot.slane %v2551, 5
      %v2554 = vsel %vm443, %v2549, %v2553
      %v2555 = vshrl.u32 %v2494, 16
      %v2557 = vrot.slane %v2555, 4
      %v2558 = vor.u32 %v2557, %v2553
      %v2559 = vrot.slane %v2558, 4
      %v2561 = vshll.u32 %v2495, 16
      %v2563 = vrot.slane %v2561, 5
      %v2564 = vsel %vm443, %v2559, %v2563
      %v2566 = vshrl.u32 %v2496, 16
      %v2568 = vrot.slane %v2566, 4
      %v2569 = vshll.u32 %v2496, 16
      %v2571 = vrot.slane %v2569, 5
      %v2572 = vor.u32 %v2568, %v2571
      %v2573 = vrot.slane %v2572, 4
      %v2575 = vshll.u32 %v2497, 16
      %v2577 = vrot.slane %v2575, 5
      %v2578 = vsel %vm443, %v2573, %v2577
      %v2579 = vshrl.u32 %v2497, 16
      %v2581 = vrot.slane %v2579, 4
      %v2582 = vor.u32 %v2581, %v2577
      %v2583 = vrot.slane %v2582, 4
      %v2585 = vshll.u32 %v2498, 16
      %v2587 = vrot.slane %v2585, 5
      %v2588 = vsel %vm443, %v2583, %v2587
      %v2590 = vshrl.u32 %v2499, 16
      %v2592 = vrot.slane %v2590, 4
      %v2593 = vshll.u32 %v2499, 16
      %v2595 = vrot.slane %v2593, 5
      %v2596 = vor.u32 %v2592, %v2595
      %v2597 = vrot.slane %v2596, 4
      %v2599 = vshll.u32 %v2500, 16
      %v2601 = vrot.slane %v2599, 5
      %v2602 = vsel %vm443, %v2597, %v2601
      %v2603 = vshrl.u32 %v2500, 16
      %v2605 = vrot.slane %v2603, 4
      %v2606 = vor.u32 %v2605, %v2601
      %v2607 = vrot.slane %v2606, 4
      %v2609 = vshll.u32 %v2501, 16
      %v2611 = vrot.slane %v2609, 5
      %v2612 = vsel %vm443, %v2607, %v2611
      %v2614 = vshrl.u32 %v2502, 16
      %v2616 = vrot.slane %v2614, 4
      %v2617 = vshll.u32 %v2502, 16
      %v2619 = vrot.slane %v2617, 5
      %v2620 = vor.u32 %v2616, %v2619
      %v2621 = vrot.slane %v2620, 4
      %v2623 = vshll.u32 %v2503, 16
      %v2625 = vrot.slane %v2623, 5
      %v2626 = vsel %vm443, %v2621, %v2625
      %v2627 = vshrl.u32 %v2503, 16
      %v2629 = vrot.slane %v2627, 4
      %v2630 = vor.u32 %v2629, %v2625
      %v2631 = vrot.slane %v2630, 4
      %v2633 = vshll.u32 %v2504, 16
      %v2635 = vrot.slane %v2633, 5
      %v2636 = vsel %vm443, %v2631, %v2635
      %v2638 = vshrl.u32 %v2505, 16
      %v2640 = vrot.slane %v2638, 4
      %v2641 = vshll.u32 %v2505, 16
      %v2643 = vrot.slane %v2641, 5
      %v2644 = vor.u32 %v2640, %v2643
      %v2645 = vrot.slane %v2644, 4
      %v2647 = vshll.u32 %v2506, 16
      %v2649 = vrot.slane %v2647, 5
      %v2650 = vsel %vm443, %v2645, %v2649
      %v2651 = vshrl.u32 %v2506, 16
      %v2653 = vrot.slane %v2651, 4
      %v2654 = vor.u32 %v2653, %v2649
      %v2655 = vrot.slane %v2654, 4
      %v2657 = vshll.u32 %v2507, 16
      %v2659 = vrot.slane %v2657, 5
      %v2660 = vsel %vm443, %v2655, %v2659
      %v2662 = vshrl.u32 %v2508, 16
      %v2664 = vrot.slane %v2662, 4
      %v2665 = vshll.u32 %v2508, 16
      %v2667 = vrot.slane %v2665, 5
      %v2668 = vor.u32 %v2664, %v2667
      %v2669 = vrot.slane %v2668, 4
      %v2671 = vshll.u32 %v2509, 16
      %v2673 = vrot.slane %v2671, 5
      %v2674 = vsel %vm443, %v2669, %v2673
      %v2675 = vshrl.u32 %v2509, 16
      %v2677 = vrot.slane %v2675, 4
      %v2678 = vor.u32 %v2677, %v2673
      %v2679 = vrot.slane %v2678, 4
      %v2681 = vshll.u32 %v2510, 16
      %v2683 = vrot.slane %v2681, 5
      %v2684 = vsel %vm443, %v2679, %v2683
      %v2686 = vshrl.u32 %v2511, 16
      %v2688 = vrot.slane %v2686, 4
      %v2689 = vshll.u32 %v2511, 16
      %v2691 = vrot.slane %v2689, 5
      %v2692 = vor.u32 %v2688, %v2691
      %v2693 = vrot.slane %v2692, 4
      %v2695 = vshll.u32 %v2512, 16
      %v2697 = vrot.slane %v2695, 5
      %v2698 = vsel %vm443, %v2693, %v2697
      %v2699 = vshrl.u32 %v2512, 16
      %v2701 = vrot.slane %v2699, 4
      %v2702 = vor.u32 %v2701, %v2697
      %v2703 = vrot.slane %v2702, 4
      %v2705 = vshll.u32 %v2513, 16
      %v2707 = vrot.slane %v2705, 5
      %v2708 = vsel %vm443, %v2703, %v2707
      %v2710 = vshrl.u32 %v2514, 16
      %v2712 = vrot.slane %v2710, 4
      %v2713 = vshll.u32 %v2514, 16
      %v2715 = vrot.slane %v2713, 5
      %v2716 = vor.u32 %v2712, %v2715
      %v2717 = vrot.slane %v2716, 4
      %v2719 = vshll.u32 %v2515, 16
      %v2721 = vrot.slane %v2719, 5
      %v2722 = vsel %vm443, %v2717, %v2721
      %v2723 = vshrl.u32 %v2515, 16
      %v2725 = vrot.slane %v2723, 4
      %v2726 = vor.u32 %v2725, %v2721
      %v2727 = vrot.slane %v2726, 4
      %v2729 = vshll.u32 %v2516, 16
      %v2731 = vrot.slane %v2729, 5
      %v2732 = vsel %vm443, %v2727, %v2731
      %v2734 = vshrl.u32 %v2517, 16
      %v2736 = vrot.slane %v2734, 4
      %v2737 = vshll.u32 %v2517, 16
      %v2739 = vrot.slane %v2737, 5
      %v2740 = vor.u32 %v2736, %v2739
      %v2741 = vrot.slane %v2740, 4
      %v2743 = vshll.u32 %v2518, 16
      %v2745 = vrot.slane %v2743, 5
      %v2746 = vsel %vm443, %v2741, %v2745
      %v2747 = vshrl.u32 %v2518, 16
      %v2749 = vrot.slane %v2747, 4
      %v2750 = vor.u32 %v2749, %v2745
      %v2751 = vrot.slane %v2750, 4
      %v2753 = vshll.u32 %v2519, 16
      %v2755 = vrot.slane %v2753, 5
      %v2756 = vsel %vm443, %v2751, %v2755
      %v2758 = vshrl.u32 %v2520, 16
      %v2760 = vrot.slane %v2758, 4
      %v2761 = vshll.u32 %v2520, 16
      %v2763 = vrot.slane %v2761, 5
      %v2764 = vor.u32 %v2760, %v2763
      %v2765 = vrot.slane %v2764, 4
      %v2767 = vshll.u32 %v2521, 16
      %v2769 = vrot.slane %v2767, 5
      %v2770 = vsel %vm443, %v2765, %v2769
      %v2771 = vshrl.u32 %v2521, 16
      %v2773 = vrot.slane %v2771, 4
      %v2774 = vor.u32 %v2773, %v2769
      %v2775 = vrot.slane %v2774, 4
      %v2777 = vshll.u32 %v2522, 16
      %v2779 = vrot.slane %v2777, 5
      %v2780 = vsel %vm443, %v2775, %v2779
      %v2782 = vshrl.u32 %v2523, 16
      %v2784 = vrot.slane %v2782, 4
      %v2785 = vshll.u32 %v2523, 16
      %v2787 = vrot.slane %v2785, 5
      %v2788 = vor.u32 %v2784, %v2787
      %v2789 = vrot.slane %v2788, 4
      %v2791 = vshll.u32 %v2524, 16
      %v2793 = vrot.slane %v2791, 5
      %v2794 = vsel %vm443, %v2789, %v2793
      %v2795 = vshrl.u32 %v2524, 16
      %v2797 = vrot.slane %v2795, 4
      %v2798 = vor.u32 %v2797, %v2793
      %v2799 = vrot.slane %v2798, 4
      %v2801 = vshll.u32 %v2525, 16
      %v2803 = vrot.slane %v2801, 5
      %v2804 = vsel %vm443, %v2799, %v2803
      %v2806 = vshrl.u32 %v2526, 16
      %v2808 = vrot.slane %v2806, 4
      %v2809 = vshll.u32 %v2526, 16
      %v2811 = vrot.slane %v2809, 5
      %v2812 = vor.u32 %v2808, %v2811
      %v2813 = vrot.slane %v2812, 4
      %v2815 = vshll.u32 %v2527, 16
      %v2817 = vrot.slane %v2815, 5
      %v2818 = vsel %vm443, %v2813, %v2817
      %v2819 = vshrl.u32 %v2527, 16
      %v2821 = vrot.slane %v2819, 4
      %v2822 = vor.u32 %v2821, %v2817
      %v2823 = vrot.slane %v2822, 4
      %v2825 = vshll.u32 %v2528, 16
      %v2827 = vrot.slane %v2825, 5
      %v2828 = vsel %vm443, %v2823, %v2827
      %v2830 = vshrl.u32 %v2529, 16
      %v2832 = vrot.slane %v2830, 4
      %v2833 = vshll.u32 %v2529, 16
      %v2835 = vrot.slane %v2833, 5
      %v2836 = vor.u32 %v2832, %v2835
      %v2837 = vrot.slane %v2836, 4
      %v2839 = vshll.u32 %v2530, 16
      %v2841 = vrot.slane %v2839, 5
      %v2842 = vsel %vm443, %v2837, %v2841
      %v2843 = vshrl.u32 %v2530, 16
      %v2845 = vrot.slane %v2843, 4
      %v2846 = vor.u32 %v2845, %v2841
      %v2847 = vrot.slane %v2846, 4
      %v2849 = vshll.u32 %v2531, 16
      %v2851 = vrot.slane %v2849, 5
      %v2852 = vsel %vm443, %v2847, %v2851
      %v2854 = vshrl.u32 %v2532, 16
      %v2856 = vrot.slane %v2854, 4
      %v2857 = vshll.u32 %v2532, 16
      %v2859 = vrot.slane %v2857, 5
      %v2860 = vor.u32 %v2856, %v2859
      %v2861 = vrot.slane %v2860, 4
      %v2863 = vshll.u32 %v2533, 16
      %v2865 = vrot.slane %v2863, 5
      %v2866 = vsel %vm443, %v2861, %v2865
      %v2867 = vshrl.u32 %v2533, 16
      %v2869 = vrot.slane %v2867, 4
      %v2870 = vor.u32 %v2869, %v2865
      %v2871 = vrot.slane %v2870, 4
      %v2873 = vshll.u32 %v2534, 16
      %v2875 = vrot.slane %v2873, 5
      %v2876 = vsel %vm443, %v2871, %v2875
      %v2878 = vshrl.u32 %v2535, 16
      %v2880 = vrot.slane %v2878, 4
      %v2881 = vshll.u32 %v2535, 16
      %v2883 = vrot.slane %v2881, 5
      %v2884 = vor.u32 %v2880, %v2883
      %v2885 = vrot.slane %v2884, 4
      %v2887 = vshll.u32 %v2536, 16
      %v2889 = vrot.slane %v2887, 5
      %v2890 = vsel %vm443, %v2885, %v2889
      %v2891 = vshrl.u32 %v2536, 16
      %v2893 = vrot.slane %v2891, 4
      %v2894 = vor.u32 %v2893, %v2889
      %v2895 = vrot.slane %v2894, 4
      %v2897 = vshll.u32 %v2537, 16
      %v2899 = vrot.slane %v2897, 5
      %v2900 = vsel %vm443, %v2895, %v2899
      %v2902 = vshrl.u32 %v2538, 16
      %v2904 = vrot.slane %v2902, 4
      %v2905 = vshll.u32 %v2538, 16
      %v2907 = vrot.slane %v2905, 5
      %v2908 = vor.u32 %v2904, %v2907
      %v2909 = vrot.slane %v2908, 4
      %v2911 = vshll.u32 %v2539, 16
      %v2913 = vrot.slane %v2911, 5
      %v2914 = vsel %vm443, %v2909, %v2913
      %v2915 = vshrl.u32 %v2539, 16
      %v2917 = vrot.slane %v2915, 4
      %v2918 = vor.u32 %v2917, %v2913
      %v2919 = vrot.slane %v2918, 4
      %v2921 = vshll.u32 %v2540, 16
      %v2923 = vrot.slane %v2921, 5
      %v2924 = vsel %vm443, %v2919, %v2923
      %v2925 = vunpack.c.l.b16 %v2554
      %v2926 = vunpack.c.l.b16 %v2564
      %v2927 = vunpack.c.l.b16 %v2578
      %v2928 = vunpack.c.l.b16 %v2588
      %v2929 = vunpack.c.l.b16 %v2602
      %v2930 = vunpack.c.l.b16 %v2612
      %v2931 = vunpack.c.l.b16 %v2626
      %v2932 = vunpack.c.l.b16 %v2636
      %v2933 = vunpack.c.l.b16 %v2650
      %v2934 = vunpack.c.l.b16 %v2660
      %v2935 = vunpack.c.l.b16 %v2674
      %v2936 = vunpack.c.l.b16 %v2684
      %v2937 = vunpack.c.l.b16 %v2698
      %v2938 = vunpack.c.l.b16 %v2708
      %v2939 = vunpack.c.l.b16 %v2722
      %v2940 = vunpack.c.l.b16 %v2732
      %v2941 = vunpack.c.l.b16 %v2746
      %v2942 = vunpack.c.l.b16 %v2756
      %v2943 = vunpack.c.l.b16 %v2770
      %v2944 = vunpack.c.l.b16 %v2780
      %v2945 = vunpack.c.l.b16 %v2794
      %v2946 = vunpack.c.l.b16 %v2804
      %v2947 = vunpack.c.l.b16 %v2818
      %v2948 = vunpack.c.l.b16 %v2828
      %v2949 = vunpack.c.l.b16 %v2842
      %v2950 = vunpack.c.l.b16 %v2852
      %v2951 = vunpack.c.l.b16 %v2866
      %v2952 = vunpack.c.l.b16 %v2876
      %v2953 = vunpack.c.l.b16 %v2890
      %v2954 = vunpack.c.l.b16 %v2900
      %v2955 = vunpack.c.l.b16 %v2914
      %v2956 = vunpack.c.l.b16 %v2924
      %v2957 = vpack.c.b16 %v2926, %v2925
      %v2958 = vpack.c.b16 %v2928, %v2927
      %v2959 = vpack.c.b16 %v2930, %v2929
      %v2960 = vpack.c.b16 %v2932, %v2931
      %v2961 = vpack.c.b16 %v2934, %v2933
      %v2962 = vpack.c.b16 %v2936, %v2935
      %v2963 = vpack.c.b16 %v2938, %v2937
      %v2964 = vpack.c.b16 %v2940, %v2939
      %v2965 = vpack.c.b16 %v2942, %v2941
      %v2966 = vpack.c.b16 %v2944, %v2943
      %v2967 = vpack.c.b16 %v2946, %v2945
      %v2968 = vpack.c.b16 %v2948, %v2947
      %v2969 = vpack.c.b16 %v2950, %v2949
      %v2970 = vpack.c.b16 %v2952, %v2951
      %v2971 = vpack.c.b16 %v2954, %v2953
      %v2972 = vpack.c.b16 %v2956, %v2955
      %2973 = vrot.lane.b32.xlu0 %v2957, 112
      %v2974 = vpop.permute.xlu0 %2973
      %2975 = vrot.lane.b32.xlu0 %v2958, 112
      %v2976 = vpop.permute.xlu0 %2975
      %2977 = vrot.lane.b32.xlu0 %v2959, 112
      %v2978 = vpop.permute.xlu0 %2977
      %2979 = vrot.lane.b32.xlu0 %v2960, 112
      %v2980 = vpop.permute.xlu0 %2979
      %2981 = vrot.lane.b32.xlu0 %v2961, 112
      %v2982 = vpop.permute.xlu0 %2981
      %2983 = vrot.lane.b32.xlu0 %v2962, 112
      %v2984 = vpop.permute.xlu0 %2983
      %2985 = vrot.lane.b32.xlu0 %v2963, 112
      %v2986 = vpop.permute.xlu0 %2985
      %2987 = vrot.lane.b32.xlu0 %v2964, 112
      %v2988 = vpop.permute.xlu0 %2987
      %2989 = vrot.lane.b32.xlu0 %v2965, 112
      %v2990 = vpop.permute.xlu0 %2989
      %2991 = vrot.lane.b32.xlu0 %v2966, 112
      %v2992 = vpop.permute.xlu0 %2991
      %2993 = vrot.lane.b32.xlu0 %v2967, 112
      %v2994 = vpop.permute.xlu0 %2993
      %2995 = vrot.lane.b32.xlu0 %v2968, 112
      %v2996 = vpop.permute.xlu0 %2995
      %2997 = vrot.lane.b32.xlu0 %v2969, 112
      %v2998 = vpop.permute.xlu0 %2997
      %2999 = vrot.lane.b32.xlu0 %v2970, 112
      %v3000 = vpop.permute.xlu0 %2999
      %3001 = vrot.lane.b32.xlu0 %v2971, 112
      %v3002 = vpop.permute.xlu0 %3001
      %3003 = vrot.lane.b32.xlu0 %v2972, 112
      %v3004 = vpop.permute.xlu0 %3003
      %vm3021 = vcmask 1048448
      %3022 = vst.msk [vmem:[#allocation2] sm:$0xff] %vm3021, %v2974
      %3023 = vst.msk [vmem:[#allocation2 + $0x10] sm:$0xff] %vm3021, %v2976
      %3024 = vst.msk [vmem:[#allocation2 + $0x20] sm:$0xff] %vm3021, %v2978
      %3025 = vst.msk [vmem:[#allocation2 + $0x30] sm:$0xff] %vm3021, %v2980
      %3026 = vst.msk [vmem:[#allocation2 + $0x40] sm:$0xff] %vm3021, %v2982
      %3027 = vst.msk [vmem:[#allocation2 + $0x50] sm:$0xff] %vm3021, %v2984
      %3028 = vst.msk [vmem:[#allocation2 + $0x60] sm:$0xff] %vm3021, %v2986
      %3029 = vst.msk [vmem:[#allocation2 + $0x70] sm:$0xff] %vm3021, %v2988
      %3030 = vst.msk [vmem:[#allocation2 + $0x80] sm:$0xff] %vm3021, %v2990
      %3031 = vst.msk [vmem:[#allocation2 + $0x90] sm:$0xff] %vm3021, %v2992
      %3032 = vst.msk [vmem:[#allocation2 + $0xa0] sm:$0xff] %vm3021, %v2994
      %3033 = vst.msk [vmem:[#allocation2 + $0xb0] sm:$0xff] %vm3021, %v2996
      %3034 = vst.msk [vmem:[#allocation2 + $0xc0] sm:$0xff] %vm3021, %v2998
      %3035 = vst.msk [vmem:[#allocation2 + $0xd0] sm:$0xff] %vm3021, %v3000
      %3036 = vst.msk [vmem:[#allocation2 + $0xe0] sm:$0xff] %vm3021, %v3002
      %3037 = vst.msk [vmem:[#allocation2 + $0xf0] sm:$0xff] %vm3021, %v3004
      %v3038 = vld [vmem:[%s2315] sm:$0xe]
      %v3039 = vld [vmem:[%s2315 + $0x4] sm:$0xf]
      %v3040 = vld [vmem:[%s2315 + $0x8] sm:$0x1]
      %v3041 = vld [vmem:[%s2315 + $0xc] sm:$0xe]
      %v3042 = vld [vmem:[%s2315 + $0x10] sm:$0xf]
      %v3043 = vld [vmem:[%s2315 + $0x14] sm:$0x1]
      %v3044 = vld [vmem:[%s2315 + $0x18] sm:$0xe]
      %v3045 = vld [vmem:[%s2315 + $0x1c] sm:$0xf]
      %v3046 = vld [vmem:[%s2315 + $0x20] sm:$0x1]
      %v3047 = vld [vmem:[%s2315 + $0x24] sm:$0xe]
      %v3048 = vld [vmem:[%s2315 + $0x28] sm:$0xf]
      %v3049 = vld [vmem:[%s2315 + $0x2c] sm:$0x1]
      %v3050 = vld [vmem:[%s2315 + $0x30] sm:$0xe]
      %v3051 = vld [vmem:[%s2315 + $0x34] sm:$0xf]
      %v3052 = vld [vmem:[%s2315 + $0x38] sm:$0x1]
      %v3053 = vld [vmem:[%s2315 + $0x3c] sm:$0xe]
      %v3054 = vld [vmem:[%s2315 + $0x40] sm:$0xf]
      %v3055 = vld [vmem:[%s2315 + $0x44] sm:$0x1]
      %v3056 = vld [vmem:[%s2315 + $0x48] sm:$0xe]
      %v3057 = vld [vmem:[%s2315 + $0x4c] sm:$0xf]
      %v3058 = vld [vmem:[%s2315 + $0x50] sm:$0x1]
      %v3059 = vld [vmem:[%s2315 + $0x54] sm:$0xe]
      %v3060 = vld [vmem:[%s2315 + $0x58] sm:$0xf]
      %v3061 = vld [vmem:[%s2315 + $0x5c] sm:$0x1]
      %v3062 = vld [vmem:[%s2315 + $0x60] sm:$0xe]
      %v3063 = vld [vmem:[%s2315 + $0x64] sm:$0xf]
      %v3064 = vld [vmem:[%s2315 + $0x68] sm:$0x1]
      %v3065 = vld [vmem:[%s2315 + $0x6c] sm:$0xe]
      %v3066 = vld [vmem:[%s2315 + $0x70] sm:$0xf]
      %v3067 = vld [vmem:[%s2315 + $0x74] sm:$0x1]
      %v3068 = vld [vmem:[%s2315 + $0x78] sm:$0xe]
      %v3069 = vld [vmem:[%s2315 + $0x7c] sm:$0xf]
      %v3070 = vld [vmem:[%s2315 + $0x80] sm:$0x1]
      %v3071 = vld [vmem:[%s2315 + $0x84] sm:$0xe]
      %v3072 = vld [vmem:[%s2315 + $0x88] sm:$0xf]
      %v3073 = vld [vmem:[%s2315 + $0x8c] sm:$0x1]
      %v3074 = vld [vmem:[%s2315 + $0x90] sm:$0xe]
      %v3075 = vld [vmem:[%s2315 + $0x94] sm:$0xf]
      %v3076 = vld [vmem:[%s2315 + $0x98] sm:$0x1]
      %v3077 = vld [vmem:[%s2315 + $0x9c] sm:$0xe]
      %v3078 = vld [vmem:[%s2315 + $0xa0] sm:$0xf]
      %v3079 = vld [vmem:[%s2315 + $0xa4] sm:$0x1]
      %v3080 = vld [vmem:[%s2315 + $0xa8] sm:$0xe]
      %v3081 = vld [vmem:[%s2315 + $0xac] sm:$0xf]
      %v3082 = vld [vmem:[%s2315 + $0xb0] sm:$0x1]
      %v3083 = vld [vmem:[%s2315 + $0xb4] sm:$0xe]
      %v3084 = vld [vmem:[%s2315 + $0xb8] sm:$0xf]
      %v3085 = vld [vmem:[%s2315 + $0xbc] sm:$0x1]
      %v3134 = vrot.slane %v3038, 5
      %v3135 = vrot.slane %v3134, 4
      %v3136 = vrot.slane %v3039, 5
      %v3137 = vsel %vm1039, %v3135, %v3136
      %v3138 = vrot.slane %v3136, 4
      %v3139 = vrot.slane %v3040, 5
      %v3140 = vsel %vm1039, %v3138, %v3139
      %v3141 = vrot.slane %v3041, 5
      %v3142 = vrot.slane %v3141, 4
      %v3143 = vrot.slane %v3042, 5
      %v3144 = vsel %vm1039, %v3142, %v3143
      %v3145 = vrot.slane %v3143, 4
      %v3146 = vrot.slane %v3043, 5
      %v3147 = vsel %vm1039, %v3145, %v3146
      %v3148 = vrot.slane %v3044, 5
      %v3149 = vrot.slane %v3148, 4
      %v3150 = vrot.slane %v3045, 5
      %v3151 = vsel %vm1039, %v3149, %v3150
      %v3152 = vrot.slane %v3150, 4
      %v3153 = vrot.slane %v3046, 5
      %v3154 = vsel %vm1039, %v3152, %v3153
      %v3155 = vrot.slane %v3047, 5
      %v3156 = vrot.slane %v3155, 4
      %v3157 = vrot.slane %v3048, 5
      %v3158 = vsel %vm1039, %v3156, %v3157
      %v3159 = vrot.slane %v3157, 4
      %v3160 = vrot.slane %v3049, 5
      %v3161 = vsel %vm1039, %v3159, %v3160
      %v3162 = vrot.slane %v3050, 5
      %v3163 = vrot.slane %v3162, 4
      %v3164 = vrot.slane %v3051, 5
      %v3165 = vsel %vm1039, %v3163, %v3164
      %v3166 = vrot.slane %v3164, 4
      %v3167 = vrot.slane %v3052, 5
      %v3168 = vsel %vm1039, %v3166, %v3167
      %v3169 = vrot.slane %v3053, 5
      %v3170 = vrot.slane %v3169, 4
      %v3171 = vrot.slane %v3054, 5
      %v3172 = vsel %vm1039, %v3170, %v3171
      %v3173 = vrot.slane %v3171, 4
      %v3174 = vrot.slane %v3055, 5
      %v3175 = vsel %vm1039, %v3173, %v3174
      %v3176 = vrot.slane %v3056, 5
      %v3177 = vrot.slane %v3176, 4
      %v3178 = vrot.slane %v3057, 5
      %v3179 = vsel %vm1039, %v3177, %v3178
      %v3180 = vrot.slane %v3178, 4
      %v3181 = vrot.slane %v3058, 5
      %v3182 = vsel %vm1039, %v3180, %v3181
      %v3183 = vrot.slane %v3059, 5
      %v3184 = vrot.slane %v3183, 4
      %v3185 = vrot.slane %v3060, 5
      %v3186 = vsel %vm1039, %v3184, %v3185
      %v3187 = vrot.slane %v3185, 4
      %v3188 = vrot.slane %v3061, 5
      %v3189 = vsel %vm1039, %v3187, %v3188
      %v3190 = vrot.slane %v3062, 5
      %v3191 = vrot.slane %v3190, 4
      %v3192 = vrot.slane %v3063, 5
      %v3193 = vsel %vm1039, %v3191, %v3192
      %v3194 = vrot.slane %v3192, 4
      %v3195 = vrot.slane %v3064, 5
      %v3196 = vsel %vm1039, %v3194, %v3195
      %v3197 = vrot.slane %v3065, 5
      %v3198 = vrot.slane %v3197, 4
      %v3199 = vrot.slane %v3066, 5
      %v3200 = vsel %vm1039, %v3198, %v3199
      %v3201 = vrot.slane %v3199, 4
      %v3202 = vrot.slane %v3067, 5
      %v3203 = vsel %vm1039, %v3201, %v3202
      %v3204 = vrot.slane %v3068, 5
      %v3205 = vrot.slane %v3204, 4
      %v3206 = vrot.slane %v3069, 5
      %v3207 = vsel %vm1039, %v3205, %v3206
      %v3208 = vrot.slane %v3206, 4
      %v3209 = vrot.slane %v3070, 5
      %v3210 = vsel %vm1039, %v3208, %v3209
      %v3211 = vrot.slane %v3071, 5
      %v3212 = vrot.slane %v3211, 4
      %v3213 = vrot.slane %v3072, 5
      %v3214 = vsel %vm1039, %v3212, %v3213
      %v3215 = vrot.slane %v3213, 4
      %v3216 = vrot.slane %v3073, 5
      %v3217 = vsel %vm1039, %v3215, %v3216
      %v3218 = vrot.slane %v3074, 5
      %v3219 = vrot.slane %v3218, 4
      %v3220 = vrot.slane %v3075, 5
      %v3221 = vsel %vm1039, %v3219, %v3220
      %v3222 = vrot.slane %v3220, 4
      %v3223 = vrot.slane %v3076, 5
      %v3224 = vsel %vm1039, %v3222, %v3223
      %v3225 = vrot.slane %v3077, 5
      %v3226 = vrot.slane %v3225, 4
      %v3227 = vrot.slane %v3078, 5
      %v3228 = vsel %vm1039, %v3226, %v3227
      %v3229 = vrot.slane %v3227, 4
      %v3230 = vrot.slane %v3079, 5
      %v3231 = vsel %vm1039, %v3229, %v3230
      %v3232 = vrot.slane %v3080, 5
      %v3233 = vrot.slane %v3232, 4
      %v3234 = vrot.slane %v3081, 5
      %v3235 = vsel %vm1039, %v3233, %v3234
      %v3236 = vrot.slane %v3234, 4
      %v3237 = vrot.slane %v3082, 5
      %v3238 = vsel %vm1039, %v3236, %v3237
      %v3239 = vrot.slane %v3083, 5
      %v3240 = vrot.slane %v3239, 4
      %v3241 = vrot.slane %v3084, 5
      %v3242 = vsel %vm1039, %v3240, %v3241
      %v3243 = vrot.slane %v3241, 4
      %v3244 = vrot.slane %v3085, 5
      %v3245 = vsel %vm1039, %v3243, %v3244
      %v3246 = vunpack.c.l.b16 %v3137
      %v3247 = vunpack.c.l.b16 %v3140
      %v3248 = vunpack.c.l.b16 %v3144
      %v3249 = vunpack.c.l.b16 %v3147
      %v3250 = vunpack.c.l.b16 %v3151
      %v3251 = vunpack.c.l.b16 %v3154
      %v3252 = vunpack.c.l.b16 %v3158
      %v3253 = vunpack.c.l.b16 %v3161
      %v3254 = vunpack.c.l.b16 %v3165
      %v3255 = vunpack.c.l.b16 %v3168
      %v3256 = vunpack.c.l.b16 %v3172
      %v3257 = vunpack.c.l.b16 %v3175
      %v3258 = vunpack.c.l.b16 %v3179
      %v3259 = vunpack.c.l.b16 %v3182
      %v3260 = vunpack.c.l.b16 %v3186
      %v3261 = vunpack.c.l.b16 %v3189
      %v3262 = vunpack.c.l.b16 %v3193
      %v3263 = vunpack.c.l.b16 %v3196
      %v3264 = vunpack.c.l.b16 %v3200
      %v3265 = vunpack.c.l.b16 %v3203
      %v3266 = vunpack.c.l.b16 %v3207
      %v3267 = vunpack.c.l.b16 %v3210
      %v3268 = vunpack.c.l.b16 %v3214
      %v3269 = vunpack.c.l.b16 %v3217
      %v3270 = vunpack.c.l.b16 %v3221
      %v3271 = vunpack.c.l.b16 %v3224
      %v3272 = vunpack.c.l.b16 %v3228
      %v3273 = vunpack.c.l.b16 %v3231
      %v3274 = vunpack.c.l.b16 %v3235
      %v3275 = vunpack.c.l.b16 %v3238
      %v3276 = vunpack.c.l.b16 %v3242
      %v3277 = vunpack.c.l.b16 %v3245
      %v3278 = vpack.c.b16 %v3247, %v3246
      %v3279 = vpack.c.b16 %v3249, %v3248
      %v3280 = vpack.c.b16 %v3251, %v3250
      %v3281 = vpack.c.b16 %v3253, %v3252
      %v3282 = vpack.c.b16 %v3255, %v3254
      %v3283 = vpack.c.b16 %v3257, %v3256
      %v3284 = vpack.c.b16 %v3259, %v3258
      %v3285 = vpack.c.b16 %v3261, %v3260
      %v3286 = vpack.c.b16 %v3263, %v3262
      %v3287 = vpack.c.b16 %v3265, %v3264
      %v3288 = vpack.c.b16 %v3267, %v3266
      %v3289 = vpack.c.b16 %v3269, %v3268
      %v3290 = vpack.c.b16 %v3271, %v3270
      %v3291 = vpack.c.b16 %v3273, %v3272
      %v3292 = vpack.c.b16 %v3275, %v3274
      %v3293 = vpack.c.b16 %v3277, %v3276
      %3310 = vst.msk [vmem:[#allocation2 + $0x8] sm:$0xff] %vm376, %v3278
      %3311 = vst.msk [vmem:[#allocation2 + $0x18] sm:$0xff] %vm376, %v3279
      %3312 = vst.msk [vmem:[#allocation2 + $0x28] sm:$0xff] %vm376, %v3280
      %3313 = vst.msk [vmem:[#allocation2 + $0x38] sm:$0xff] %vm376, %v3281
      %3314 = vst.msk [vmem:[#allocation2 + $0x48] sm:$0xff] %vm376, %v3282
      %3315 = vst.msk [vmem:[#allocation2 + $0x58] sm:$0xff] %vm376, %v3283
      %3316 = vst.msk [vmem:[#allocation2 + $0x68] sm:$0xff] %vm376, %v3284
      %3317 = vst.msk [vmem:[#allocation2 + $0x78] sm:$0xff] %vm376, %v3285
      %3318 = vst.msk [vmem:[#allocation2 + $0x88] sm:$0xff] %vm376, %v3286
      %3319 = vst.msk [vmem:[#allocation2 + $0x98] sm:$0xff] %vm376, %v3287
      %3320 = vst.msk [vmem:[#allocation2 + $0xa8] sm:$0xff] %vm376, %v3288
      %3321 = vst.msk [vmem:[#allocation2 + $0xb8] sm:$0xff] %vm376, %v3289
      %3322 = vst.msk [vmem:[#allocation2 + $0xc8] sm:$0xff] %vm376, %v3290
      %3323 = vst.msk [vmem:[#allocation2 + $0xd8] sm:$0xff] %vm376, %v3291
      %3324 = vst.msk [vmem:[#allocation2 + $0xe8] sm:$0xff] %vm376, %v3292
      %3325 = vst.msk [vmem:[#allocation2 + $0xf8] sm:$0xff] %vm376, %v3293
      %vm3326 = vcmask 1047680
      %3327 = vst.msk [vmem:[#allocation2 + $0x8] sm:$0xff] %vm3326, 0
      %3328 = vst.msk [vmem:[#allocation2 + $0x18] sm:$0xff] %vm3326, 0
      %3329 = vst.msk [vmem:[#allocation2 + $0x28] sm:$0xff] %vm3326, 0
      %3330 = vst.msk [vmem:[#allocation2 + $0x38] sm:$0xff] %vm3326, 0
      %3331 = vst.msk [vmem:[#allocation2 + $0x48] sm:$0xff] %vm3326, 0
      %3332 = vst.msk [vmem:[#allocation2 + $0x58] sm:$0xff] %vm3326, 0
      %3333 = vst.msk [vmem:[#allocation2 + $0x68] sm:$0xff] %vm3326, 0
      %3334 = vst.msk [vmem:[#allocation2 + $0x78] sm:$0xff] %vm3326, 0
      %3335 = vst.msk [vmem:[#allocation2 + $0x88] sm:$0xff] %vm3326, 0
      %3336 = vst.msk [vmem:[#allocation2 + $0x98] sm:$0xff] %vm3326, 0
      %3337 = vst.msk [vmem:[#allocation2 + $0xa8] sm:$0xff] %vm3326, 0
      %3338 = vst.msk [vmem:[#allocation2 + $0xb8] sm:$0xff] %vm3326, 0
      %3339 = vst.msk [vmem:[#allocation2 + $0xc8] sm:$0xff] %vm3326, 0
      %3340 = vst.msk [vmem:[#allocation2 + $0xd8] sm:$0xff] %vm3326, 0
      %3341 = vst.msk [vmem:[#allocation2 + $0xe8] sm:$0xff] %vm3326, 0
      %3342 = vst.msk [vmem:[#allocation2 + $0xf8] sm:$0xff] %vm3326, 0
      %v3343 = vld [vmem:[#allocation2] sm:$0xff]
      %v3344 = vld [vmem:[#allocation2 + $0x8] sm:$0xff]
      %v3345 = vld [vmem:[#allocation2 + $0x10] sm:$0xff]
      %v3346 = vld [vmem:[#allocation2 + $0x18] sm:$0xff]
      %v3347 = vld [vmem:[#allocation2 + $0x20] sm:$0xff]
      %v3348 = vld [vmem:[#allocation2 + $0x28] sm:$0xff]
      %v3349 = vld [vmem:[#allocation2 + $0x30] sm:$0xff]
      %v3350 = vld [vmem:[#allocation2 + $0x38] sm:$0xff]
      %v3351 = vld [vmem:[#allocation2 + $0x40] sm:$0xff]
      %v3352 = vld [vmem:[#allocation2 + $0x48] sm:$0xff]
      %v3353 = vld [vmem:[#allocation2 + $0x50] sm:$0xff]
      %v3354 = vld [vmem:[#allocation2 + $0x58] sm:$0xff]
      %v3355 = vld [vmem:[#allocation2 + $0x60] sm:$0xff]
      %v3356 = vld [vmem:[#allocation2 + $0x68] sm:$0xff]
      %v3357 = vld [vmem:[#allocation2 + $0x70] sm:$0xff]
      %v3358 = vld [vmem:[#allocation2 + $0x78] sm:$0xff]
      %v3359 = vld [vmem:[#allocation2 + $0x80] sm:$0xff]
      %v3360 = vld [vmem:[#allocation2 + $0x88] sm:$0xff]
      %v3361 = vld [vmem:[#allocation2 + $0x90] sm:$0xff]
      %v3362 = vld [vmem:[#allocation2 + $0x98] sm:$0xff]
      %v3363 = vld [vmem:[#allocation2 + $0xa0] sm:$0xff]
      %v3364 = vld [vmem:[#allocation2 + $0xa8] sm:$0xff]
      %v3365 = vld [vmem:[#allocation2 + $0xb0] sm:$0xff]
      %v3366 = vld [vmem:[#allocation2 + $0xb8] sm:$0xff]
      %v3367 = vld [vmem:[#allocation2 + $0xc0] sm:$0xff]
      %v3368 = vld [vmem:[#allocation2 + $0xc8] sm:$0xff]
      %v3369 = vld [vmem:[#allocation2 + $0xd0] sm:$0xff]
      %v3370 = vld [vmem:[#allocation2 + $0xd8] sm:$0xff]
      %v3371 = vld [vmem:[#allocation2 + $0xe0] sm:$0xff]
      %v3372 = vld [vmem:[#allocation2 + $0xe8] sm:$0xff]
      %v3373 = vld [vmem:[#allocation2 + $0xf0] sm:$0xff]
      %v3374 = vld [vmem:[#allocation2 + $0xf8] sm:$0xff]
      %v3375 = vld [vmem:[%s225] sm:$0xf]
      %v3376 = vld [vmem:[%s225 + $0x4] sm:$0xf]
      %v3377 = vld [vmem:[%s225 + $0x8] sm:$0xf]
      %v3378 = vld [vmem:[%s225 + $0xc] sm:$0xf]
      %v3379 = vld [vmem:[%s225 + $0x10] sm:$0xf]
      %v3380 = vld [vmem:[%s225 + $0x14] sm:$0xf]
      %v3381 = vld [vmem:[%s225 + $0x18] sm:$0xf]
      %v3382 = vld [vmem:[%s225 + $0x1c] sm:$0xf]
      %v3383 = vld [vmem:[%s225 + $0x20] sm:$0xf]
      %v3384 = vld [vmem:[%s225 + $0x24] sm:$0xf]
      %v3385 = vld [vmem:[%s225 + $0x28] sm:$0xf]
      %v3386 = vld [vmem:[%s225 + $0x2c] sm:$0xf]
      %v3387 = vld [vmem:[%s225 + $0x30] sm:$0xf]
      %v3388 = vld [vmem:[%s225 + $0x34] sm:$0xf]
      %v3389 = vld [vmem:[%s225 + $0x38] sm:$0xf]
      %v3390 = vld [vmem:[%s225 + $0x3c] sm:$0xf]
      %v3391 = vld [vmem:[%s225 + $0x40] sm:$0xf]
      %v3392 = vld [vmem:[%s225 + $0x44] sm:$0xf]
      %v3393 = vld [vmem:[%s225 + $0x48] sm:$0xf]
      %v3394 = vld [vmem:[%s225 + $0x4c] sm:$0xf]
      %v3395 = vld [vmem:[%s225 + $0x50] sm:$0xf]
      %v3396 = vld [vmem:[%s225 + $0x54] sm:$0xf]
      %v3397 = vld [vmem:[%s225 + $0x58] sm:$0xf]
      %v3398 = vld [vmem:[%s225 + $0x5c] sm:$0xf]
      %v3399 = vld [vmem:[%s225 + $0x60] sm:$0xf]
      %v3400 = vld [vmem:[%s225 + $0x64] sm:$0xf]
      %v3401 = vld [vmem:[%s225 + $0x68] sm:$0xf]
      %v3402 = vld [vmem:[%s225 + $0x6c] sm:$0xf]
      %v3403 = vld [vmem:[%s225 + $0x70] sm:$0xf]
      %v3404 = vld [vmem:[%s225 + $0x74] sm:$0xf]
      %v3405 = vld [vmem:[%s225 + $0x78] sm:$0xf]
      %v3406 = vld [vmem:[%s225 + $0x7c] sm:$0xf]
      %v3439 = vunpack.c.l.b16 %v3375
      %v3440 = vunpack.c.l.b16 %v3376
      %v3441 = vunpack.c.l.b16 %v3377
      %v3442 = vunpack.c.l.b16 %v3378
      %v3443 = vunpack.c.l.b16 %v3379
      %v3444 = vunpack.c.l.b16 %v3380
      %v3445 = vunpack.c.l.b16 %v3381
      %v3446 = vunpack.c.l.b16 %v3382
      %v3447 = vunpack.c.l.b16 %v3383
      %v3448 = vunpack.c.l.b16 %v3384
      %v3449 = vunpack.c.l.b16 %v3385
      %v3450 = vunpack.c.l.b16 %v3386
      %v3451 = vunpack.c.l.b16 %v3387
      %v3452 = vunpack.c.l.b16 %v3388
      %v3453 = vunpack.c.l.b16 %v3389
      %v3454 = vunpack.c.l.b16 %v3390
      %v3455 = vunpack.c.l.b16 %v3391
      %v3456 = vunpack.c.l.b16 %v3392
      %v3457 = vunpack.c.l.b16 %v3393
      %v3458 = vunpack.c.l.b16 %v3394
      %v3459 = vunpack.c.l.b16 %v3395
      %v3460 = vunpack.c.l.b16 %v3396
      %v3461 = vunpack.c.l.b16 %v3397
      %v3462 = vunpack.c.l.b16 %v3398
      %v3463 = vunpack.c.l.b16 %v3399
      %v3464 = vunpack.c.l.b16 %v3400
      %v3465 = vunpack.c.l.b16 %v3401
      %v3466 = vunpack.c.l.b16 %v3402
      %v3467 = vunpack.c.l.b16 %v3403
      %v3468 = vunpack.c.l.b16 %v3404
      %v3469 = vunpack.c.l.b16 %v3405
      %v3470 = vunpack.c.l.b16 %v3406
      %v3471 = vpack.c.b16 %v3440, %v3439
      %v3472 = vpack.c.b16 %v3442, %v3441
      %v3473 = vpack.c.b16 %v3444, %v3443
      %v3474 = vpack.c.b16 %v3446, %v3445
      %v3475 = vpack.c.b16 %v3448, %v3447
      %v3476 = vpack.c.b16 %v3450, %v3449
      %v3477 = vpack.c.b16 %v3452, %v3451
      %v3478 = vpack.c.b16 %v3454, %v3453
      %v3479 = vpack.c.b16 %v3456, %v3455
      %v3480 = vpack.c.b16 %v3458, %v3457
      %v3481 = vpack.c.b16 %v3460, %v3459
      %v3482 = vpack.c.b16 %v3462, %v3461
      %v3483 = vpack.c.b16 %v3464, %v3463
      %v3484 = vpack.c.b16 %v3466, %v3465
      %v3485 = vpack.c.b16 %v3468, %v3467
      %v3486 = vpack.c.b16 %v3470, %v3469
      %3503 = vmatprep.subr.bf16.mxu0 0
      %3504 = vmatpush1.bf16.msra.mxu0 %v3471
      %3505 = vmatprep.subr.bf16.mxu0 0
      %3506 = vmatpush1.bf16.msra.mxu0 %v3472
      %3507 = vmatprep.subr.bf16.mxu0 0
      %3508 = vmatpush1.bf16.msra.mxu0 %v3473
      %3509 = vmatprep.subr.bf16.mxu0 0
      %3510 = vmatpush1.bf16.msra.mxu0 %v3474
      %3511 = vmatprep.subr.bf16.mxu0 0
      %3512 = vmatpush1.bf16.msra.mxu0 %v3475
      %3513 = vmatprep.subr.bf16.mxu0 0
      %3514 = vmatpush1.bf16.msra.mxu0 %v3476
      %3515 = vmatprep.subr.bf16.mxu0 0
      %3516 = vmatpush1.bf16.msra.mxu0 %v3477
      %3517 = vmatprep.subr.bf16.mxu0 0
      %3518 = vmatpush1.bf16.msra.mxu0 %v3478
      %3519 = vmatprep.subr.bf16.mxu0 0
      %3520 = vmatpush1.bf16.msra.mxu0 %v3479
      %3521 = vmatprep.subr.bf16.mxu0 0
      %3522 = vmatpush1.bf16.msra.mxu0 %v3480
      %3523 = vmatprep.subr.bf16.mxu0 0
      %3524 = vmatpush1.bf16.msra.mxu0 %v3481
      %3525 = vmatprep.subr.bf16.mxu0 0
      %3526 = vmatpush1.bf16.msra.mxu0 %v3482
      %3527 = vmatprep.subr.bf16.mxu0 0
      %3528 = vmatpush1.bf16.msra.mxu0 %v3483
      %3529 = vmatprep.subr.bf16.mxu0 0
      %3530 = vmatpush1.bf16.msra.mxu0 %v3484
      %3531 = vmatprep.subr.bf16.mxu0 0
      %3532 = vmatpush1.bf16.msra.mxu0 %v3485
      %3533 = vmatprep.subr.bf16.mxu0 0
      %3534 = vmatpush1.bf16.msra.mxu0 %v3486
      %3535 = vmatprep.mubr.bf16.mxu0 %v3344
      %3536 = vmatmul.mubr.bf16.gmra.mrb[0].mxu0 %v3343
      %v3537 = vpop.f32.mrb[0].mxu0
      %v3538 = vadd.f32 0.0, %v3537
      %v3539 = vpop.f32.mrb[0].mxu0
      %v3540 = vpop.f32.mrb[0].mxu0
      %v3541 = vadd.f32 0.0, %v3540
      %v3542 = vpop.f32.mrb[0].mxu0
      %3543 = vmatprep.mubr.bf16.mxu0 %v3346
      %3544 = vmatmul.mubr.bf16.gmra.mrb[0].mxu0 %v3345
      %v3545 = vpop.f32.mrb[0].mxu0
      %v3546 = vadd.f32 0.0, %v3545
      %v3547 = vpop.f32.mrb[0].mxu0
      %v3548 = vpop.f32.mrb[0].mxu0
      %v3549 = vadd.f32 0.0, %v3548
      %v3550 = vpop.f32.mrb[0].mxu0
      %3551 = vmatprep.mubr.bf16.mxu0 %v3348
      %3552 = vmatmul.mubr.bf16.gmra.mrb[0].mxu0 %v3347
      %v3553 = vpop.f32.mrb[0].mxu0
      %v3554 = vadd.f32 0.0, %v3553
      %v3555 = vpop.f32.mrb[0].mxu0
      %v3556 = vpop.f32.mrb[0].mxu0
      %v3557 = vadd.f32 0.0, %v3556
      %v3558 = vpop.f32.mrb[0].mxu0
      %3559 = vmatprep.mubr.bf16.mxu0 %v3350
      %3560 = vmatmul.mubr.bf16.gmra.mrb[0].mxu0 %v3349
      %v3561 = vpop.f32.mrb[0].mxu0
      %v3562 = vadd.f32 0.0, %v3561
      %v3563 = vpop.f32.mrb[0].mxu0
      %v3564 = vpop.f32.mrb[0].mxu0
      %v3565 = vadd.f32 0.0, %v3564
      %v3566 = vpop.f32.mrb[0].mxu0
      %3567 = vmatprep.mubr.bf16.mxu0 %v3352
      %3568 = vmatmul.mubr.bf16.gmra.mrb[0].mxu0 %v3351
      %v3569 = vpop.f32.mrb[0].mxu0
      %v3570 = vadd.f32 0.0, %v3569
      %v3571 = vpop.f32.mrb[0].mxu0
      %v3572 = vpop.f32.mrb[0].mxu0
      %v3573 = vadd.f32 0.0, %v3572
      %v3574 = vpop.f32.mrb[0].mxu0
      %3575 = vmatprep.mubr.bf16.mxu0 %v3354
      %3576 = vmatmul.mubr.bf16.gmra.mrb[0].mxu0 %v3353
      %v3577 = vpop.f32.mrb[0].mxu0
      %v3578 = vadd.f32 0.0, %v3577
      %v3579 = vpop.f32.mrb[0].mxu0
      %v3580 = vpop.f32.mrb[0].mxu0
      %v3581 = vadd.f32 0.0, %v3580
      %v3582 = vpop.f32.mrb[0].mxu0
      %3583 = vmatprep.mubr.bf16.mxu0 %v3356
      %3584 = vmatmul.mubr.bf16.gmra.mrb[0].mxu0 %v3355
      %v3585 = vpop.f32.mrb[0].mxu0
      %v3586 = vadd.f32 0.0, %v3585
      %v3587 = vpop.f32.mrb[0].mxu0
      %v3588 = vpop.f32.mrb[0].mxu0
      %v3589 = vadd.f32 0.0, %v3588
      %v3590 = vpop.f32.mrb[0].mxu0
      %3591 = vmatprep.mubr.bf16.mxu0 %v3358
      %3592 = vmatmul.mubr.bf16.gmra.mrb[0].mxu0 %v3357
      %v3593 = vpop.f32.mrb[0].mxu0
      %v3594 = vadd.f32 0.0, %v3593
      %v3595 = vpop.f32.mrb[0].mxu0
      %v3596 = vpop.f32.mrb[0].mxu0
      %v3597 = vadd.f32 0.0, %v3596
      %v3598 = vpop.f32.mrb[0].mxu0
      %3599 = vmatprep.mubr.bf16.mxu0 %v3360
      %3600 = vmatmul.mubr.bf16.gmra.mrb[0].mxu0 %v3359
      %v3601 = vpop.f32.mrb[0].mxu0
      %v3602 = vadd.f32 0.0, %v3601
      %v3603 = vpop.f32.mrb[0].mxu0
      %v3604 = vpop.f32.mrb[0].mxu0
      %v3605 = vadd.f32 0.0, %v3604
      %v3606 = vpop.f32.mrb[0].mxu0
      %3607 = vmatprep.mubr.bf16.mxu0 %v3362
      %3608 = vmatmul.mubr.bf16.gmra.mrb[0].mxu0 %v3361
      %v3609 = vpop.f32.mrb[0].mxu0
      %v3610 = vadd.f32 0.0, %v3609
      %v3611 = vpop.f32.mrb[0].mxu0
      %v3612 = vpop.f32.mrb[0].mxu0
      %v3613 = vadd.f32 0.0, %v3612
      %v3614 = vpop.f32.mrb[0].mxu0
      %3615 = vmatprep.mubr.bf16.mxu0 %v3364
      %3616 = vmatmul.mubr.bf16.gmra.mrb[0].mxu0 %v3363
      %v3617 = vpop.f32.mrb[0].mxu0
      %v3618 = vadd.f32 0.0, %v3617
      %v3619 = vpop.f32.mrb[0].mxu0
      %v3620 = vpop.f32.mrb[0].mxu0
      %v3621 = vadd.f32 0.0, %v3620
      %v3622 = vpop.f32.mrb[0].mxu0
      %3623 = vmatprep.mubr.bf16.mxu0 %v3366
      %3624 = vmatmul.mubr.bf16.gmra.mrb[0].mxu0 %v3365
      %v3625 = vpop.f32.mrb[0].mxu0
      %v3626 = vadd.f32 0.0, %v3625
      %v3627 = vpop.f32.mrb[0].mxu0
      %v3628 = vpop.f32.mrb[0].mxu0
      %v3629 = vadd.f32 0.0, %v3628
      %v3630 = vpop.f32.mrb[0].mxu0
      %3631 = vmatprep.mubr.bf16.mxu0 %v3368
      %3632 = vmatmul.mubr.bf16.gmra.mrb[0].mxu0 %v3367
      %v3633 = vpop.f32.mrb[0].mxu0
      %v3634 = vadd.f32 0.0, %v3633
      %v3635 = vpop.f32.mrb[0].mxu0
      %v3636 = vpop.f32.mrb[0].mxu0
      %v3637 = vadd.f32 0.0, %v3636
      %v3638 = vpop.f32.mrb[0].mxu0
      %3639 = vmatprep.mubr.bf16.mxu0 %v3370
      %3640 = vmatmul.mubr.bf16.gmra.mrb[0].mxu0 %v3369
      %v3641 = vpop.f32.mrb[0].mxu0
      %v3642 = vadd.f32 0.0, %v3641
      %v3643 = vpop.f32.mrb[0].mxu0
      %v3644 = vpop.f32.mrb[0].mxu0
      %v3645 = vadd.f32 0.0, %v3644
      %v3646 = vpop.f32.mrb[0].mxu0
      %3647 = vmatprep.mubr.bf16.mxu0 %v3372
      %3648 = vmatmul.mubr.bf16.gmra.mrb[0].mxu0 %v3371
      %v3649 = vpop.f32.mrb[0].mxu0
      %v3650 = vadd.f32 0.0, %v3649
      %v3651 = vpop.f32.mrb[0].mxu0
      %v3652 = vpop.f32.mrb[0].mxu0
      %v3653 = vadd.f32 0.0, %v3652
      %v3654 = vpop.f32.mrb[0].mxu0
      %3655 = vmatprep.mubr.bf16.mxu0 %v3374
      %3656 = vmatmul.mubr.bf16.gmra.mrb[0].mxu0 %v3373
      %v3657 = vpop.f32.mrb[0].mxu0
      %v3658 = vadd.f32 0.0, %v3657
      %v3659 = vpop.f32.mrb[0].mxu0
      %v3660 = vpop.f32.mrb[0].mxu0
      %v3661 = vadd.f32 0.0, %v3660
      %v3662 = vpop.f32.mrb[0].mxu0
      %3663 = vdwg.mxu0
      %v3664 = vld [vmem:[%s229] sm:$0x1]
      %v3665 = vlaneseq
      %v3666 = vshrl.u32 %v3665, 7
      %v3667 = vsub.s32 0, %v3666
      %v3668 = vrot.slane %v3664, %v3667
      %v3669 = vmul.f32 %v3538, %v3668
      %v3670 = vmul.f32 %v3541, %v3668
      %v3671 = vmul.f32 %v3546, %v3668
      %v3672 = vmul.f32 %v3549, %v3668
      %v3673 = vmul.f32 %v3554, %v3668
      %v3674 = vmul.f32 %v3557, %v3668
      %v3675 = vmul.f32 %v3562, %v3668
      %v3676 = vmul.f32 %v3565, %v3668
      %v3677 = vmul.f32 %v3570, %v3668
      %v3678 = vmul.f32 %v3573, %v3668
      %v3679 = vmul.f32 %v3578, %v3668
      %v3680 = vmul.f32 %v3581, %v3668
      %v3681 = vmul.f32 %v3586, %v3668
      %v3682 = vmul.f32 %v3589, %v3668
      %v3683 = vmul.f32 %v3594, %v3668
      %v3684 = vmul.f32 %v3597, %v3668
      %v3685 = vmul.f32 %v3602, %v3668
      %v3686 = vmul.f32 %v3605, %v3668
      %v3687 = vmul.f32 %v3610, %v3668
      %v3688 = vmul.f32 %v3613, %v3668
      %v3689 = vmul.f32 %v3618, %v3668
      %v3690 = vmul.f32 %v3621, %v3668
      %v3691 = vmul.f32 %v3626, %v3668
      %v3692 = vmul.f32 %v3629, %v3668
      %v3693 = vmul.f32 %v3634, %v3668
      %v3694 = vmul.f32 %v3637, %v3668
      %v3695 = vmul.f32 %v3642, %v3668
      %v3696 = vmul.f32 %v3645, %v3668
      %v3697 = vmul.f32 %v3650, %v3668
      %v3698 = vmul.f32 %v3653, %v3668
      %v3699 = vmul.f32 %v3658, %v3668
      %v3700 = vmul.f32 %v3661, %v3668
      %v3701 = vld [vmem:[%s229 + $0x1] sm:$0x1]
      %v3702 = vlaneseq
      %v3703 = vshrl.u32 %v3702, 7
      %v3704 = vsub.s32 0, %v3703
      %v3705 = vrot.slane %v3701, %v3704
      %v3706 = vadd.f32 %v3669, %v3705
      %v3707 = vadd.f32 %v3670, %v3705
      %v3708 = vadd.f32 %v3671, %v3705
      %v3709 = vadd.f32 %v3672, %v3705
      %v3710 = vadd.f32 %v3673, %v3705
      %v3711 = vadd.f32 %v3674, %v3705
      %v3712 = vadd.f32 %v3675, %v3705
      %v3713 = vadd.f32 %v3676, %v3705
      %v3714 = vadd.f32 %v3677, %v3705
      %v3715 = vadd.f32 %v3678, %v3705
      %v3716 = vadd.f32 %v3679, %v3705
      %v3717 = vadd.f32 %v3680, %v3705
      %v3718 = vadd.f32 %v3681, %v3705
      %v3719 = vadd.f32 %v3682, %v3705
      %v3720 = vadd.f32 %v3683, %v3705
      %v3721 = vadd.f32 %v3684, %v3705
      %v3722 = vadd.f32 %v3685, %v3705
      %v3723 = vadd.f32 %v3686, %v3705
      %v3724 = vadd.f32 %v3687, %v3705
      %v3725 = vadd.f32 %v3688, %v3705
      %v3726 = vadd.f32 %v3689, %v3705
      %v3727 = vadd.f32 %v3690, %v3705
      %v3728 = vadd.f32 %v3691, %v3705
      %v3729 = vadd.f32 %v3692, %v3705
      %v3730 = vadd.f32 %v3693, %v3705
      %v3731 = vadd.f32 %v3694, %v3705
      %v3732 = vadd.f32 %v3695, %v3705
      %v3733 = vadd.f32 %v3696, %v3705
      %v3734 = vadd.f32 %v3697, %v3705
      %v3735 = vadd.f32 %v3698, %v3705
      %v3736 = vadd.f32 %v3699, %v3705
      %v3737 = vadd.f32 %v3700, %v3705
      %v3738 = vmax.f32 %v3706, 0.0
      %v3739 = vmax.f32 %v3707, 0.0
      %v3740 = vmax.f32 %v3708, 0.0
      %v3741 = vmax.f32 %v3709, 0.0
      %v3742 = vmax.f32 %v3710, 0.0
      %v3743 = vmax.f32 %v3711, 0.0
      %v3744 = vmax.f32 %v3712, 0.0
      %v3745 = vmax.f32 %v3713, 0.0
      %v3746 = vmax.f32 %v3714, 0.0
      %v3747 = vmax.f32 %v3715, 0.0
      %v3748 = vmax.f32 %v3716, 0.0
      %v3749 = vmax.f32 %v3717, 0.0
      %v3750 = vmax.f32 %v3718, 0.0
      %v3751 = vmax.f32 %v3719, 0.0
      %v3752 = vmax.f32 %v3720, 0.0
      %v3753 = vmax.f32 %v3721, 0.0
      %v3754 = vmax.f32 %v3722, 0.0
      %v3755 = vmax.f32 %v3723, 0.0
      %v3756 = vmax.f32 %v3724, 0.0
      %v3757 = vmax.f32 %v3725, 0.0
      %v3758 = vmax.f32 %v3726, 0.0
      %v3759 = vmax.f32 %v3727, 0.0
      %v3760 = vmax.f32 %v3728, 0.0
      %v3761 = vmax.f32 %v3729, 0.0
      %v3762 = vmax.f32 %v3730, 0.0
      %v3763 = vmax.f32 %v3731, 0.0
      %v3764 = vmax.f32 %v3732, 0.0
      %v3765 = vmax.f32 %v3733, 0.0
      %v3766 = vmax.f32 %v3734, 0.0
      %v3767 = vmax.f32 %v3735, 0.0
      %v3768 = vmax.f32 %v3736, 0.0
      %v3769 = vmax.f32 %v3737, 0.0
      %v3770 = vpack.c.bf16 %v3739, %v3738
      %v3771 = vpack.c.bf16 %v3741, %v3740
      %v3772 = vpack.c.bf16 %v3743, %v3742
      %v3773 = vpack.c.bf16 %v3745, %v3744
      %v3774 = vpack.c.bf16 %v3747, %v3746
      %v3775 = vpack.c.bf16 %v3749, %v3748
      %v3776 = vpack.c.bf16 %v3751, %v3750
      %v3777 = vpack.c.bf16 %v3753, %v3752
      %v3778 = vpack.c.bf16 %v3755, %v3754
      %v3779 = vpack.c.bf16 %v3757, %v3756
      %v3780 = vpack.c.bf16 %v3759, %v3758
      %v3781 = vpack.c.bf16 %v3761, %v3760
      %v3782 = vpack.c.bf16 %v3763, %v3762
      %v3783 = vpack.c.bf16 %v3765, %v3764
      %v3784 = vpack.c.bf16 %v3767, %v3766
      %v3785 = vpack.c.bf16 %v3769, %v3768
      %v3802 = vunpack.c.l.b16 %v3770
      %v3803 = vunpack.c.h.b16 %v3770
      %v3804 = vunpack.c.l.b16 %v3771
      %v3805 = vunpack.c.h.b16 %v3771
      %v3806 = vunpack.c.l.b16 %v3772
      %v3807 = vunpack.c.h.b16 %v3772
      %v3808 = vunpack.c.l.b16 %v3773
      %v3809 = vunpack.c.h.b16 %v3773
      %v3810 = vunpack.c.l.b16 %v3774
      %v3811 = vunpack.c.h.b16 %v3774
      %v3812 = vunpack.c.l.b16 %v3775
      %v3813 = vunpack.c.h.b16 %v3775
      %v3814 = vunpack.c.l.b16 %v3776
      %v3815 = vunpack.c.h.b16 %v3776
      %v3816 = vunpack.c.l.b16 %v3777
      %v3817 = vunpack.c.h.b16 %v3777
      %v3818 = vunpack.c.l.b16 %v3778
      %v3819 = vunpack.c.h.b16 %v3778
      %v3820 = vunpack.c.l.b16 %v3779
      %v3821 = vunpack.c.h.b16 %v3779
      %v3822 = vunpack.c.l.b16 %v3780
      %v3823 = vunpack.c.h.b16 %v3780
      %v3824 = vunpack.c.l.b16 %v3781
      %v3825 = vunpack.c.h.b16 %v3781
      %v3826 = vunpack.c.l.b16 %v3782
      %v3827 = vunpack.c.h.b16 %v3782
      %v3828 = vunpack.c.l.b16 %v3783
      %v3829 = vunpack.c.h.b16 %v3783
      %v3830 = vunpack.c.l.b16 %v3784
      %v3831 = vunpack.c.h.b16 %v3784
      %v3832 = vunpack.c.l.b16 %v3785
      %v3833 = vunpack.c.h.b16 %v3785
      %v3834 = vpack.c.b16 %v3802, %v3802
      %v3835 = vpack.c.b16 %v3803, %v3803
      %v3836 = vpack.c.b16 %v3804, %v3804
      %v3837 = vpack.c.b16 %v3805, %v3805
      %v3838 = vpack.c.b16 %v3806, %v3806
      %v3839 = vpack.c.b16 %v3807, %v3807
      %v3840 = vpack.c.b16 %v3808, %v3808
      %v3841 = vpack.c.b16 %v3809, %v3809
      %v3842 = vpack.c.b16 %v3810, %v3810
      %v3843 = vpack.c.b16 %v3811, %v3811
      %v3844 = vpack.c.b16 %v3812, %v3812
      %v3845 = vpack.c.b16 %v3813, %v3813
      %v3846 = vpack.c.b16 %v3814, %v3814
      %v3847 = vpack.c.b16 %v3815, %v3815
      %v3848 = vpack.c.b16 %v3816, %v3816
      %v3849 = vpack.c.b16 %v3817, %v3817
      %v3850 = vpack.c.b16 %v3818, %v3818
      %v3851 = vpack.c.b16 %v3819, %v3819
      %v3852 = vpack.c.b16 %v3820, %v3820
      %v3853 = vpack.c.b16 %v3821, %v3821
      %v3854 = vpack.c.b16 %v3822, %v3822
      %v3855 = vpack.c.b16 %v3823, %v3823
      %v3856 = vpack.c.b16 %v3824, %v3824
      %v3857 = vpack.c.b16 %v3825, %v3825
      %v3858 = vpack.c.b16 %v3826, %v3826
      %v3859 = vpack.c.b16 %v3827, %v3827
      %v3860 = vpack.c.b16 %v3828, %v3828
      %v3861 = vpack.c.b16 %v3829, %v3829
      %v3862 = vpack.c.b16 %v3830, %v3830
      %v3863 = vpack.c.b16 %v3831, %v3831
      %v3864 = vpack.c.b16 %v3832, %v3832
      %v3865 = vpack.c.b16 %v3833, %v3833
      %3898 = vst [vmem:[%s241] sm:$0xf] %v3834
      %3899 = vst [vmem:[%s241 + $0x4] sm:$0xf] %v3835
      %3900 = vst [vmem:[%s241 + $0x8] sm:$0xf] %v3836
      %3901 = vst [vmem:[%s241 + $0xc] sm:$0xf] %v3837
      %3902 = vst [vmem:[%s241 + $0x10] sm:$0xf] %v3838
      %3903 = vst [vmem:[%s241 + $0x14] sm:$0xf] %v3839
      %3904 = vst [vmem:[%s241 + $0x18] sm:$0xf] %v3840
      %3905 = vst [vmem:[%s241 + $0x1c] sm:$0xf] %v3841
      %3906 = vst [vmem:[%s241 + $0x20] sm:$0xf] %v3842
      %3907 = vst [vmem:[%s241 + $0x24] sm:$0xf] %v3843
      %3908 = vst [vmem:[%s241 + $0x28] sm:$0xf] %v3844
      %3909 = vst [vmem:[%s241 + $0x2c] sm:$0xf] %v3845
      %3910 = vst [vmem:[%s241 + $0x30] sm:$0xf] %v3846
      %3911 = vst [vmem:[%s241 + $0x34] sm:$0xf] %v3847
      %3912 = vst [vmem:[%s241 + $0x38] sm:$0xf] %v3848
      %3913 = vst [vmem:[%s241 + $0x3c] sm:$0xf] %v3849
      %3914 = vst [vmem:[%s241 + $0x40] sm:$0xf] %v3850
      %3915 = vst [vmem:[%s241 + $0x44] sm:$0xf] %v3851
      %3916 = vst [vmem:[%s241 + $0x48] sm:$0xf] %v3852
      %3917 = vst [vmem:[%s241 + $0x4c] sm:$0xf] %v3853
      %3918 = vst [vmem:[%s241 + $0x50] sm:$0xf] %v3854
      %3919 = vst [vmem:[%s241 + $0x54] sm:$0xf] %v3855
      %3920 = vst [vmem:[%s241 + $0x58] sm:$0xf] %v3856
      %3921 = vst [vmem:[%s241 + $0x5c] sm:$0xf] %v3857
      %3922 = vst [vmem:[%s241 + $0x60] sm:$0xf] %v3858
      %3923 = vst [vmem:[%s241 + $0x64] sm:$0xf] %v3859
      %3924 = vst [vmem:[%s241 + $0x68] sm:$0xf] %v3860
      %3925 = vst [vmem:[%s241 + $0x6c] sm:$0xf] %v3861
      %3926 = vst [vmem:[%s241 + $0x70] sm:$0xf] %v3862
      %3927 = vst [vmem:[%s241 + $0x74] sm:$0xf] %v3863
      %3928 = vst [vmem:[%s241 + $0x78] sm:$0xf] %v3864
      %3929 = vst [vmem:[%s241 + $0x7c] sm:$0xf] %v3865
      %s3930 = smul.u32 32, %s20
      %p3931 = scmp.lt.s32.totalorder %s19, 1
      %s3932 = scalar_select %p3931, %s19, 1
      %p3933 = scmp.lt.s32.totalorder %s3930, 31
      %s3934 = scalar_select %p3933, %s3930, 31
      %p3935 = scmp.lt.s32.totalorder %s21, 0
      %s3936 = scalar_select %p3935, %s21, 0
      %s3937 = sadd.s32 %s3936, %s3934
      %s3938 = smul.addr %s3932, 32
      %s3939 = sadd.s32 %s3937, %s3938
      %s3940 = smul.addr %s3939, 4
      %s3941 = scalar_lea.vmem %s3, %s3940
      // Predicated region
      $region33: #{mcrelu_base_forward.1} parent=31 // pred_check
        %p3942 = pneg %p133
      $region34: #{mcrelu_base_forward.1} parent=31 // pred_check_branch
        %3944 = sbr.rel (%p3942) target = $region36
      $region35: #{mcrelu_base_forward.1} parent=31 // pred_region
        %s3945 = smul.u32 32, %s20
      $region36: #{mcrelu_base_forward.1} parent=31 // pred_fallthru
        _
    $region32: #{mcrelu_base_forward.1} parent=5 // pred_fallthru
      _
    %p3946 = scmp.le.s32.totalorder 2, %s9
    // Predicated region
    $region37: #{mcrelu_base_forward.1} parent=5 // pred_check
      %p3947 = pneg %p3946
    $region38: #{mcrelu_base_forward.1} parent=5 // pred_check_branch
      %3949 = sbr.rel (%p3947) target = $region40
    $region39: #{mcrelu_base_forward.1} parent=5 // pred_region
      %s3950 = ssub.s32 %s9, 2
      // Predicated region
      $region41: #{mcrelu_base_forward.1} parent=39 // pred_check
        %p3951 = pneg %p139
      $region42: #{mcrelu_base_forward.1} parent=39 // pred_check_branch
        %3953 = sbr.rel (%p3951) target = $region44
      $region43: #{mcrelu_base_forward.1} parent=39 // pred_region
        %s3954 = smul.u32 32, %s23
        %p3955 = scmp.lt.s32.totalorder %s22, 1
        %s3956 = scalar_select %p3955, %s22, 1
        %p3957 = scmp.lt.s32.totalorder %s3954, 31
        %s3958 = scalar_select %p3957, %s3954, 31
        %p3959 = scmp.lt.s32.totalorder %s24, 0
        %s3960 = scalar_select %p3959, %s24, 0
        %s3961 = sadd.s32 %s3960, %s3958
        %s3962 = smul.addr %s3956, 32
        %s3963 = sadd.s32 %s3961, %s3962
        %s3964 = smul.addr %s3963, 4
        %s3965 = scalar_lea.vmem %s3, %s3964
      $region44: #{mcrelu_base_forward.1} parent=39 // pred_fallthru
        _
    $region40: #{mcrelu_base_forward.1} parent=5 // pred_fallthru
      _
  $region6: #{mcrelu_base_forward.1} parent=0 // loop_footer
    %s13 = sadd.s32 1, %s9
  $region7: #{mcrelu_base_forward.1} parent=0 // loop_footer_branch
    %8 = sbr.rel target = $region3
  $region8: #{mcrelu_base_forward.1} parent=0 // loop_exit
    _

</llo_original>
